<compile_context>
chip_gen: v7x
topology: tpu7x:2x2x1
jax: 0.10.0
libtpu: 0.0.40
codegen_flags: <defaults>
</compile_context>

<pallas_src>
import functools

import jax
import jax.numpy as jnp
from jax.experimental import pallas as pl
from jax.experimental.pallas import tpu as pltpu


# ---------------------------------------------------------------------------
# In-kernel helpers
# ---------------------------------------------------------------------------
def _leaky_relu(x):
    return jnp.where(x >= 0, x, 0.2 * x)


def _im2col(src, k, d, H, W):
    """src: padded (Hp, Wp, C) value -> (H*W, k*k*C) patch matrix.

    Tap order is (kh major, kw minor, channel innermost) and must match the
    packed-weight row order built in prepare_params.
    """
    C = src.shape[-1]
    cols = []
    for kh in range(k):
        for kw in range(k):
            cols.append(src[kh * d:kh * d + H, kw * d:kw * d + W, :]
                        .reshape(H * W, C))
    return jnp.concatenate(cols, axis=-1)


# ---------------------------------------------------------------------------
# Fused sequence kernel (grid = (N, T))
# ---------------------------------------------------------------------------
def _convlstm_seq_kernel(x_ref, wx_ref, wh_ref, bx_ref, bh_ref,
                         hseq_ref, clast_ref,
                         xpad_ref, hpad_ref, cstate_ref,
                         *, k, d, H, W, Cout, pad_x, pad_h):
    t = pl.program_id(1)

    # t == 0: zero the padded scratch buffers so 'same'-conv borders are 0.
    @pl.when(t == 0)
    def _():
        xpad_ref[...] = jnp.zeros(xpad_ref.shape, xpad_ref.dtype)
        hpad_ref[...] = jnp.zeros(hpad_ref.shape, hpad_ref.dtype)

    # Write this step's x into the padded scratch interior (borders stay 0).
    xpad_ref[pad_x:pad_x + H, pad_x:pad_x + W, :] = (
        x_ref[...].astype(xpad_ref.dtype))

    # x-convs for all 4 gates: one im2col + one deep bf16 MXU matmul.
    imx = _im2col(xpad_ref[...], k, d, H, W).astype(jnp.bfloat16)
    zx = jnp.dot(imx, wx_ref[...],
                 preferred_element_type=jnp.float32) + bx_ref[...]

    def _emit(h_new, c_new):
        cstate_ref[...] = c_new
        h_hw = h_new.reshape(H, W, Cout)
        # Recurrent h is kept in the padded VMEM scratch (never leaves chip).
        hpad_ref[pad_h:pad_h + H, pad_h:pad_h + W, :] = (
            h_hw.astype(hpad_ref.dtype))
        hseq_ref[...] = h_hw.astype(hseq_ref.dtype)
        clast_ref[...] = c_new.reshape(H, W, Cout)

    # t == 0: 'pair is None' path -- i, o, j from x only; c = i*j; h = o*c.
    @pl.when(t == 0)
    def _():
        i = jax.nn.sigmoid(zx[:, 1 * Cout:2 * Cout])
        o = jax.nn.sigmoid(zx[:, 2 * Cout:3 * Cout])
        j = jnp.tanh(zx[:, 3 * Cout:4 * Cout])
        c_new = i * j
        _emit(_leaky_relu(o * c_new), c_new)

    # t > 0: full LSTM update with the recurrent h convolution (dilation 1).
    @pl.when(t != 0)
    def _():
        imh = _im2col(hpad_ref[...], k, 1, H, W).astype(jnp.bfloat16)
        z = zx + jnp.dot(imh, wh_ref[...],
                         preferred_element_type=jnp.float32) + bh_ref[...]
        f = jax.nn.sigmoid(z[:, 0 * Cout:1 * Cout])
        i = jax.nn.sigmoid(z[:, 1 * Cout:2 * Cout])
        o = jax.nn.sigmoid(z[:, 2 * Cout:3 * Cout])
        j = jnp.tanh(z[:, 3 * Cout:4 * Cout])
        c_new = f * cstate_ref[...] + i * j
        _emit(_leaky_relu(o * jnp.tanh(c_new)), c_new)


# ---------------------------------------------------------------------------
# Parameter packing (done once, outside the kernel)
# ---------------------------------------------------------------------------
def prepare_params(raw):
    """raw weights stacked in gate order [f, i, o, j]:
         wx (4,k,k,Cin,Cout), bx (4,1,Cout), wh (4,k,k,Cout,Cout), bh (4,1,Cout)
    Packed for im2col: row index = (kh*k + kw)*C + c, col index = g*Cout + co.
    """
    k, d = raw["kernel"], raw["dilation"]
    wx, bx, wh, bh = raw["wx"], raw["bx"], raw["wh"], raw["bh"]
    Cin, Cout = wx.shape[3], wx.shape[4]

    wx_p = jnp.transpose(wx, (1, 2, 3, 0, 4)).reshape(k * k * Cin, 4 * Cout)
    wh_p = jnp.transpose(wh, (1, 2, 3, 0, 4)).reshape(k * k * Cout, 4 * Cout)
    bx_p = bx[:, 0, :].reshape(1, 4 * Cout)
    bh_p = bh[:, 0, :].reshape(1, 4 * Cout)

    return {
        "kernel": k, "dilation": d, "Cin": Cin, "Cout": Cout,
        "wx": wx_p.astype(jnp.bfloat16),
        "wh": wh_p.astype(jnp.bfloat16),
        "bx": bx_p.astype(jnp.float32),
        "bh": bh_p.astype(jnp.float32),
    }


# ---------------------------------------------------------------------------
# Fused-sequence wrappers
# ---------------------------------------------------------------------------
def conv_lstm_sequence_nhwc(params, x_seq):
    """x_seq: (N, T, H, W, Cin), sequence starts with pair=None.

    Returns (h_seq (N,T,H,W,Cout), (h_last, c_last)), all NHWC."""
    k, d, Cout = params["kernel"], params["dilation"], params["Cout"]
    N, T, H, W, Cin = x_seq.shape

    pad_x = (d * (k - 1)) // 2
    pad_h = (k - 1) // 2
    Hpx, Wpx = H + 2 * pad_x, W + 2 * pad_x
    Hph, Wph = H + 2 * pad_h, W + 2 * pad_h

    wx_p, wh_p = params["wx"], params["wh"]
    bx_p, bh_p = params["bx"], params["bh"]

    kernel = functools.partial(
        _convlstm_seq_kernel, k=k, d=d, H=H, W=W, Cout=Cout,
        pad_x=pad_x, pad_h=pad_h)

    h_seq, c_last = pl.pallas_call(
        kernel,
        out_shape=(jax.ShapeDtypeStruct((N, T, H, W, Cout), x_seq.dtype),
                   jax.ShapeDtypeStruct((N, H, W, Cout), jnp.float32)),
        grid=(N, T),
        in_specs=[
            pl.BlockSpec((None, None, H, W, Cin),
                         lambda n, t: (n, t, 0, 0, 0)),
            pl.BlockSpec(wx_p.shape, lambda n, t: (0, 0)),
            pl.BlockSpec(wh_p.shape, lambda n, t: (0, 0)),
            pl.BlockSpec(bx_p.shape, lambda n, t: (0, 0)),
            pl.BlockSpec(bh_p.shape, lambda n, t: (0, 0)),
        ],
        out_specs=(
            pl.BlockSpec((None, None, H, W, Cout),
                         lambda n, t: (n, t, 0, 0, 0)),
            # final cell state: block resident across the (arbitrary) T axis
            pl.BlockSpec((None, H, W, Cout), lambda n, t: (n, 0, 0, 0)),
        ),
        scratch_shapes=[
            pltpu.VMEM((Hpx, Wpx, Cin), jnp.float32),    # padded x
            pltpu.VMEM((Hph, Wph, Cout), jnp.float32),   # padded recurrent h
            pltpu.VMEM((H * W, Cout), jnp.float32),      # cell state c
        ],
        compiler_params=pltpu.CompilerParams(
            dimension_semantics=("parallel", "arbitrary"),
            vmem_limit_bytes=4 * 1024 * 1024,
        ),
    )(x_seq, wx_p, wh_p, bx_p, bh_p)

    h_last = h_seq[:, -1]
    return h_seq, (h_last, c_last)


def conv_lstm_sequence(params, x_seq_nchw):
    """x_seq_nchw: (N, T, Cin, H, W).  Matches chaining the PyTorch module's
    forward over t with pair=None at t=0.  Returns NCHW outputs."""
    x = jnp.transpose(x_seq_nchw, (0, 1, 3, 4, 2))
    h_seq, (h_last, c_last) = conv_lstm_sequence_nhwc(params, x)
    return (jnp.transpose(h_seq, (0, 1, 4, 2, 3)),
            (jnp.transpose(h_last, (0, 3, 1, 2)),
             jnp.transpose(c_last, (0, 3, 1, 2))))


# ---------------------------------------------------------------------------
# Pure-JAX reference (float32, unpacked weights) for correctness check
# ---------------------------------------------------------------------------
def _conv_ref(x_nhwc, w_hwio, bias, dilation):
    kk = w_hwio.shape[0]
    pad = (dilation * (kk - 1)) // 2
    y = jax.lax.conv_general_dilated(
        x_nhwc, w_hwio, window_strides=(1, 1),
        padding=[(pad, pad), (pad, pad)],
        rhs_dilation=(dilation, dilation),
        dimension_numbers=("NHWC", "HWIO", "NHWC"))
    return y + bias.reshape(1, 1, 1, -1)


def _ref_forward(raw, x_nchw, pair):
    k, d = raw["kernel"], raw["dilation"]
    wx, bx, wh, bh = raw["wx"], raw["bx"], raw["wh"], raw["bh"]
    x = jnp.transpose(x_nchw, (0, 2, 3, 1))
    conv_x = lambda g: _conv_ref(x, wx[g], bx[g, 0], d)
    if pair is None:
        i = jax.nn.sigmoid(conv_x(1))
        o = jax.nn.sigmoid(conv_x(2))
        j = jnp.tanh(conv_x(3))
        c = i * j
        h = o * c
    else:
        h_prev = jnp.transpose(pair[0], (0, 2, 3, 1))
        c = jnp.transpose(pair[1], (0, 2, 3, 1))
        conv_h = lambda g: _conv_ref(h_prev, wh[g], bh[g, 0], 1)
        f = jax.nn.sigmoid(conv_x(0) + conv_h(0))
        i = jax.nn.sigmoid(conv_x(1) + conv_h(1))
        o = jax.nn.sigmoid(conv_x(2) + conv_h(2))
        j = jnp.tanh(conv_x(3) + conv_h(3))
        c = f * c + i * j
        h = o * jnp.tanh(c)
    h = jnp.where(h >= 0, h, 0.2 * h)
    hN = jnp.transpose(h, (0, 3, 1, 2))
    cN = jnp.transpose(c, (0, 3, 1, 2))
    return hN, [hN, cN]


# ---------------------------------------------------------------------------
# Main
# ---------------------------------------------------------------------------
if __name__ == "__main__":
    key = jax.random.PRNGKey(0)
    N, Cin, H, W = 2, 4, 16, 16
    Cout, kern, dil = 32, 3, 2
    SEQ = 8

    ks = jax.random.split(key, 4 + SEQ)
    scale = 0.1
    raw = {
        "kernel": kern, "dilation": dil,
        # stacked gate order: [f, i, o, j]
        "wx": scale * jax.random.normal(ks[0], (4, kern, kern, Cin, Cout), jnp.float32),
        "bx": scale * jax.random.normal(ks[1], (4, 1, Cout), jnp.float32),
        "wh": scale * jax.random.normal(ks[2], (4, kern, kern, Cout, Cout), jnp.float32),
        "bh": scale * jax.random.normal(ks[3], (4, 1, Cout), jnp.float32),
    }
    params = prepare_params(raw)

    seq = [jax.random.normal(ks[4 + t], (N, Cin, H, W), jnp.float32)
           for t in range(SEQ)]
    x_seq_nchw = jnp.stack(seq, axis=1)                 # (N, T, Cin, H, W)

    # Fused Pallas recurrence: a single pallas_call for the whole sequence.
    h_seq, (h_last, c_last) = conv_lstm_sequence(params, x_seq_nchw)
    jax.block_until_ready((h_seq, h_last, c_last))

    # Pure-JAX reference: chain the module's per-step forward from pair=None.
    rpair = None
    rh_steps = []
    for x in seq:
        rh, rpair = _ref_forward(raw, x, rpair)
        rh_steps.append(rh)

    # bf16 MXU inputs with f32 accumulation / f32 cell state -> loose tol.
    TOL = dict(rtol=3e-2, atol=3e-2)
    for t in range(SEQ):
        assert jnp.allclose(h_seq[:, t], rh_steps[t], **TOL), \
            f"h mismatch at step {t}"
    assert jnp.allclose(h_last, rh_steps[-1], **TOL), "h_last mismatch"
    assert jnp.allclose(c_last, rpair[1], **TOL), "c mismatch at final step"

    print("KERNEL_OK")
</pallas_src>

<mosaic_0001>
module attributes {stable_mosaic.version = 11 : i64} {
  func.func @_convlstm_seq_kernel(%arg0: i32, %arg1: i32, %arg2: memref<1x1x16x16x4xf32, #tpu.memory_space<vmem>>, %arg3: memref<36x128xbf16, #tpu.memory_space<vmem>>, %arg4: memref<288x128xbf16, #tpu.memory_space<vmem>>, %arg5: memref<1x128xf32, #tpu.memory_space<vmem>>, %arg6: memref<1x128xf32, #tpu.memory_space<vmem>>, %arg7: memref<1x1x16x16x32xf32, #tpu.memory_space<vmem>>, %arg8: memref<1x16x16x32xf32, #tpu.memory_space<vmem>>, %arg9: memref<20x20x4xf32, #tpu.memory_space<vmem>>, %arg10: memref<18x18x32xf32, #tpu.memory_space<vmem>>, %arg11: memref<256x32xf32, #tpu.memory_space<vmem>>) attributes {dimension_semantics = [#tpu.dimension_semantics<parallel>, #tpu.dimension_semantics<arbitrary>], iteration_bounds = array<i64: 2, 8>, scalar_prefetch = 0 : i64, scratch_operands = 3 : i64, tpu.core_type = #tpu.core_type<tc>, window_params = [{transform_indices = @transform_0, window_bounds = array<i64: 1, 1, 16, 16, 4>}, {pipeline_mode = #tpu.pipeline_mode<synchronous>, transform_indices = @transform_1, window_bounds = array<i64: 36, 128>}, {pipeline_mode = #tpu.pipeline_mode<synchronous>, transform_indices = @transform_2, window_bounds = array<i64: 288, 128>}, {pipeline_mode = #tpu.pipeline_mode<synchronous>, transform_indices = @transform_3, window_bounds = array<i64: 1, 128>}, {pipeline_mode = #tpu.pipeline_mode<synchronous>, transform_indices = @transform_4, window_bounds = array<i64: 1, 128>}, {transform_indices = @transform_5, window_bounds = array<i64: 1, 1, 16, 16, 32>}, {transform_indices = @transform_6, window_bounds = array<i64: 1, 16, 16, 32>}]} {
    %c0_i32 = arith.constant 0 : i32
    %0 = arith.cmpi eq, %arg1, %c0_i32 : i32
    %1 = arith.extui %0 : i1 to i32
    %c0_i32_0 = arith.constant 0 : i32
    %2 = arith.cmpi ne, %1, %c0_i32_0 : i32
    scf.if %2 {
      %cst_18 = arith.constant 0.000000e+00 : f32
      %38 = vector.broadcast %cst_18 : f32 to vector<20x20x4xf32>
      %c0_19 = arith.constant 0 : index
      %c0_20 = arith.constant 0 : index
      %c0_21 = arith.constant 0 : index
      %39 = vector.load %arg9[%c0_19, %c0_20, %c0_21] : memref<20x20x4xf32, #tpu.memory_space<vmem>>, vector<20x20x4xf32>
      tpu.vector_store %arg9[%c0_19, %c0_20, %c0_21], %38 {strides = array<i32>} : memref<20x20x4xf32, #tpu.memory_space<vmem>>, vector<20x20x4xf32>,
      %cst_22 = arith.constant 0.000000e+00 : f32
      %40 = vector.broadcast %cst_22 : f32 to vector<18x18x32xf32>
      %c0_23 = arith.constant 0 : index
      %c0_24 = arith.constant 0 : index
      %c0_25 = arith.constant 0 : index
      %41 = vector.load %arg10[%c0_23, %c0_24, %c0_25] : memref<18x18x32xf32, #tpu.memory_space<vmem>>, vector<18x18x32xf32>
      tpu.vector_store %arg10[%c0_23, %c0_24, %c0_25], %40 {strides = array<i32>} : memref<18x18x32xf32, #tpu.memory_space<vmem>>, vector<18x18x32xf32>,
    } else {
    }
    %c0 = arith.constant 0 : index
    %c0_1 = arith.constant 0 : index
    %c0_2 = arith.constant 0 : index
    %c0_3 = arith.constant 0 : index
    %c0_4 = arith.constant 0 : index
    %3 = vector.load %arg2[%c0, %c0_1, %c0_2, %c0_3, %c0_4] : memref<1x1x16x16x4xf32, #tpu.memory_space<vmem>>, vector<1x1x16x16x4xf32>
    %4 = vector.shape_cast %3 : vector<1x1x16x16x4xf32> to vector<16x16x4xf32>
    %c2 = arith.constant 2 : index
    %c2_5 = arith.constant 2 : index
    %c0_6 = arith.constant 0 : index
    %5 = vector.load %arg9[%c2, %c2_5, %c0_6] : memref<20x20x4xf32, #tpu.memory_space<vmem>>, vector<16x16x4xf32>
    tpu.vector_store %arg9[%c2, %c2_5, %c0_6], %4 {strides = array<i32>} : memref<20x20x4xf32, #tpu.memory_space<vmem>>, vector<16x16x4xf32>,
    %c0_7 = arith.constant 0 : index
    %c0_8 = arith.constant 0 : index
    %c0_9 = arith.constant 0 : index
    %6 = vector.load %arg9[%c0_7, %c0_8, %c0_9] : memref<20x20x4xf32, #tpu.memory_space<vmem>>, vector<20x20x4xf32>
    %7 = vector.extract_strided_slice %6 {offsets = [0, 0, 0], sizes = [16, 16, 4], strides = [1, 1, 1]} : vector<20x20x4xf32> to vector<16x16x4xf32>
    %8 = vector.shape_cast %7 : vector<16x16x4xf32> to vector<256x4xf32>
    %9 = vector.extract_strided_slice %6 {offsets = [0, 2, 0], sizes = [16, 16, 4], strides = [1, 1, 1]} : vector<20x20x4xf32> to vector<16x16x4xf32>
    %10 = vector.shape_cast %9 : vector<16x16x4xf32> to vector<256x4xf32>
    %11 = vector.extract_strided_slice %6 {offsets = [0, 4, 0], sizes = [16, 16, 4], strides = [1, 1, 1]} : vector<20x20x4xf32> to vector<16x16x4xf32>
    %12 = vector.shape_cast %11 : vector<16x16x4xf32> to vector<256x4xf32>
    %13 = vector.extract_strided_slice %6 {offsets = [2, 0, 0], sizes = [16, 16, 4], strides = [1, 1, 1]} : vector<20x20x4xf32> to vector<16x16x4xf32>
    %14 = vector.shape_cast %13 : vector<16x16x4xf32> to vector<256x4xf32>
    %15 = vector.extract_strided_slice %6 {offsets = [2, 2, 0], sizes = [16, 16, 4], strides = [1, 1, 1]} : vector<20x20x4xf32> to vector<16x16x4xf32>
    %16 = vector.shape_cast %15 : vector<16x16x4xf32> to vector<256x4xf32>
    %17 = vector.extract_strided_slice %6 {offsets = [2, 4, 0], sizes = [16, 16, 4], strides = [1, 1, 1]} : vector<20x20x4xf32> to vector<16x16x4xf32>
    %18 = vector.shape_cast %17 : vector<16x16x4xf32> to vector<256x4xf32>
    %19 = vector.extract_strided_slice %6 {offsets = [4, 0, 0], sizes = [16, 16, 4], strides = [1, 1, 1]} : vector<20x20x4xf32> to vector<16x16x4xf32>
    %20 = vector.shape_cast %19 : vector<16x16x4xf32> to vector<256x4xf32>
    %21 = vector.extract_strided_slice %6 {offsets = [4, 2, 0], sizes = [16, 16, 4], strides = [1, 1, 1]} : vector<20x20x4xf32> to vector<16x16x4xf32>
    %22 = vector.shape_cast %21 : vector<16x16x4xf32> to vector<256x4xf32>
    %23 = vector.extract_strided_slice %6 {offsets = [4, 4, 0], sizes = [16, 16, 4], strides = [1, 1, 1]} : vector<20x20x4xf32> to vector<16x16x4xf32>
    %24 = vector.shape_cast %23 : vector<16x16x4xf32> to vector<256x4xf32>
    %25 = tpu.concatenate %8, %10, %12, %14, %16, %18, %20, %22, %24 in 1 : vector<256x4xf32>, vector<256x4xf32>, vector<256x4xf32>, vector<256x4xf32>, vector<256x4xf32>, vector<256x4xf32>, vector<256x4xf32>, vector<256x4xf32>, vector<256x4xf32> -> vector<256x36xf32>
    %26 = arith.truncf %25 : vector<256x36xf32> to vector<256x36xbf16>
    %c0_10 = arith.constant 0 : index
    %c0_11 = arith.constant 0 : index
    %27 = vector.load %arg3[%c0_10, %c0_11] : memref<36x128xbf16, #tpu.memory_space<vmem>>, vector<36x128xbf16>
    %cst = arith.constant dense<0.000000e+00> : vector<256x128xf32>
    %28 = tpu.matmul %26, %27, %cst {dimension_numbers = #tpu.dot_dimension_numbers<[1], [0], [0], [1], [0, 0, 1, 1], [], []>} : vector<256x36xbf16>, vector<36x128xbf16>, vector<256x128xf32> -> vector<256x128xf32>
    %c0_12 = arith.constant 0 : index
    %c0_13 = arith.constant 0 : index
    %29 = vector.load %arg5[%c0_12, %c0_13] : memref<1x128xf32, #tpu.memory_space<vmem>>, vector<1x128xf32>
    %30 = vector.broadcast %29 : vector<1x128xf32> to vector<256x128xf32>
    %31 = arith.addf %28, %30 : vector<256x128xf32>
    %c0_i32_14 = arith.constant 0 : i32
    %32 = arith.cmpi eq, %arg1, %c0_i32_14 : i32
    %33 = arith.extui %32 : i1 to i32
    %c0_i32_15 = arith.constant 0 : i32
    %34 = arith.cmpi ne, %33, %c0_i32_15 : i32
    scf.if %34 {
      %38 = vector.extract_strided_slice %31 {offsets = [0, 32], sizes = [256, 32], strides = [1, 1]} : vector<256x128xf32> to vector<256x32xf32>
      %39 = arith.negf %38 : vector<256x32xf32>
      %40 = math.exp %39 : vector<256x32xf32>
      %cst_18 = arith.constant 1.000000e+00 : f32
      %41 = vector.broadcast %cst_18 : f32 to vector<256x32xf32>
      %42 = arith.addf %41, %40 : vector<256x32xf32>
      %43 = arith.divf %41, %42 : vector<256x32xf32>
      %44 = vector.extract_strided_slice %31 {offsets = [0, 64], sizes = [256, 32], strides = [1, 1]} : vector<256x128xf32> to vector<256x32xf32>
      %45 = arith.negf %44 : vector<256x32xf32>
      %46 = math.exp %45 : vector<256x32xf32>
      %cst_19 = arith.constant 1.000000e+00 : f32
      %47 = vector.broadcast %cst_19 : f32 to vector<256x32xf32>
      %48 = arith.addf %47, %46 : vector<256x32xf32>
      %49 = arith.divf %47, %48 : vector<256x32xf32>
      %50 = vector.extract_strided_slice %31 {offsets = [0, 96], sizes = [256, 32], strides = [1, 1]} : vector<256x128xf32> to vector<256x32xf32>
      %51 = math.tanh %50 : vector<256x32xf32>
      %52 = arith.mulf %43, %51 : vector<256x32xf32>
      %53 = arith.mulf %49, %52 : vector<256x32xf32>
      %cst_20 = arith.constant 0.000000e+00 : f32
      %54 = vector.broadcast %cst_20 : f32 to vector<256x32xf32>
      %55 = arith.cmpf oge, %53, %54 : vector<256x32xf32>
      %cst_21 = arith.constant 2.000000e-01 : f32
      %56 = vector.broadcast %cst_21 : f32 to vector<256x32xf32>
      %57 = arith.mulf %56, %53 : vector<256x32xf32>
      %58 = arith.select %55, %53, %57 : vector<256x32xi1>, vector<256x32xf32>
      %c0_22 = arith.constant 0 : index
      %c0_23 = arith.constant 0 : index
      %59 = vector.load %arg11[%c0_22, %c0_23] : memref<256x32xf32, #tpu.memory_space<vmem>>, vector<256x32xf32>
      tpu.vector_store %arg11[%c0_22, %c0_23], %52 {strides = array<i32>} : memref<256x32xf32, #tpu.memory_space<vmem>>, vector<256x32xf32>,
      %60 = vector.shape_cast %58 : vector<256x32xf32> to vector<16x16x32xf32>
      %c1 = arith.constant 1 : index
      %c1_24 = arith.constant 1 : index
      %c0_25 = arith.constant 0 : index
      %61 = vector.load %arg10[%c1, %c1_24, %c0_25] : memref<18x18x32xf32, #tpu.memory_space<vmem>>, vector<16x16x32xf32>
      tpu.vector_store %arg10[%c1, %c1_24, %c0_25], %60 {strides = array<i32>} : memref<18x18x32xf32, #tpu.memory_space<vmem>>, vector<16x16x32xf32>,
      %c0_26 = arith.constant 0 : index
      %c0_27 = arith.constant 0 : index
      %c0_28 = arith.constant 0 : index
      %c0_29 = arith.constant 0 : index
      %c0_30 = arith.constant 0 : index
      %62 = vector.load %arg7[%c0_26, %c0_27, %c0_28, %c0_29, %c0_30] : memref<1x1x16x16x32xf32, #tpu.memory_space<vmem>>, vector<1x1x16x16x32xf32>
      %63 = vector.shape_cast %62 : vector<1x1x16x16x32xf32> to vector<16x16x32xf32>
      %64 = vector.shape_cast %60 : vector<16x16x32xf32> to vector<1x1x16x16x32xf32>
      tpu.vector_store %arg7[%c0_26, %c0_27, %c0_28, %c0_29, %c0_30], %64 {strides = array<i32>} : memref<1x1x16x16x32xf32, #tpu.memory_space<vmem>>, vector<1x1x16x16x32xf32>,
      %65 = vector.shape_cast %52 : vector<256x32xf32> to vector<16x16x32xf32>
      %c0_31 = arith.constant 0 : index
      %c0_32 = arith.constant 0 : index
      %c0_33 = arith.constant 0 : index
      %c0_34 = arith.constant 0 : index
      %66 = vector.load %arg8[%c0_31, %c0_32, %c0_33, %c0_34] : memref<1x16x16x32xf32, #tpu.memory_space<vmem>>, vector<1x16x16x32xf32>
      %67 = vector.shape_cast %66 : vector<1x16x16x32xf32> to vector<16x16x32xf32>
      %68 = vector.shape_cast %65 : vector<16x16x32xf32> to vector<1x16x16x32xf32>
      tpu.vector_store %arg8[%c0_31, %c0_32, %c0_33, %c0_34], %68 {strides = array<i32>} : memref<1x16x16x32xf32, #tpu.memory_space<vmem>>, vector<1x16x16x32xf32>,
    } else {
    }
    %c0_i32_16 = arith.constant 0 : i32
    %35 = arith.cmpi ne, %arg1, %c0_i32_16 : i32
    %36 = arith.extui %35 : i1 to i32
    %c0_i32_17 = arith.constant 0 : i32
    %37 = arith.cmpi ne, %36, %c0_i32_17 : i32
    scf.if %37 {
      %c0_18 = arith.constant 0 : index
      %c0_19 = arith.constant 0 : index
      %c0_20 = arith.constant 0 : index
      %38 = vector.load %arg10[%c0_18, %c0_19, %c0_20] : memref<18x18x32xf32, #tpu.memory_space<vmem>>, vector<18x18x32xf32>
      %39 = vector.extract_strided_slice %38 {offsets = [0, 0, 0], sizes = [16, 16, 32], strides = [1, 1, 1]} : vector<18x18x32xf32> to vector<16x16x32xf32>
      %40 = vector.shape_cast %39 : vector<16x16x32xf32> to vector<256x32xf32>
      %41 = vector.extract_strided_slice %38 {offsets = [0, 1, 0], sizes = [16, 16, 32], strides = [1, 1, 1]} : vector<18x18x32xf32> to vector<16x16x32xf32>
      %42 = vector.shape_cast %41 : vector<16x16x32xf32> to vector<256x32xf32>
      %43 = vector.extract_strided_slice %38 {offsets = [0, 2, 0], sizes = [16, 16, 32], strides = [1, 1, 1]} : vector<18x18x32xf32> to vector<16x16x32xf32>
      %44 = vector.shape_cast %43 : vector<16x16x32xf32> to vector<256x32xf32>
      %45 = vector.extract_strided_slice %38 {offsets = [1, 0, 0], sizes = [16, 16, 32], strides = [1, 1, 1]} : vector<18x18x32xf32> to vector<16x16x32xf32>
      %46 = vector.shape_cast %45 : vector<16x16x32xf32> to vector<256x32xf32>
      %47 = vector.extract_strided_slice %38 {offsets = [1, 1, 0], sizes = [16, 16, 32], strides = [1, 1, 1]} : vector<18x18x32xf32> to vector<16x16x32xf32>
      %48 = vector.shape_cast %47 : vector<16x16x32xf32> to vector<256x32xf32>
      %49 = vector.extract_strided_slice %38 {offsets = [1, 2, 0], sizes = [16, 16, 32], strides = [1, 1, 1]} : vector<18x18x32xf32> to vector<16x16x32xf32>
      %50 = vector.shape_cast %49 : vector<16x16x32xf32> to vector<256x32xf32>
      %51 = vector.extract_strided_slice %38 {offsets = [2, 0, 0], sizes = [16, 16, 32], strides = [1, 1, 1]} : vector<18x18x32xf32> to vector<16x16x32xf32>
      %52 = vector.shape_cast %51 : vector<16x16x32xf32> to vector<256x32xf32>
      %53 = vector.extract_strided_slice %38 {offsets = [2, 1, 0], sizes = [16, 16, 32], strides = [1, 1, 1]} : vector<18x18x32xf32> to vector<16x16x32xf32>
      %54 = vector.shape_cast %53 : vector<16x16x32xf32> to vector<256x32xf32>
      %55 = vector.extract_strided_slice %38 {offsets = [2, 2, 0], sizes = [16, 16, 32], strides = [1, 1, 1]} : vector<18x18x32xf32> to vector<16x16x32xf32>
      %56 = vector.shape_cast %55 : vector<16x16x32xf32> to vector<256x32xf32>
      %57 = tpu.concatenate %40, %42, %44, %46, %48, %50, %52, %54, %56 in 1 : vector<256x32xf32>, vector<256x32xf32>, vector<256x32xf32>, vector<256x32xf32>, vector<256x32xf32>, vector<256x32xf32>, vector<256x32xf32>, vector<256x32xf32>, vector<256x32xf32> -> vector<256x288xf32>
      %58 = arith.truncf %57 : vector<256x288xf32> to vector<256x288xbf16>
      %c0_21 = arith.constant 0 : index
      %c0_22 = arith.constant 0 : index
      %59 = vector.load %arg4[%c0_21, %c0_22] : memref<288x128xbf16, #tpu.memory_space<vmem>>, vector<288x128xbf16>
      %cst_23 = arith.constant dense<0.000000e+00> : vector<256x128xf32>
      %60 = tpu.matmul %58, %59, %cst_23 {dimension_numbers = #tpu.dot_dimension_numbers<[1], [0], [0], [1], [0, 0, 1, 1], [], []>} : vector<256x288xbf16>, vector<288x128xbf16>, vector<256x128xf32> -> vector<256x128xf32>
      %61 = arith.addf %31, %60 : vector<256x128xf32>
      %c0_24 = arith.constant 0 : index
      %c0_25 = arith.constant 0 : index
      %62 = vector.load %arg6[%c0_24, %c0_25] : memref<1x128xf32, #tpu.memory_space<vmem>>, vector<1x128xf32>
      %63 = vector.broadcast %62 : vector<1x128xf32> to vector<256x128xf32>
      %64 = arith.addf %61, %63 : vector<256x128xf32>
      %65 = vector.extract_strided_slice %64 {offsets = [0, 0], sizes = [256, 32], strides = [1, 1]} : vector<256x128xf32> to vector<256x32xf32>
      %66 = arith.negf %65 : vector<256x32xf32>
      %67 = math.exp %66 : vector<256x32xf32>
      %cst_26 = arith.constant 1.000000e+00 : f32
      %68 = vector.broadcast %cst_26 : f32 to vector<256x32xf32>
      %69 = arith.addf %68, %67 : vector<256x32xf32>
      %70 = arith.divf %68, %69 : vector<256x32xf32>
      %71 = vector.extract_strided_slice %64 {offsets = [0, 32], sizes = [256, 32], strides = [1, 1]} : vector<256x128xf32> to vector<256x32xf32>
      %72 = arith.negf %71 : vector<256x32xf32>
      %73 = math.exp %72 : vector<256x32xf32>
      %cst_27 = arith.constant 1.000000e+00 : f32
      %74 = vector.broadcast %cst_27 : f32 to vector<256x32xf32>
      %75 = arith.addf %74, %73 : vector<256x32xf32>
      %76 = arith.divf %74, %75 : vector<256x32xf32>
      %77 = vector.extract_strided_slice %64 {offsets = [0, 64], sizes = [256, 32], strides = [1, 1]} : vector<256x128xf32> to vector<256x32xf32>
      %78 = arith.negf %77 : vector<256x32xf32>
      %79 = math.exp %78 : vector<256x32xf32>
      %cst_28 = arith.constant 1.000000e+00 : f32
      %80 = vector.broadcast %cst_28 : f32 to vector<256x32xf32>
      %81 = arith.addf %80, %79 : vector<256x32xf32>
      %82 = arith.divf %80, %81 : vector<256x32xf32>
      %83 = vector.extract_strided_slice %64 {offsets = [0, 96], sizes = [256, 32], strides = [1, 1]} : vector<256x128xf32> to vector<256x32xf32>
      %84 = math.tanh %83 : vector<256x32xf32>
      %c0_29 = arith.constant 0 : index
      %c0_30 = arith.constant 0 : index
      %85 = vector.load %arg11[%c0_29, %c0_30] : memref<256x32xf32, #tpu.memory_space<vmem>>, vector<256x32xf32>
      %86 = arith.mulf %70, %85 : vector<256x32xf32>
      %87 = arith.mulf %76, %84 : vector<256x32xf32>
      %88 = arith.addf %86, %87 : vector<256x32xf32>
      %89 = math.tanh %88 : vector<256x32xf32>
      %90 = arith.mulf %82, %89 : vector<256x32xf32>
      %cst_31 = arith.constant 0.000000e+00 : f32
      %91 = vector.broadcast %cst_31 : f32 to vector<256x32xf32>
      %92 = arith.cmpf oge, %90, %91 : vector<256x32xf32>
      %cst_32 = arith.constant 2.000000e-01 : f32
      %93 = vector.broadcast %cst_32 : f32 to vector<256x32xf32>
      %94 = arith.mulf %93, %90 : vector<256x32xf32>
      %95 = arith.select %92, %90, %94 : vector<256x32xi1>, vector<256x32xf32>
      %c0_33 = arith.constant 0 : index
      %c0_34 = arith.constant 0 : index
      %96 = vector.load %arg11[%c0_33, %c0_34] : memref<256x32xf32, #tpu.memory_space<vmem>>, vector<256x32xf32>
      tpu.vector_store %arg11[%c0_33, %c0_34], %88 {strides = array<i32>} : memref<256x32xf32, #tpu.memory_space<vmem>>, vector<256x32xf32>,
      %97 = vector.shape_cast %95 : vector<256x32xf32> to vector<16x16x32xf32>
      %c1 = arith.constant 1 : index
      %c1_35 = arith.constant 1 : index
      %c0_36 = arith.constant 0 : index
      %98 = vector.load %arg10[%c1, %c1_35, %c0_36] : memref<18x18x32xf32, #tpu.memory_space<vmem>>, vector<16x16x32xf32>
      tpu.vector_store %arg10[%c1, %c1_35, %c0_36], %97 {strides = array<i32>} : memref<18x18x32xf32, #tpu.memory_space<vmem>>, vector<16x16x32xf32>,
      %c0_37 = arith.constant 0 : index
      %c0_38 = arith.constant 0 : index
      %c0_39 = arith.constant 0 : index
      %c0_40 = arith.constant 0 : index
      %c0_41 = arith.constant 0 : index
      %99 = vector.load %arg7[%c0_37, %c0_38, %c0_39, %c0_40, %c0_41] : memref<1x1x16x16x32xf32, #tpu.memory_space<vmem>>, vector<1x1x16x16x32xf32>
      %100 = vector.shape_cast %99 : vector<1x1x16x16x32xf32> to vector<16x16x32xf32>
      %101 = vector.shape_cast %97 : vector<16x16x32xf32> to vector<1x1x16x16x32xf32>
      tpu.vector_store %arg7[%c0_37, %c0_38, %c0_39, %c0_40, %c0_41], %101 {strides = array<i32>} : memref<1x1x16x16x32xf32, #tpu.memory_space<vmem>>, vector<1x1x16x16x32xf32>,
      %102 = vector.shape_cast %88 : vector<256x32xf32> to vector<16x16x32xf32>
      %c0_42 = arith.constant 0 : index
      %c0_43 = arith.constant 0 : index
      %c0_44 = arith.constant 0 : index
      %c0_45 = arith.constant 0 : index
      %103 = vector.load %arg8[%c0_42, %c0_43, %c0_44, %c0_45] : memref<1x16x16x32xf32, #tpu.memory_space<vmem>>, vector<1x16x16x32xf32>
      %104 = vector.shape_cast %103 : vector<1x16x16x32xf32> to vector<16x16x32xf32>
      %105 = vector.shape_cast %102 : vector<16x16x32xf32> to vector<1x16x16x32xf32>
      tpu.vector_store %arg8[%c0_42, %c0_43, %c0_44, %c0_45], %105 {strides = array<i32>} : memref<1x16x16x32xf32, #tpu.memory_space<vmem>>, vector<1x16x16x32xf32>,
    } else {
    }
    return
  }
  func.func @transform_0(%arg0: i32, %arg1: i32) -> (i32, i32, i32, i32, i32) {
    %c0_i32 = arith.constant 0 : i32
    %c0_i32_0 = arith.constant 0 : i32
    %c0_i32_1 = arith.constant 0 : i32
    %c0_i32_2 = arith.constant 0 : i32
    return %arg0, %arg1, %c0_i32, %c0_i32_0, %c0_i32_1 : i32, i32, i32, i32, i32
  }
  func.func @transform_1(%arg0: i32, %arg1: i32) -> (i32, i32) {
    %c0_i32 = arith.constant 0 : i32
    %c0_i32_0 = arith.constant 0 : i32
    %c0_i32_1 = arith.constant 0 : i32
    return %c0_i32, %c0_i32_0 : i32, i32
  }
  func.func @transform_2(%arg0: i32, %arg1: i32) -> (i32, i32) {
    %c0_i32 = arith.constant 0 : i32
    %c0_i32_0 = arith.constant 0 : i32
    %c0_i32_1 = arith.constant 0 : i32
    return %c0_i32, %c0_i32_0 : i32, i32
  }
  func.func @transform_3(%arg0: i32, %arg1: i32) -> (i32, i32) {
    %c0_i32 = arith.constant 0 : i32
    %c0_i32_0 = arith.constant 0 : i32
    %c0_i32_1 = arith.constant 0 : i32
    return %c0_i32, %c0_i32_0 : i32, i32
  }
  func.func @transform_4(%arg0: i32, %arg1: i32) -> (i32, i32) {
    %c0_i32 = arith.constant 0 : i32
    %c0_i32_0 = arith.constant 0 : i32
    %c0_i32_1 = arith.constant 0 : i32
    return %c0_i32, %c0_i32_0 : i32, i32
  }
  func.func @transform_5(%arg0: i32, %arg1: i32) -> (i32, i32, i32, i32, i32) {
    %c0_i32 = arith.constant 0 : i32
    %c0_i32_0 = arith.constant 0 : i32
    %c0_i32_1 = arith.constant 0 : i32
    %c0_i32_2 = arith.constant 0 : i32
    return %arg0, %arg1, %c0_i32, %c0_i32_0, %c0_i32_1 : i32, i32, i32, i32, i32
  }
  func.func @transform_6(%arg0: i32, %arg1: i32) -> (i32, i32, i32, i32) {
    %c0_i32 = arith.constant 0 : i32
    %c0_i32_0 = arith.constant 0 : i32
    %c0_i32_1 = arith.constant 0 : i32
    %c0_i32_2 = arith.constant 0 : i32
    return %arg0, %c0_i32, %c0_i32_0, %c0_i32_1 : i32, i32, i32, i32
  }
}

</mosaic_0001>

<llo_original>
// kernel: tpu_custom_call.1
$region0: #{tpu_custom_call.1}
  #allocation0 [shape = 'u32[]', space=smem, size = 0x4, offset = 0x4, fixed_abs, tag = 'smem constant byte address 0x4 - core index']
  #allocation1 [shape = 'u32[144,128]{1,0:T(1,128)}', space=vmem, size = 0x12000, scoped, tag = 'internal scratch']
  #allocation2 [shape = 'f32[20,20,4]{2,1,0:T(8,128)}', space=vmem, size = 0x3c000, scoped, tag = 'scratch operand']
  #allocation3 [shape = 'f32[18,18,32]{2,1,0:T(8,128)}', space=vmem, size = 0x36000, scoped, tag = 'scratch operand']
  #allocation4 [shape = 'f32[256,32]{1,0:T(8,128)}', space=vmem, size = 0x20000, scoped, tag = 'scratch operand']
  %s0 = inlined_call_operand.vmem [shape: f32[2,8,16,16,4], index: 0, kind: input, shape index: {}]
  %s1 = inlined_call_operand.vmem [shape: bf16[36,128], index: 1, kind: input, shape index: {}]
  %s2 = inlined_call_operand.vmem [shape: bf16[288,128], index: 2, kind: input, shape index: {}]
  %s3 = inlined_call_operand.vmem [shape: f32[1,128], index: 3, kind: input, shape index: {}]
  %s4 = inlined_call_operand.vmem [shape: f32[1,128], index: 4, kind: input, shape index: {}]
  %s5 = inlined_call_operand.hbm [shape: f32[2,8,16,16,32], index: 5, kind: output, shape index: {0}]
  %s6 = inlined_call_operand.hbm [shape: f32[2,16,16,32], index: 6, kind: output, shape index: {1}]
  %7 = xla_tuple %s5, %s6
  %s8 = sld [smem:[#allocation0]]
  $region73: #{tpu_custom_call.1} parent=0
    _
  %s10 = ssub.s32 1, %s8
  %s11 = scalar_select 0, %s10, %s8
  $region1: #{tpu_custom_call.1} parent=0
    #allocation5 [shape = 'u8[262144]{0}', space=vmem, size = 0x40000, scoped, tag = 'output window, operand 0']
    #allocation6 [shape = 's32[2]{0}', space=sflag, size = 0x8, scoped, tag = 'scoped memory for tpu_custom_call.1']
    #allocation7 [shape = 'u8[262144]{0}', space=vmem, size = 0x40000, scoped, tag = 'output window, operand 1']
    #allocation8 [shape = 's32[2]{0}', space=sflag, size = 0x8, scoped, tag = 'scoped memory for tpu_custom_call.1']
    %12 = vsyncpa [#allocation6], 0
    %s13 = scalar_lea.sflag [#allocation6], 1
    %14 = vsyncpa %s13, 0
    %15 = vsyncpa [#allocation8], 0
    %s16 = scalar_lea.sflag [#allocation8], 1
    %17 = vsyncpa %s16, 0
    loop: start=0, step=1, limit=18
    $region2: #{tpu_custom_call.1} parent=1 // loop_pre_header
      _
    $region3: #{tpu_custom_call.1} parent=1 // loop_header
      %s19 = sphi 0, %s23
      %p20 = scmp.ge.s32.totalorder %s19, 18
      %s26 = sphi 0, %s38
      %s27 = sphi 0, %s34
      %s28 = sphi 0, %s26
      %s29 = sphi 0, %s27
      %s30 = sphi 0, %s28
      %s31 = sphi 0, %s29
      %s43 = sphi 0, %s45
      %s46 = sphi 0, %s43
      %s47 = sphi 0, %s46
      %s63 = sphi 0, %s47
      %s67 = sphi 0, %s67
      %s69 = sphi 0, %s67
      %s70 = sphi 0, %s69
      %s84 = sphi 0, %s70
      %s88 = sphi 0, %s88
      %s90 = sphi 0, %s88
      %s91 = sphi 0, %s90
      %s105 = sphi 0, %s91
      %s109 = sphi 0, %s109
      %s111 = sphi 0, %s109
      %s112 = sphi 0, %s111
      %s126 = sphi 0, %s112
      %s130 = sphi 0, %s130
      %s132 = sphi 0, %s130
      %s133 = sphi 0, %s132
      %s147 = sphi 0, %s133
      %s155 = sphi 0, %s157
      %s158 = sphi 0, %s155
      %s159 = sphi 0, %s158
      %s175 = sphi 0, %s159
      %s181 = sphi 0, %s183
      %s184 = sphi 0, %s181
      %s185 = sphi 0, %s184
      %s201 = sphi 0, %s185
    $region4: #{tpu_custom_call.1} parent=1 // loop_header_branch
      %22 = sbr.rel (%p20) target = $region8
    $region5: #{tpu_custom_call.1} parent=1 // loop_body
      %s24 = ssub.s32 %s19, 1
      %s25 = ssub.s32 %s19, 2
      %s32 = sadd.s32 1, %s27
      %p33 = scmp.ge.s32.totalorder %s32, 8
      %s34 = scalar_select %p33, 0, %s32
      %s35 = sadd.s32 1, %s26
      %s36 = scalar_select %p33, %s35, %s26
      %p37 = scmp.ge.s32.totalorder %s36, 2
      %s38 = scalar_select %p37, 0, %s36
      %s39 = ssub.s32 %s26, %s38
      %s40 = ssub.s32 %s27, %s34
      %s41 = sor.u32 %s39, %s40
      %p42 = scmp.eq.s32.totalorder %s41, 0
      %s44 = sadd.s32 %s43, 1
      %s45 = scalar_select %p42, %s43, %s44
      %p48 = pneg %p42
      %p49 = scmp.eq.s32.totalorder %s19, 15
      %p50 = por %p48, %p49
      %p51 = scmp.ne.s32.totalorder %s43, %s46
      %p52 = scmp.eq.s32.totalorder %s19, 0
      %p53 = por %p51, %p52
      %p54 = scmp.ne.s32.totalorder %s43, %s46
      %p55 = scmp.eq.s32.totalorder %s24, 15
      %p56 = por %p54, %p55
      %p57 = scmp.ne.s32.totalorder %s46, %s47
      %p58 = scmp.eq.s32.totalorder %s24, 0
      %p59 = por %p57, %p58
      %p60 = scmp.ne.s32.totalorder %s46, %s47
      %p61 = scmp.eq.s32.totalorder %s25, 15
      %p62 = por %p60, %p61
      %p64 = scmp.ne.s32.totalorder %s47, %s63
      %p65 = scmp.eq.s32.totalorder %s25, 0
      %p66 = por %p64, %p65
      %s68 = sadd.s32 %s67, 1
      %p71 = scmp.eq.s32.totalorder %s19, 15
      %p72 = scmp.ne.s32.totalorder %s67, %s69
      %p73 = scmp.eq.s32.totalorder %s19, 0
      %p74 = por %p72, %p73
      %p75 = scmp.ne.s32.totalorder %s67, %s69
      %p76 = scmp.eq.s32.totalorder %s24, 15
      %p77 = por %p75, %p76
      %p78 = scmp.ne.s32.totalorder %s69, %s70
      %p79 = scmp.eq.s32.totalorder %s24, 0
      %p80 = por %p78, %p79
      %p81 = scmp.ne.s32.totalorder %s69, %s70
      %p82 = scmp.eq.s32.totalorder %s25, 15
      %p83 = por %p81, %p82
      %p85 = scmp.ne.s32.totalorder %s70, %s84
      %p86 = scmp.eq.s32.totalorder %s25, 0
      %p87 = por %p85, %p86
      %s89 = sadd.s32 %s88, 1
      %p92 = scmp.eq.s32.totalorder %s19, 15
      %p93 = scmp.ne.s32.totalorder %s88, %s90
      %p94 = scmp.eq.s32.totalorder %s19, 0
      %p95 = por %p93, %p94
      %p96 = scmp.ne.s32.totalorder %s88, %s90
      %p97 = scmp.eq.s32.totalorder %s24, 15
      %p98 = por %p96, %p97
      %p99 = scmp.ne.s32.totalorder %s90, %s91
      %p100 = scmp.eq.s32.totalorder %s24, 0
      %p101 = por %p99, %p100
      %p102 = scmp.ne.s32.totalorder %s90, %s91
      %p103 = scmp.eq.s32.totalorder %s25, 15
      %p104 = por %p102, %p103
      %p106 = scmp.ne.s32.totalorder %s91, %s105
      %p107 = scmp.eq.s32.totalorder %s25, 0
      %p108 = por %p106, %p107
      %s110 = sadd.s32 %s109, 1
      %p113 = scmp.eq.s32.totalorder %s19, 15
      %p114 = scmp.ne.s32.totalorder %s109, %s111
      %p115 = scmp.eq.s32.totalorder %s19, 0
      %p116 = por %p114, %p115
      %p117 = scmp.ne.s32.totalorder %s109, %s111
      %p118 = scmp.eq.s32.totalorder %s24, 15
      %p119 = por %p117, %p118
      %p120 = scmp.ne.s32.totalorder %s111, %s112
      %p121 = scmp.eq.s32.totalorder %s24, 0
      %p122 = por %p120, %p121
      %p123 = scmp.ne.s32.totalorder %s111, %s112
      %p124 = scmp.eq.s32.totalorder %s25, 15
      %p125 = por %p123, %p124
      %p127 = scmp.ne.s32.totalorder %s112, %s126
      %p128 = scmp.eq.s32.totalorder %s25, 0
      %p129 = por %p127, %p128
      %s131 = sadd.s32 %s130, 1
      %p134 = scmp.eq.s32.totalorder %s19, 15
      %p135 = scmp.ne.s32.totalorder %s130, %s132
      %p136 = scmp.eq.s32.totalorder %s19, 0
      %p137 = por %p135, %p136
      %p138 = scmp.ne.s32.totalorder %s130, %s132
      %p139 = scmp.eq.s32.totalorder %s24, 15
      %p140 = por %p138, %p139
      %p141 = scmp.ne.s32.totalorder %s132, %s133
      %p142 = scmp.eq.s32.totalorder %s24, 0
      %p143 = por %p141, %p142
      %p144 = scmp.ne.s32.totalorder %s132, %s133
      %p145 = scmp.eq.s32.totalorder %s25, 15
      %p146 = por %p144, %p145
      %p148 = scmp.ne.s32.totalorder %s133, %s147
      %p149 = scmp.eq.s32.totalorder %s25, 0
      %p150 = por %p148, %p149
      %s151 = ssub.s32 %s26, %s38
      %s152 = ssub.s32 %s27, %s34
      %s153 = sor.u32 %s151, %s152
      %p154 = scmp.eq.s32.totalorder %s153, 0
      %s156 = sadd.s32 %s155, 1
      %s157 = scalar_select %p154, %s155, %s156
      %p160 = pneg %p154
      %p161 = scmp.eq.s32.totalorder %s19, 15
      %p162 = por %p160, %p161
      %p163 = scmp.ne.s32.totalorder %s155, %s158
      %p164 = scmp.eq.s32.totalorder %s19, 0
      %p165 = por %p163, %p164
      %p166 = scmp.ne.s32.totalorder %s155, %s158
      %p167 = scmp.eq.s32.totalorder %s24, 15
      %p168 = por %p166, %p167
      %p169 = scmp.ne.s32.totalorder %s158, %s159
      %p170 = scmp.eq.s32.totalorder %s24, 0
      %p171 = por %p169, %p170
      %p172 = scmp.ne.s32.totalorder %s158, %s159
      %p173 = scmp.eq.s32.totalorder %s25, 15
      %p174 = por %p172, %p173
      %p176 = scmp.ne.s32.totalorder %s159, %s175
      %p177 = scmp.eq.s32.totalorder %s25, 0
      %p178 = por %p176, %p177
      %s179 = ssub.s32 %s26, %s38
      %p180 = scmp.eq.s32.totalorder %s179, 0
      %s182 = sadd.s32 %s181, 1
      %s183 = scalar_select %p180, %s181, %s182
      %p186 = pneg %p180
      %p187 = scmp.eq.s32.totalorder %s19, 15
      %p188 = por %p186, %p187
      %p189 = scmp.ne.s32.totalorder %s181, %s184
      %p190 = scmp.eq.s32.totalorder %s19, 0
      %p191 = por %p189, %p190
      %p192 = scmp.ne.s32.totalorder %s181, %s184
      %p193 = scmp.eq.s32.totalorder %s24, 15
      %p194 = por %p192, %p193
      %p195 = scmp.ne.s32.totalorder %s184, %s185
      %p196 = scmp.eq.s32.totalorder %s24, 0
      %p197 = por %p195, %p196
      %p198 = scmp.ne.s32.totalorder %s184, %s185
      %p199 = scmp.eq.s32.totalorder %s25, 15
      %p200 = por %p198, %p199
      %p202 = scmp.ne.s32.totalorder %s185, %s201
      %p203 = scmp.eq.s32.totalorder %s25, 0
      %p204 = por %p202, %p203
      %p205 = scmp.le.s32.totalorder 1, %s19
      %p206 = scmp.lt.s32.totalorder %s19, 17
      %p207 = pnand %p205, %p206
      %p208 = pneg %p207
      // Predicated region
      $region9: #{tpu_custom_call.1} parent=5 // pred_check
        _
      $region10: #{tpu_custom_call.1} parent=5 // pred_check_branch
        %210 = sbr.rel (%p207) target = $region12
      $region11: #{tpu_custom_call.1} parent=5 // pred_region
        %s211 = ssub.s32 %s19, 1
        // Predicated region
        $region13: #{tpu_custom_call.1} parent=11 // pred_check
          %p212 = pneg %p80
        $region14: #{tpu_custom_call.1} parent=11 // pred_check_branch
          %214 = sbr.rel (%p212) target = $region16
        $region15: #{tpu_custom_call.1} parent=11 // pred_region
          _
        $region16: #{tpu_custom_call.1} parent=11 // pred_fallthru
          _
        // Predicated region
        $region17: #{tpu_custom_call.1} parent=11 // pred_check
          %p215 = pneg %p101
        $region18: #{tpu_custom_call.1} parent=11 // pred_check_branch
          %217 = sbr.rel (%p215) target = $region20
        $region19: #{tpu_custom_call.1} parent=11 // pred_region
          _
        $region20: #{tpu_custom_call.1} parent=11 // pred_fallthru
          _
        // Predicated region
        $region21: #{tpu_custom_call.1} parent=11 // pred_check
          %p218 = pneg %p122
        $region22: #{tpu_custom_call.1} parent=11 // pred_check_branch
          %220 = sbr.rel (%p218) target = $region24
        $region23: #{tpu_custom_call.1} parent=11 // pred_region
          _
        $region24: #{tpu_custom_call.1} parent=11 // pred_fallthru
          _
        // Predicated region
        $region25: #{tpu_custom_call.1} parent=11 // pred_check
          %p221 = pneg %p143
        $region26: #{tpu_custom_call.1} parent=11 // pred_check_branch
          %223 = sbr.rel (%p221) target = $region28
        $region27: #{tpu_custom_call.1} parent=11 // pred_region
          _
        $region28: #{tpu_custom_call.1} parent=11 // pred_fallthru
          _
      $region12: #{tpu_custom_call.1} parent=5 // pred_fallthru
        _
      %p224 = scmp.lt.s32.totalorder %s19, 16
      // Predicated region
      $region29: #{tpu_custom_call.1} parent=5 // pred_check
        %p225 = pneg %p224
      $region30: #{tpu_custom_call.1} parent=5 // pred_check_branch
        %227 = sbr.rel (%p225) target = $region32
      $region31: #{tpu_custom_call.1} parent=5 // pred_region
        // Predicated region
        $region33: #{tpu_custom_call.1} parent=31 // pred_check
          %p228 = pneg %p53
        $region34: #{tpu_custom_call.1} parent=31 // pred_check_branch
          %230 = sbr.rel (%p228) target = $region36
        $region35: #{tpu_custom_call.1} parent=31 // pred_region
          %p231 = scmp.lt.s32.totalorder %s26, 1
          %s232 = scalar_select %p231, %s26, 1
          %p233 = scmp.lt.s32.totalorder %s27, 7
          %s234 = scalar_select %p233, %s27, 7
          %s235 = smul.addr %s234, 32
          %s236 = smul.addr %s232, 256
          %s237 = sadd.s32 %s235, %s236
          %s238 = smul.addr %s237, 8
          %s239 = scalar_lea.vmem %s0, %s238
        $region36: #{tpu_custom_call.1} parent=31 // pred_fallthru
          _
      $region32: #{tpu_custom_call.1} parent=5 // pred_fallthru
        _
      %p240 = scmp.le.s32.totalorder 1, %s19
      %p241 = scmp.lt.s32.totalorder %s19, 17
      %p242 = pnand %p240, %p241
      %p243 = pneg %p242
      // Predicated region
      $region37: #{tpu_custom_call.1} parent=5 // pred_check
        _
      $region38: #{tpu_custom_call.1} parent=5 // pred_check_branch
        %245 = sbr.rel (%p242) target = $region40
      $region39: #{tpu_custom_call.1} parent=5 // pred_region
        %s246 = ssub.s32 %s19, 1
        %p247 = scmp.lt.s32.totalorder %s28, 1
        %s248 = scalar_select %p247, %s28, 1
        %p249 = scmp.lt.s32.totalorder %s29, 7
        %s250 = scalar_select %p249, %s29, 7
        %s251 = smul.addr %s250, 32
        %s252 = smul.addr %s248, 256
        %s253 = sadd.s32 %s251, %s252
        %s254 = smul.addr %s253, 8
        %s255 = scalar_lea.vmem %s0, %s254
        %p256 = pneg %p59
        %p257 = pneg %p56
        %p258 = pneg %p80
        %p259 = pneg %p77
        %p260 = pneg %p101
        %p261 = pneg %p98
        %p262 = pneg %p122
        %p263 = pneg %p119
        %p264 = pneg %p143
        %p265 = pneg %p140
        %p266 = pneg %p171
        %p267 = pneg %p168
        %s268 = sand.u32 %s158, 1
        %s269 = scalar_lea.sflag [#allocation6], %s268
        %s270 = sand.u32 %s158, 1
        %s271 = smul.addr %s270, 256
        %s272 = scalar_lea.vmem [#allocation5], %s271
        %p273 = pneg %p197
        %p274 = pneg %p194
        %s275 = sand.u32 %s184, 1
        %s276 = scalar_lea.sflag [#allocation8], %s275
        %s277 = sand.u32 %s184, 1
        %s278 = smul.addr %s277, 256
        %s279 = scalar_lea.vmem [#allocation7], %s278
        %p280 = scmp.lt.s32.totalorder %s28, 1
        %s281 = scalar_select %p280, %s28, 1
        %p282 = scmp.lt.s32.totalorder %s29, 7
        %s283 = scalar_select %p282, %s29, 7
        %s284 = smul.addr %s283, 32
        %s285 = smul.addr %s281, 256
        %s286 = sadd.s32 %s284, %s285
        %s287 = smul.addr %s286, 8
        %s288 = scalar_lea.vmem %s0, %s287
        %p290 = scmp.eq.s32.totalorder %s29, 0
        // Predicated region
        $region41: #{tpu_custom_call.1} parent=39 // pred_check
          %p291 = pneg %p290
        $region42: #{tpu_custom_call.1} parent=39 // pred_check_branch
          %293 = sbr.rel (%p291) target = $region44
        $region43: #{tpu_custom_call.1} parent=39 // pred_region
          %vm294 = vcmask 31744
          %295 = vst.msk [vmem:[#allocation2] sm:$0xff] %vm294, 0.0
          %296 = vst.msk [vmem:[#allocation2 + $0x8] sm:$0xff] %vm294, 0.0
          %vm297 = vcmask 27648
          %298 = vst.msk [vmem:[#allocation2 + $0x10] sm:$0xf] %vm297, 0.0
          %299 = vst.msk [vmem:[#allocation2 + $0x18] sm:$0xff] %vm294, 0.0
          %300 = vst.msk [vmem:[#allocation2 + $0x20] sm:$0xff] %vm294, 0.0
          %301 = vst.msk [vmem:[#allocation2 + $0x28] sm:$0xf] %vm297, 0.0
          %302 = vst.msk [vmem:[#allocation2 + $0x30] sm:$0xff] %vm294, 0.0
          %303 = vst.msk [vmem:[#allocation2 + $0x38] sm:$0xff] %vm294, 0.0
          %304 = vst.msk [vmem:[#allocation2 + $0x40] sm:$0xf] %vm297, 0.0
          %305 = vst.msk [vmem:[#allocation2 + $0x48] sm:$0xff] %vm294, 0.0
          %306 = vst.msk [vmem:[#allocation2 + $0x50] sm:$0xff] %vm294, 0.0
          %307 = vst.msk [vmem:[#allocation2 + $0x58] sm:$0xf] %vm297, 0.0
          %308 = vst.msk [vmem:[#allocation2 + $0x60] sm:$0xff] %vm294, 0.0
          %309 = vst.msk [vmem:[#allocation2 + $0x68] sm:$0xff] %vm294, 0.0
          %310 = vst.msk [vmem:[#allocation2 + $0x70] sm:$0xf] %vm297, 0.0
          %311 = vst.msk [vmem:[#allocation2 + $0x78] sm:$0xff] %vm294, 0.0
          %312 = vst.msk [vmem:[#allocation2 + $0x80] sm:$0xff] %vm294, 0.0
          %313 = vst.msk [vmem:[#allocation2 + $0x88] sm:$0xf] %vm297, 0.0
          %314 = vst.msk [vmem:[#allocation2 + $0x90] sm:$0xff] %vm294, 0.0
          %315 = vst.msk [vmem:[#allocation2 + $0x98] sm:$0xff] %vm294, 0.0
          %316 = vst.msk [vmem:[#allocation2 + $0xa0] sm:$0xf] %vm297, 0.0
          %317 = vst.msk [vmem:[#allocation2 + $0xa8] sm:$0xff] %vm294, 0.0
          %318 = vst.msk [vmem:[#allocation2 + $0xb0] sm:$0xff] %vm294, 0.0
          %319 = vst.msk [vmem:[#allocation2 + $0xb8] sm:$0xf] %vm297, 0.0
          %320 = vst.msk [vmem:[#allocation2 + $0xc0] sm:$0xff] %vm294, 0.0
          %321 = vst.msk [vmem:[#allocation2 + $0xc8] sm:$0xff] %vm294, 0.0
          %322 = vst.msk [vmem:[#allocation2 + $0xd0] sm:$0xf] %vm297, 0.0
          %323 = vst.msk [vmem:[#allocation2 + $0xd8] sm:$0xff] %vm294, 0.0
          %324 = vst.msk [vmem:[#allocation2 + $0xe0] sm:$0xff] %vm294, 0.0
          %325 = vst.msk [vmem:[#allocation2 + $0xe8] sm:$0xf] %vm297, 0.0
          %326 = vst.msk [vmem:[#allocation2 + $0xf0] sm:$0xff] %vm294, 0.0
          %327 = vst.msk [vmem:[#allocation2 + $0xf8] sm:$0xff] %vm294, 0.0
          %328 = vst.msk [vmem:[#allocation2 + $0x100] sm:$0xf] %vm297, 0.0
          %329 = vst.msk [vmem:[#allocation2 + $0x108] sm:$0xff] %vm294, 0.0
          %330 = vst.msk [vmem:[#allocation2 + $0x110] sm:$0xff] %vm294, 0.0
          %331 = vst.msk [vmem:[#allocation2 + $0x118] sm:$0xf] %vm297, 0.0
          %332 = vst.msk [vmem:[#allocation2 + $0x120] sm:$0xff] %vm294, 0.0
          %333 = vst.msk [vmem:[#allocation2 + $0x128] sm:$0xff] %vm294, 0.0
          %334 = vst.msk [vmem:[#allocation2 + $0x130] sm:$0xf] %vm297, 0.0
          %335 = vst.msk [vmem:[#allocation2 + $0x138] sm:$0xff] %vm294, 0.0
          %336 = vst.msk [vmem:[#allocation2 + $0x140] sm:$0xff] %vm294, 0.0
          %337 = vst.msk [vmem:[#allocation2 + $0x148] sm:$0xf] %vm297, 0.0
          %338 = vst.msk [vmem:[#allocation2 + $0x150] sm:$0xff] %vm294, 0.0
          %339 = vst.msk [vmem:[#allocation2 + $0x158] sm:$0xff] %vm294, 0.0
          %340 = vst.msk [vmem:[#allocation2 + $0x160] sm:$0xf] %vm297, 0.0
          %341 = vst.msk [vmem:[#allocation2 + $0x168] sm:$0xff] %vm294, 0.0
          %342 = vst.msk [vmem:[#allocation2 + $0x170] sm:$0xff] %vm294, 0.0
          %343 = vst.msk [vmem:[#allocation2 + $0x178] sm:$0xf] %vm297, 0.0
          %344 = vst.msk [vmem:[#allocation2 + $0x180] sm:$0xff] %vm294, 0.0
          %345 = vst.msk [vmem:[#allocation2 + $0x188] sm:$0xff] %vm294, 0.0
          %346 = vst.msk [vmem:[#allocation2 + $0x190] sm:$0xf] %vm297, 0.0
          %347 = vst.msk [vmem:[#allocation2 + $0x198] sm:$0xff] %vm294, 0.0
          %348 = vst.msk [vmem:[#allocation2 + $0x1a0] sm:$0xff] %vm294, 0.0
          %349 = vst.msk [vmem:[#allocation2 + $0x1a8] sm:$0xf] %vm297, 0.0
          %350 = vst.msk [vmem:[#allocation2 + $0x1b0] sm:$0xff] %vm294, 0.0
          %351 = vst.msk [vmem:[#allocation2 + $0x1b8] sm:$0xff] %vm294, 0.0
          %352 = vst.msk [vmem:[#allocation2 + $0x1c0] sm:$0xf] %vm297, 0.0
          %353 = vst.msk [vmem:[#allocation2 + $0x1c8] sm:$0xff] %vm294, 0.0
          %354 = vst.msk [vmem:[#allocation2 + $0x1d0] sm:$0xff] %vm294, 0.0
          %355 = vst.msk [vmem:[#allocation2 + $0x1d8] sm:$0xf] %vm297, 0.0
          %vm356 = vcmask 261120
          %357 = vst.msk [vmem:[#allocation3] sm:$0xff] %vm356, 0.0
          %358 = vst.msk [vmem:[#allocation3 + $0x8] sm:$0xff] %vm356, 0.0
          %vm359 = vcmask 254976
          %360 = vst.msk [vmem:[#allocation3 + $0x10] sm:$0x3] %vm359, 0.0
          %361 = vst.msk [vmem:[#allocation3 + $0x18] sm:$0xff] %vm356, 0.0
          %362 = vst.msk [vmem:[#allocation3 + $0x20] sm:$0xff] %vm356, 0.0
          %363 = vst.msk [vmem:[#allocation3 + $0x28] sm:$0x3] %vm359, 0.0
          %364 = vst.msk [vmem:[#allocation3 + $0x30] sm:$0xff] %vm356, 0.0
          %365 = vst.msk [vmem:[#allocation3 + $0x38] sm:$0xff] %vm356, 0.0
          %366 = vst.msk [vmem:[#allocation3 + $0x40] sm:$0x3] %vm359, 0.0
          %367 = vst.msk [vmem:[#allocation3 + $0x48] sm:$0xff] %vm356, 0.0
          %368 = vst.msk [vmem:[#allocation3 + $0x50] sm:$0xff] %vm356, 0.0
          %369 = vst.msk [vmem:[#allocation3 + $0x58] sm:$0x3] %vm359, 0.0
          %370 = vst.msk [vmem:[#allocation3 + $0x60] sm:$0xff] %vm356, 0.0
          %371 = vst.msk [vmem:[#allocation3 + $0x68] sm:$0xff] %vm356, 0.0
          %372 = vst.msk [vmem:[#allocation3 + $0x70] sm:$0x3] %vm359, 0.0
          %373 = vst.msk [vmem:[#allocation3 + $0x78] sm:$0xff] %vm356, 0.0
          %374 = vst.msk [vmem:[#allocation3 + $0x80] sm:$0xff] %vm356, 0.0
          %375 = vst.msk [vmem:[#allocation3 + $0x88] sm:$0x3] %vm359, 0.0
          %376 = vst.msk [vmem:[#allocation3 + $0x90] sm:$0xff] %vm356, 0.0
          %377 = vst.msk [vmem:[#allocation3 + $0x98] sm:$0xff] %vm356, 0.0
          %378 = vst.msk [vmem:[#allocation3 + $0xa0] sm:$0x3] %vm359, 0.0
          %379 = vst.msk [vmem:[#allocation3 + $0xa8] sm:$0xff] %vm356, 0.0
          %380 = vst.msk [vmem:[#allocation3 + $0xb0] sm:$0xff] %vm356, 0.0
          %381 = vst.msk [vmem:[#allocation3 + $0xb8] sm:$0x3] %vm359, 0.0
          %382 = vst.msk [vmem:[#allocation3 + $0xc0] sm:$0xff] %vm356, 0.0
          %383 = vst.msk [vmem:[#allocation3 + $0xc8] sm:$0xff] %vm356, 0.0
          %384 = vst.msk [vmem:[#allocation3 + $0xd0] sm:$0x3] %vm359, 0.0
          %385 = vst.msk [vmem:[#allocation3 + $0xd8] sm:$0xff] %vm356, 0.0
          %386 = vst.msk [vmem:[#allocation3 + $0xe0] sm:$0xff] %vm356, 0.0
          %387 = vst.msk [vmem:[#allocation3 + $0xe8] sm:$0x3] %vm359, 0.0
          %388 = vst.msk [vmem:[#allocation3 + $0xf0] sm:$0xff] %vm356, 0.0
          %389 = vst.msk [vmem:[#allocation3 + $0xf8] sm:$0xff] %vm356, 0.0
          %390 = vst.msk [vmem:[#allocation3 + $0x100] sm:$0x3] %vm359, 0.0
          %391 = vst.msk [vmem:[#allocation3 + $0x108] sm:$0xff] %vm356, 0.0
          %392 = vst.msk [vmem:[#allocation3 + $0x110] sm:$0xff] %vm356, 0.0
          %393 = vst.msk [vmem:[#allocation3 + $0x118] sm:$0x3] %vm359, 0.0
          %394 = vst.msk [vmem:[#allocation3 + $0x120] sm:$0xff] %vm356, 0.0
          %395 = vst.msk [vmem:[#allocation3 + $0x128] sm:$0xff] %vm356, 0.0
          %396 = vst.msk [vmem:[#allocation3 + $0x130] sm:$0x3] %vm359, 0.0
          %397 = vst.msk [vmem:[#allocation3 + $0x138] sm:$0xff] %vm356, 0.0
          %398 = vst.msk [vmem:[#allocation3 + $0x140] sm:$0xff] %vm356, 0.0
          %399 = vst.msk [vmem:[#allocation3 + $0x148] sm:$0x3] %vm359, 0.0
          %400 = vst.msk [vmem:[#allocation3 + $0x150] sm:$0xff] %vm356, 0.0
          %401 = vst.msk [vmem:[#allocation3 + $0x158] sm:$0xff] %vm356, 0.0
          %402 = vst.msk [vmem:[#allocation3 + $0x160] sm:$0x3] %vm359, 0.0
          %403 = vst.msk [vmem:[#allocation3 + $0x168] sm:$0xff] %vm356, 0.0
          %404 = vst.msk [vmem:[#allocation3 + $0x170] sm:$0xff] %vm356, 0.0
          %405 = vst.msk [vmem:[#allocation3 + $0x178] sm:$0x3] %vm359, 0.0
          %406 = vst.msk [vmem:[#allocation3 + $0x180] sm:$0xff] %vm356, 0.0
          %407 = vst.msk [vmem:[#allocation3 + $0x188] sm:$0xff] %vm356, 0.0
          %408 = vst.msk [vmem:[#allocation3 + $0x190] sm:$0x3] %vm359, 0.0
          %409 = vst.msk [vmem:[#allocation3 + $0x198] sm:$0xff] %vm356, 0.0
          %410 = vst.msk [vmem:[#allocation3 + $0x1a0] sm:$0xff] %vm356, 0.0
          %411 = vst.msk [vmem:[#allocation3 + $0x1a8] sm:$0x3] %vm359, 0.0
        $region44: #{tpu_custom_call.1} parent=39 // pred_fallthru
          _
        %v412 = vld [vmem:[%s288] sm:$0xff]
        %v413 = vld [vmem:[%s288 + $0x8] sm:$0xff]
        %v414 = vld [vmem:[%s288 + $0x10] sm:$0xff]
        %v415 = vld [vmem:[%s288 + $0x18] sm:$0xff]
        %v416 = vld [vmem:[%s288 + $0x20] sm:$0xff]
        %v417 = vld [vmem:[%s288 + $0x28] sm:$0xff]
        %v418 = vld [vmem:[%s288 + $0x30] sm:$0xff]
        %v419 = vld [vmem:[%s288 + $0x38] sm:$0xff]
        %v420 = vld [vmem:[%s288 + $0x40] sm:$0xff]
        %v421 = vld [vmem:[%s288 + $0x48] sm:$0xff]
        %v422 = vld [vmem:[%s288 + $0x50] sm:$0xff]
        %v423 = vld [vmem:[%s288 + $0x58] sm:$0xff]
        %v424 = vld [vmem:[%s288 + $0x60] sm:$0xff]
        %v425 = vld [vmem:[%s288 + $0x68] sm:$0xff]
        %v426 = vld [vmem:[%s288 + $0x70] sm:$0xff]
        %v427 = vld [vmem:[%s288 + $0x78] sm:$0xff]
        %v428 = vld [vmem:[%s288 + $0x80] sm:$0xff]
        %v429 = vld [vmem:[%s288 + $0x88] sm:$0xff]
        %v430 = vld [vmem:[%s288 + $0x90] sm:$0xff]
        %v431 = vld [vmem:[%s288 + $0x98] sm:$0xff]
        %v432 = vld [vmem:[%s288 + $0xa0] sm:$0xff]
        %v433 = vld [vmem:[%s288 + $0xa8] sm:$0xff]
        %v434 = vld [vmem:[%s288 + $0xb0] sm:$0xff]
        %v435 = vld [vmem:[%s288 + $0xb8] sm:$0xff]
        %v436 = vld [vmem:[%s288 + $0xc0] sm:$0xff]
        %v437 = vld [vmem:[%s288 + $0xc8] sm:$0xff]
        %v438 = vld [vmem:[%s288 + $0xd0] sm:$0xff]
        %v439 = vld [vmem:[%s288 + $0xd8] sm:$0xff]
        %v440 = vld [vmem:[%s288 + $0xe0] sm:$0xff]
        %v441 = vld [vmem:[%s288 + $0xe8] sm:$0xff]
        %v442 = vld [vmem:[%s288 + $0xf0] sm:$0xff]
        %v443 = vld [vmem:[%s288 + $0xf8] sm:$0xff]
        %s444 = scalar_lea.vmem [#allocation2], 48
        %vm445 = vcmask 31744
        %446 = vst.msk [vmem:[%s444 + $0x2] sm:$0xff] %vm445, %v412
        %447 = vst.msk [vmem:[%s444 + $0xa] sm:$0xff] %vm445, %v413
        %448 = vst.msk [vmem:[%s444 + $0x1a] sm:$0xff] %vm445, %v414
        %449 = vst.msk [vmem:[%s444 + $0x22] sm:$0xff] %vm445, %v415
        %450 = vst.msk [vmem:[%s444 + $0x32] sm:$0xff] %vm445, %v416
        %451 = vst.msk [vmem:[%s444 + $0x3a] sm:$0xff] %vm445, %v417
        %452 = vst.msk [vmem:[%s444 + $0x4a] sm:$0xff] %vm445, %v418
        %453 = vst.msk [vmem:[%s444 + $0x52] sm:$0xff] %vm445, %v419
        %454 = vst.msk [vmem:[%s444 + $0x62] sm:$0xff] %vm445, %v420
        %455 = vst.msk [vmem:[%s444 + $0x6a] sm:$0xff] %vm445, %v421
        %456 = vst.msk [vmem:[%s444 + $0x7a] sm:$0xff] %vm445, %v422
        %457 = vst.msk [vmem:[%s444 + $0x82] sm:$0xff] %vm445, %v423
        %458 = vst.msk [vmem:[%s444 + $0x92] sm:$0xff] %vm445, %v424
        %459 = vst.msk [vmem:[%s444 + $0x9a] sm:$0xff] %vm445, %v425
        %460 = vst.msk [vmem:[%s444 + $0xaa] sm:$0xff] %vm445, %v426
        %461 = vst.msk [vmem:[%s444 + $0xb2] sm:$0xff] %vm445, %v427
        %462 = vst.msk [vmem:[%s444 + $0xc2] sm:$0xff] %vm445, %v428
        %463 = vst.msk [vmem:[%s444 + $0xca] sm:$0xff] %vm445, %v429
        %464 = vst.msk [vmem:[%s444 + $0xda] sm:$0xff] %vm445, %v430
        %465 = vst.msk [vmem:[%s444 + $0xe2] sm:$0xff] %vm445, %v431
        %466 = vst.msk [vmem:[%s444 + $0xf2] sm:$0xff] %vm445, %v432
        %467 = vst.msk [vmem:[%s444 + $0xfa] sm:$0xff] %vm445, %v433
        %468 = vst.msk [vmem:[%s444 + $0x10a] sm:$0xff] %vm445, %v434
        %469 = vst.msk [vmem:[%s444 + $0x112] sm:$0xff] %vm445, %v435
        %470 = vst.msk [vmem:[%s444 + $0x122] sm:$0xff] %vm445, %v436
        %471 = vst.msk [vmem:[%s444 + $0x12a] sm:$0xff] %vm445, %v437
        %472 = vst.msk [vmem:[%s444 + $0x13a] sm:$0xff] %vm445, %v438
        %473 = vst.msk [vmem:[%s444 + $0x142] sm:$0xff] %vm445, %v439
        %474 = vst.msk [vmem:[%s444 + $0x152] sm:$0xff] %vm445, %v440
        %475 = vst.msk [vmem:[%s444 + $0x15a] sm:$0xff] %vm445, %v441
        %476 = vst.msk [vmem:[%s444 + $0x16a] sm:$0xff] %vm445, %v442
        %477 = vst.msk [vmem:[%s444 + $0x172] sm:$0xff] %vm445, %v443
        %v478 = vld [vmem:[#allocation2] sm:$0xff]
        %v479 = vld [vmem:[#allocation2 + $0x8] sm:$0xff]
        %v480 = vld [vmem:[#allocation2 + $0x10] sm:$0xf]
        %v481 = vld [vmem:[#allocation2 + $0x18] sm:$0xff]
        %v482 = vld [vmem:[#allocation2 + $0x20] sm:$0xff]
        %v483 = vld [vmem:[#allocation2 + $0x28] sm:$0xf]
        %v484 = vld [vmem:[#allocation2 + $0x30] sm:$0xff]
        %v485 = vld [vmem:[#allocation2 + $0x38] sm:$0xff]
        %v486 = vld [vmem:[#allocation2 + $0x40] sm:$0xf]
        %v487 = vld [vmem:[#allocation2 + $0x48] sm:$0xff]
        %v488 = vld [vmem:[#allocation2 + $0x50] sm:$0xff]
        %v489 = vld [vmem:[#allocation2 + $0x58] sm:$0xf]
        %v490 = vld [vmem:[#allocation2 + $0x60] sm:$0xff]
        %v491 = vld [vmem:[#allocation2 + $0x68] sm:$0xff]
        %v492 = vld [vmem:[#allocation2 + $0x70] sm:$0xf]
        %v493 = vld [vmem:[#allocation2 + $0x78] sm:$0xff]
        %v494 = vld [vmem:[#allocation2 + $0x80] sm:$0xff]
        %v495 = vld [vmem:[#allocation2 + $0x88] sm:$0xf]
        %v496 = vld [vmem:[#allocation2 + $0x90] sm:$0xff]
        %v497 = vld [vmem:[#allocation2 + $0x98] sm:$0xff]
        %v498 = vld [vmem:[#allocation2 + $0xa0] sm:$0xf]
        %v499 = vld [vmem:[#allocation2 + $0xa8] sm:$0xff]
        %v500 = vld [vmem:[#allocation2 + $0xb0] sm:$0xff]
        %v501 = vld [vmem:[#allocation2 + $0xb8] sm:$0xf]
        %v502 = vld [vmem:[#allocation2 + $0xc0] sm:$0xff]
        %v503 = vld [vmem:[#allocation2 + $0xc8] sm:$0xff]
        %v504 = vld [vmem:[#allocation2 + $0xd0] sm:$0xf]
        %v505 = vld [vmem:[#allocation2 + $0xd8] sm:$0xff]
        %v506 = vld [vmem:[#allocation2 + $0xe0] sm:$0xff]
        %v507 = vld [vmem:[#allocation2 + $0xe8] sm:$0xf]
        %v508 = vld [vmem:[#allocation2 + $0xf0] sm:$0xff]
        %v509 = vld [vmem:[#allocation2 + $0xf8] sm:$0xff]
        %v510 = vld [vmem:[#allocation2 + $0x100] sm:$0xf]
        %v511 = vld [vmem:[#allocation2 + $0x108] sm:$0xff]
        %v512 = vld [vmem:[#allocation2 + $0x110] sm:$0xff]
        %v513 = vld [vmem:[#allocation2 + $0x118] sm:$0xf]
        %v514 = vld [vmem:[#allocation2 + $0x120] sm:$0xff]
        %v515 = vld [vmem:[#allocation2 + $0x128] sm:$0xff]
        %v516 = vld [vmem:[#allocation2 + $0x130] sm:$0xf]
        %v517 = vld [vmem:[#allocation2 + $0x138] sm:$0xff]
        %v518 = vld [vmem:[#allocation2 + $0x140] sm:$0xff]
        %v519 = vld [vmem:[#allocation2 + $0x148] sm:$0xf]
        %v520 = vld [vmem:[#allocation2 + $0x150] sm:$0xff]
        %v521 = vld [vmem:[#allocation2 + $0x158] sm:$0xff]
        %v522 = vld [vmem:[#allocation2 + $0x160] sm:$0xf]
        %v523 = vld [vmem:[#allocation2 + $0x168] sm:$0xff]
        %v524 = vld [vmem:[#allocation2 + $0x170] sm:$0xff]
        %v525 = vld [vmem:[#allocation2 + $0x178] sm:$0xf]
        %v526 = vld [vmem:[#allocation2 + $0x180] sm:$0xff]
        %v527 = vld [vmem:[#allocation2 + $0x188] sm:$0xff]
        %v528 = vld [vmem:[#allocation2 + $0x190] sm:$0xf]
        %v529 = vld [vmem:[#allocation2 + $0x198] sm:$0xff]
        %v530 = vld [vmem:[#allocation2 + $0x1a0] sm:$0xff]
        %v531 = vld [vmem:[#allocation2 + $0x1a8] sm:$0xf]
        %v532 = vld [vmem:[#allocation2 + $0x1b0] sm:$0xff]
        %v533 = vld [vmem:[#allocation2 + $0x1b8] sm:$0xff]
        %v534 = vld [vmem:[#allocation2 + $0x1c0] sm:$0xf]
        %v535 = vld [vmem:[#allocation2 + $0x1c8] sm:$0xff]
        %v536 = vld [vmem:[#allocation2 + $0x1d0] sm:$0xff]
        %v537 = vld [vmem:[#allocation2 + $0x1d8] sm:$0xf]
        %vm586 = vcmask 1045504
        %v587 = vrot.slane %v478, 2
        %v588 = vrot.slane %v479, 2
        %v589 = vsel %vm586, %v587, %v588
        %v590 = vrot.slane %v480, 2
        %v591 = vsel %vm586, %v588, %v590
        %v592 = vrot.slane %v481, 2
        %v593 = vrot.slane %v482, 2
        %v594 = vsel %vm586, %v592, %v593
        %v595 = vrot.slane %v483, 2
        %v596 = vsel %vm586, %v593, %v595
        %v597 = vrot.slane %v484, 2
        %v598 = vrot.slane %v485, 2
        %v599 = vsel %vm586, %v597, %v598
        %v600 = vrot.slane %v486, 2
        %v601 = vsel %vm586, %v598, %v600
        %v602 = vrot.slane %v487, 2
        %v603 = vrot.slane %v488, 2
        %v604 = vsel %vm586, %v602, %v603
        %v605 = vrot.slane %v489, 2
        %v606 = vsel %vm586, %v603, %v605
        %v607 = vrot.slane %v490, 2
        %v608 = vrot.slane %v491, 2
        %v609 = vsel %vm586, %v607, %v608
        %v610 = vrot.slane %v492, 2
        %v611 = vsel %vm586, %v608, %v610
        %v612 = vrot.slane %v493, 2
        %v613 = vrot.slane %v494, 2
        %v614 = vsel %vm586, %v612, %v613
        %v615 = vrot.slane %v495, 2
        %v616 = vsel %vm586, %v613, %v615
        %v617 = vrot.slane %v496, 2
        %v618 = vrot.slane %v497, 2
        %v619 = vsel %vm586, %v617, %v618
        %v620 = vrot.slane %v498, 2
        %v621 = vsel %vm586, %v618, %v620
        %v622 = vrot.slane %v499, 2
        %v623 = vrot.slane %v500, 2
        %v624 = vsel %vm586, %v622, %v623
        %v625 = vrot.slane %v501, 2
        %v626 = vsel %vm586, %v623, %v625
        %v627 = vrot.slane %v502, 2
        %v628 = vrot.slane %v503, 2
        %v629 = vsel %vm586, %v627, %v628
        %v630 = vrot.slane %v504, 2
        %v631 = vsel %vm586, %v628, %v630
        %v632 = vrot.slane %v505, 2
        %v633 = vrot.slane %v506, 2
        %v634 = vsel %vm586, %v632, %v633
        %v635 = vrot.slane %v507, 2
        %v636 = vsel %vm586, %v633, %v635
        %v637 = vrot.slane %v508, 2
        %v638 = vrot.slane %v509, 2
        %v639 = vsel %vm586, %v637, %v638
        %v640 = vrot.slane %v510, 2
        %v641 = vsel %vm586, %v638, %v640
        %v642 = vrot.slane %v511, 2
        %v643 = vrot.slane %v512, 2
        %v644 = vsel %vm586, %v642, %v643
        %v645 = vrot.slane %v513, 2
        %v646 = vsel %vm586, %v643, %v645
        %v647 = vrot.slane %v514, 2
        %v648 = vrot.slane %v515, 2
        %v649 = vsel %vm586, %v647, %v648
        %v650 = vrot.slane %v516, 2
        %v651 = vsel %vm586, %v648, %v650
        %v652 = vrot.slane %v517, 2
        %v653 = vrot.slane %v518, 2
        %v654 = vsel %vm586, %v652, %v653
        %v655 = vrot.slane %v519, 2
        %v656 = vsel %vm586, %v653, %v655
        %v657 = vrot.slane %v520, 2
        %v658 = vrot.slane %v521, 2
        %v659 = vsel %vm586, %v657, %v658
        %v660 = vrot.slane %v522, 2
        %v661 = vsel %vm586, %v658, %v660
        %v662 = vrot.slane %v523, 2
        %v663 = vrot.slane %v524, 2
        %v664 = vsel %vm586, %v662, %v663
        %v665 = vrot.slane %v525, 2
        %v666 = vsel %vm586, %v663, %v665
        %vm667 = vcmask 1043456
        %v668 = vrot.slane %v478, 4
        %v669 = vrot.slane %v479, 4
        %v670 = vsel %vm667, %v668, %v669
        %v671 = vrot.slane %v480, 4
        %v672 = vsel %vm667, %v669, %v671
        %v673 = vrot.slane %v481, 4
        %v674 = vrot.slane %v482, 4
        %v675 = vsel %vm667, %v673, %v674
        %v676 = vrot.slane %v483, 4
        %v677 = vsel %vm667, %v674, %v676
        %v678 = vrot.slane %v484, 4
        %v679 = vrot.slane %v485, 4
        %v680 = vsel %vm667, %v678, %v679
        %v681 = vrot.slane %v486, 4
        %v682 = vsel %vm667, %v679, %v681
        %v683 = vrot.slane %v487, 4
        %v684 = vrot.slane %v488, 4
        %v685 = vsel %vm667, %v683, %v684
        %v686 = vrot.slane %v489, 4
        %v687 = vsel %vm667, %v684, %v686
        %v688 = vrot.slane %v490, 4
        %v689 = vrot.slane %v491, 4
        %v690 = vsel %vm667, %v688, %v689
        %v691 = vrot.slane %v492, 4
        %v692 = vsel %vm667, %v689, %v691
        %v693 = vrot.slane %v493, 4
        %v694 = vrot.slane %v494, 4
        %v695 = vsel %vm667, %v693, %v694
        %v696 = vrot.slane %v495, 4
        %v697 = vsel %vm667, %v694, %v696
        %v698 = vrot.slane %v496, 4
        %v699 = vrot.slane %v497, 4
        %v700 = vsel %vm667, %v698, %v699
        %v701 = vrot.slane %v498, 4
        %v702 = vsel %vm667, %v699, %v701
        %v703 = vrot.slane %v499, 4
        %v704 = vrot.slane %v500, 4
        %v705 = vsel %vm667, %v703, %v704
        %v706 = vrot.slane %v501, 4
        %v707 = vsel %vm667, %v704, %v706
        %v708 = vrot.slane %v502, 4
        %v709 = vrot.slane %v503, 4
        %v710 = vsel %vm667, %v708, %v709
        %v711 = vrot.slane %v504, 4
        %v712 = vsel %vm667, %v709, %v711
        %v713 = vrot.slane %v505, 4
        %v714 = vrot.slane %v506, 4
        %v715 = vsel %vm667, %v713, %v714
        %v716 = vrot.slane %v507, 4
        %v717 = vsel %vm667, %v714, %v716
        %v718 = vrot.slane %v508, 4
        %v719 = vrot.slane %v509, 4
        %v720 = vsel %vm667, %v718, %v719
        %v721 = vrot.slane %v510, 4
        %v722 = vsel %vm667, %v719, %v721
        %v723 = vrot.slane %v511, 4
        %v724 = vrot.slane %v512, 4
        %v725 = vsel %vm667, %v723, %v724
        %v726 = vrot.slane %v513, 4
        %v727 = vsel %vm667, %v724, %v726
        %v728 = vrot.slane %v514, 4
        %v729 = vrot.slane %v515, 4
        %v730 = vsel %vm667, %v728, %v729
        %v731 = vrot.slane %v516, 4
        %v732 = vsel %vm667, %v729, %v731
        %v733 = vrot.slane %v517, 4
        %v734 = vrot.slane %v518, 4
        %v735 = vsel %vm667, %v733, %v734
        %v736 = vrot.slane %v519, 4
        %v737 = vsel %vm667, %v734, %v736
        %v738 = vrot.slane %v520, 4
        %v739 = vrot.slane %v521, 4
        %v740 = vsel %vm667, %v738, %v739
        %v741 = vrot.slane %v522, 4
        %v742 = vsel %vm667, %v739, %v741
        %v743 = vrot.slane %v523, 4
        %v744 = vrot.slane %v524, 4
        %v745 = vsel %vm667, %v743, %v744
        %v746 = vrot.slane %v525, 4
        %v747 = vsel %vm667, %v744, %v746
        %v754 = vrot.slane %v526, 2
        %v755 = vrot.slane %v527, 2
        %v756 = vsel %vm586, %v754, %v755
        %v757 = vrot.slane %v528, 2
        %v758 = vsel %vm586, %v755, %v757
        %v759 = vrot.slane %v529, 2
        %v760 = vrot.slane %v530, 2
        %v761 = vsel %vm586, %v759, %v760
        %v762 = vrot.slane %v531, 2
        %v763 = vsel %vm586, %v760, %v762
        %v764 = vrot.slane %v526, 4
        %v765 = vrot.slane %v527, 4
        %v766 = vsel %vm667, %v764, %v765
        %v767 = vrot.slane %v528, 4
        %v768 = vsel %vm667, %v765, %v767
        %v769 = vrot.slane %v529, 4
        %v770 = vrot.slane %v530, 4
        %v771 = vsel %vm667, %v769, %v770
        %v772 = vrot.slane %v531, 4
        %v773 = vsel %vm667, %v770, %v772
        %v780 = vrot.slane %v532, 2
        %v781 = vrot.slane %v533, 2
        %v782 = vsel %vm586, %v780, %v781
        %v783 = vrot.slane %v534, 2
        %v784 = vsel %vm586, %v781, %v783
        %v785 = vrot.slane %v535, 2
        %v786 = vrot.slane %v536, 2
        %v787 = vsel %vm586, %v785, %v786
        %v788 = vrot.slane %v537, 2
        %v789 = vsel %vm586, %v786, %v788
        %v790 = vrot.slane %v532, 4
        %v791 = vrot.slane %v533, 4
        %v792 = vsel %vm667, %v790, %v791
        %v793 = vrot.slane %v534, 4
        %v794 = vsel %vm667, %v791, %v793
        %v795 = vrot.slane %v535, 4
        %v796 = vrot.slane %v536, 4
        %v797 = vsel %vm667, %v795, %v796
        %v798 = vrot.slane %v537, 4
        %v799 = vsel %vm667, %v796, %v798
        %800 = vrot.lane.b32.xlu0 %v589, 4
        %v801 = vpop.permute.xlu0 %800
        %802 = vrot.lane.b32.xlu0 %v591, 4
        %v803 = vpop.permute.xlu0 %802
        %804 = vrot.lane.b32.xlu0 %v594, 4
        %v805 = vpop.permute.xlu0 %804
        %806 = vrot.lane.b32.xlu0 %v596, 4
        %v807 = vpop.permute.xlu0 %806
        %808 = vrot.lane.b32.xlu0 %v599, 4
        %v809 = vpop.permute.xlu0 %808
        %810 = vrot.lane.b32.xlu0 %v601, 4
        %v811 = vpop.permute.xlu0 %810
        %812 = vrot.lane.b32.xlu0 %v604, 4
        %v813 = vpop.permute.xlu0 %812
        %814 = vrot.lane.b32.xlu0 %v606, 4
        %v815 = vpop.permute.xlu0 %814
        %816 = vrot.lane.b32.xlu0 %v609, 4
        %v817 = vpop.permute.xlu0 %816
        %818 = vrot.lane.b32.xlu0 %v611, 4
        %v819 = vpop.permute.xlu0 %818
        %820 = vrot.lane.b32.xlu0 %v614, 4
        %v821 = vpop.permute.xlu0 %820
        %822 = vrot.lane.b32.xlu0 %v616, 4
        %v823 = vpop.permute.xlu0 %822
        %824 = vrot.lane.b32.xlu0 %v619, 4
        %v825 = vpop.permute.xlu0 %824
        %826 = vrot.lane.b32.xlu0 %v621, 4
        %v827 = vpop.permute.xlu0 %826
        %828 = vrot.lane.b32.xlu0 %v624, 4
        %v829 = vpop.permute.xlu0 %828
        %830 = vrot.lane.b32.xlu0 %v626, 4
        %v831 = vpop.permute.xlu0 %830
        %832 = vrot.lane.b32.xlu0 %v629, 4
        %v833 = vpop.permute.xlu0 %832
        %834 = vrot.lane.b32.xlu0 %v631, 4
        %v835 = vpop.permute.xlu0 %834
        %836 = vrot.lane.b32.xlu0 %v634, 4
        %v837 = vpop.permute.xlu0 %836
        %838 = vrot.lane.b32.xlu0 %v636, 4
        %v839 = vpop.permute.xlu0 %838
        %840 = vrot.lane.b32.xlu0 %v639, 4
        %v841 = vpop.permute.xlu0 %840
        %842 = vrot.lane.b32.xlu0 %v641, 4
        %v843 = vpop.permute.xlu0 %842
        %844 = vrot.lane.b32.xlu0 %v644, 4
        %v845 = vpop.permute.xlu0 %844
        %846 = vrot.lane.b32.xlu0 %v646, 4
        %v847 = vpop.permute.xlu0 %846
        %848 = vrot.lane.b32.xlu0 %v649, 4
        %v849 = vpop.permute.xlu0 %848
        %850 = vrot.lane.b32.xlu0 %v651, 4
        %v851 = vpop.permute.xlu0 %850
        %852 = vrot.lane.b32.xlu0 %v654, 4
        %v853 = vpop.permute.xlu0 %852
        %854 = vrot.lane.b32.xlu0 %v656, 4
        %v855 = vpop.permute.xlu0 %854
        %856 = vrot.lane.b32.xlu0 %v659, 4
        %v857 = vpop.permute.xlu0 %856
        %858 = vrot.lane.b32.xlu0 %v661, 4
        %v859 = vpop.permute.xlu0 %858
        %860 = vrot.lane.b32.xlu0 %v664, 4
        %v861 = vpop.permute.xlu0 %860
        %862 = vrot.lane.b32.xlu0 %v666, 4
        %v863 = vpop.permute.xlu0 %862
        %896 = vrot.lane.b32.xlu0 %v670, 8
        %v897 = vpop.permute.xlu0 %896
        %898 = vrot.lane.b32.xlu0 %v672, 8
        %v899 = vpop.permute.xlu0 %898
        %900 = vrot.lane.b32.xlu0 %v675, 8
        %v901 = vpop.permute.xlu0 %900
        %902 = vrot.lane.b32.xlu0 %v677, 8
        %v903 = vpop.permute.xlu0 %902
        %904 = vrot.lane.b32.xlu0 %v680, 8
        %v905 = vpop.permute.xlu0 %904
        %906 = vrot.lane.b32.xlu0 %v682, 8
        %v907 = vpop.permute.xlu0 %906
        %908 = vrot.lane.b32.xlu0 %v685, 8
        %v909 = vpop.permute.xlu0 %908
        %910 = vrot.lane.b32.xlu0 %v687, 8
        %v911 = vpop.permute.xlu0 %910
        %912 = vrot.lane.b32.xlu0 %v690, 8
        %v913 = vpop.permute.xlu0 %912
        %914 = vrot.lane.b32.xlu0 %v692, 8
        %v915 = vpop.permute.xlu0 %914
        %916 = vrot.lane.b32.xlu0 %v695, 8
        %v917 = vpop.permute.xlu0 %916
        %918 = vrot.lane.b32.xlu0 %v697, 8
        %v919 = vpop.permute.xlu0 %918
        %920 = vrot.lane.b32.xlu0 %v700, 8
        %v921 = vpop.permute.xlu0 %920
        %922 = vrot.lane.b32.xlu0 %v702, 8
        %v923 = vpop.permute.xlu0 %922
        %924 = vrot.lane.b32.xlu0 %v705, 8
        %v925 = vpop.permute.xlu0 %924
        %926 = vrot.lane.b32.xlu0 %v707, 8
        %v927 = vpop.permute.xlu0 %926
        %928 = vrot.lane.b32.xlu0 %v710, 8
        %v929 = vpop.permute.xlu0 %928
        %930 = vrot.lane.b32.xlu0 %v712, 8
        %v931 = vpop.permute.xlu0 %930
        %932 = vrot.lane.b32.xlu0 %v715, 8
        %v933 = vpop.permute.xlu0 %932
        %934 = vrot.lane.b32.xlu0 %v717, 8
        %v935 = vpop.permute.xlu0 %934
        %936 = vrot.lane.b32.xlu0 %v720, 8
        %v937 = vpop.permute.xlu0 %936
        %938 = vrot.lane.b32.xlu0 %v722, 8
        %v939 = vpop.permute.xlu0 %938
        %940 = vrot.lane.b32.xlu0 %v725, 8
        %v941 = vpop.permute.xlu0 %940
        %942 = vrot.lane.b32.xlu0 %v727, 8
        %v943 = vpop.permute.xlu0 %942
        %944 = vrot.lane.b32.xlu0 %v730, 8
        %v945 = vpop.permute.xlu0 %944
        %946 = vrot.lane.b32.xlu0 %v732, 8
        %v947 = vpop.permute.xlu0 %946
        %948 = vrot.lane.b32.xlu0 %v735, 8
        %v949 = vpop.permute.xlu0 %948
        %950 = vrot.lane.b32.xlu0 %v737, 8
        %v951 = vpop.permute.xlu0 %950
        %952 = vrot.lane.b32.xlu0 %v740, 8
        %v953 = vpop.permute.xlu0 %952
        %954 = vrot.lane.b32.xlu0 %v742, 8
        %v955 = vpop.permute.xlu0 %954
        %956 = vrot.lane.b32.xlu0 %v745, 8
        %v957 = vpop.permute.xlu0 %956
        %958 = vrot.lane.b32.xlu0 %v747, 8
        %v959 = vpop.permute.xlu0 %958
        %992 = vrot.lane.b32.xlu0 %v484, 12
        %v993 = vpop.permute.xlu0 %992
        %994 = vrot.lane.b32.xlu0 %v485, 12
        %v995 = vpop.permute.xlu0 %994
        %996 = vrot.lane.b32.xlu0 %v487, 12
        %v997 = vpop.permute.xlu0 %996
        %998 = vrot.lane.b32.xlu0 %v488, 12
        %v999 = vpop.permute.xlu0 %998
        %1000 = vrot.lane.b32.xlu0 %v490, 12
        %v1001 = vpop.permute.xlu0 %1000
        %1002 = vrot.lane.b32.xlu0 %v491, 12
        %v1003 = vpop.permute.xlu0 %1002
        %1004 = vrot.lane.b32.xlu0 %v493, 12
        %v1005 = vpop.permute.xlu0 %1004
        %1006 = vrot.lane.b32.xlu0 %v494, 12
        %v1007 = vpop.permute.xlu0 %1006
        %1008 = vrot.lane.b32.xlu0 %v496, 12
        %v1009 = vpop.permute.xlu0 %1008
        %1010 = vrot.lane.b32.xlu0 %v497, 12
        %v1011 = vpop.permute.xlu0 %1010
        %1012 = vrot.lane.b32.xlu0 %v499, 12
        %v1013 = vpop.permute.xlu0 %1012
        %1014 = vrot.lane.b32.xlu0 %v500, 12
        %v1015 = vpop.permute.xlu0 %1014
        %1016 = vrot.lane.b32.xlu0 %v502, 12
        %v1017 = vpop.permute.xlu0 %1016
        %1018 = vrot.lane.b32.xlu0 %v503, 12
        %v1019 = vpop.permute.xlu0 %1018
        %1020 = vrot.lane.b32.xlu0 %v505, 12
        %v1021 = vpop.permute.xlu0 %1020
        %1022 = vrot.lane.b32.xlu0 %v506, 12
        %v1023 = vpop.permute.xlu0 %1022
        %1024 = vrot.lane.b32.xlu0 %v508, 12
        %v1025 = vpop.permute.xlu0 %1024
        %1026 = vrot.lane.b32.xlu0 %v509, 12
        %v1027 = vpop.permute.xlu0 %1026
        %1028 = vrot.lane.b32.xlu0 %v511, 12
        %v1029 = vpop.permute.xlu0 %1028
        %1030 = vrot.lane.b32.xlu0 %v512, 12
        %v1031 = vpop.permute.xlu0 %1030
        %1032 = vrot.lane.b32.xlu0 %v514, 12
        %v1033 = vpop.permute.xlu0 %1032
        %1034 = vrot.lane.b32.xlu0 %v515, 12
        %v1035 = vpop.permute.xlu0 %1034
        %1036 = vrot.lane.b32.xlu0 %v517, 12
        %v1037 = vpop.permute.xlu0 %1036
        %1038 = vrot.lane.b32.xlu0 %v518, 12
        %v1039 = vpop.permute.xlu0 %1038
        %1040 = vrot.lane.b32.xlu0 %v520, 12
        %v1041 = vpop.permute.xlu0 %1040
        %1042 = vrot.lane.b32.xlu0 %v521, 12
        %v1043 = vpop.permute.xlu0 %1042
        %1044 = vrot.lane.b32.xlu0 %v523, 12
        %v1045 = vpop.permute.xlu0 %1044
        %1046 = vrot.lane.b32.xlu0 %v524, 12
        %v1047 = vpop.permute.xlu0 %1046
        %1048 = vrot.lane.b32.xlu0 %v526, 12
        %v1049 = vpop.permute.xlu0 %1048
        %1050 = vrot.lane.b32.xlu0 %v527, 12
        %v1051 = vpop.permute.xlu0 %1050
        %1052 = vrot.lane.b32.xlu0 %v529, 12
        %v1053 = vpop.permute.xlu0 %1052
        %1054 = vrot.lane.b32.xlu0 %v530, 12
        %v1055 = vpop.permute.xlu0 %1054
        %1088 = vrot.lane.b32.xlu0 %v599, 16
        %v1089 = vpop.permute.xlu0 %1088
        %1090 = vrot.lane.b32.xlu0 %v601, 16
        %v1091 = vpop.permute.xlu0 %1090
        %1092 = vrot.lane.b32.xlu0 %v604, 16
        %v1093 = vpop.permute.xlu0 %1092
        %1094 = vrot.lane.b32.xlu0 %v606, 16
        %v1095 = vpop.permute.xlu0 %1094
        %1096 = vrot.lane.b32.xlu0 %v609, 16
        %v1097 = vpop.permute.xlu0 %1096
        %1098 = vrot.lane.b32.xlu0 %v611, 16
        %v1099 = vpop.permute.xlu0 %1098
        %1100 = vrot.lane.b32.xlu0 %v614, 16
        %v1101 = vpop.permute.xlu0 %1100
        %1102 = vrot.lane.b32.xlu0 %v616, 16
        %v1103 = vpop.permute.xlu0 %1102
        %1104 = vrot.lane.b32.xlu0 %v619, 16
        %v1105 = vpop.permute.xlu0 %1104
        %1106 = vrot.lane.b32.xlu0 %v621, 16
        %v1107 = vpop.permute.xlu0 %1106
        %1108 = vrot.lane.b32.xlu0 %v624, 16
        %v1109 = vpop.permute.xlu0 %1108
        %1110 = vrot.lane.b32.xlu0 %v626, 16
        %v1111 = vpop.permute.xlu0 %1110
        %1112 = vrot.lane.b32.xlu0 %v629, 16
        %v1113 = vpop.permute.xlu0 %1112
        %1114 = vrot.lane.b32.xlu0 %v631, 16
        %v1115 = vpop.permute.xlu0 %1114
        %1116 = vrot.lane.b32.xlu0 %v634, 16
        %v1117 = vpop.permute.xlu0 %1116
        %1118 = vrot.lane.b32.xlu0 %v636, 16
        %v1119 = vpop.permute.xlu0 %1118
        %1120 = vrot.lane.b32.xlu0 %v639, 16
        %v1121 = vpop.permute.xlu0 %1120
        %1122 = vrot.lane.b32.xlu0 %v641, 16
        %v1123 = vpop.permute.xlu0 %1122
        %1124 = vrot.lane.b32.xlu0 %v644, 16
        %v1125 = vpop.permute.xlu0 %1124
        %1126 = vrot.lane.b32.xlu0 %v646, 16
        %v1127 = vpop.permute.xlu0 %1126
        %1128 = vrot.lane.b32.xlu0 %v649, 16
        %v1129 = vpop.permute.xlu0 %1128
        %1130 = vrot.lane.b32.xlu0 %v651, 16
        %v1131 = vpop.permute.xlu0 %1130
        %1132 = vrot.lane.b32.xlu0 %v654, 16
        %v1133 = vpop.permute.xlu0 %1132
        %1134 = vrot.lane.b32.xlu0 %v656, 16
        %v1135 = vpop.permute.xlu0 %1134
        %1136 = vrot.lane.b32.xlu0 %v659, 16
        %v1137 = vpop.permute.xlu0 %1136
        %1138 = vrot.lane.b32.xlu0 %v661, 16
        %v1139 = vpop.permute.xlu0 %1138
        %1140 = vrot.lane.b32.xlu0 %v664, 16
        %v1141 = vpop.permute.xlu0 %1140
        %1142 = vrot.lane.b32.xlu0 %v666, 16
        %v1143 = vpop.permute.xlu0 %1142
        %1144 = vrot.lane.b32.xlu0 %v756, 16
        %v1145 = vpop.permute.xlu0 %1144
        %1146 = vrot.lane.b32.xlu0 %v758, 16
        %v1147 = vpop.permute.xlu0 %1146
        %1148 = vrot.lane.b32.xlu0 %v761, 16
        %v1149 = vpop.permute.xlu0 %1148
        %1150 = vrot.lane.b32.xlu0 %v763, 16
        %v1151 = vpop.permute.xlu0 %1150
        %1184 = vrot.lane.b32.xlu0 %v680, 20
        %v1185 = vpop.permute.xlu0 %1184
        %1186 = vrot.lane.b32.xlu0 %v682, 20
        %v1187 = vpop.permute.xlu0 %1186
        %1188 = vrot.lane.b32.xlu0 %v685, 20
        %v1189 = vpop.permute.xlu0 %1188
        %1190 = vrot.lane.b32.xlu0 %v687, 20
        %v1191 = vpop.permute.xlu0 %1190
        %1192 = vrot.lane.b32.xlu0 %v690, 20
        %v1193 = vpop.permute.xlu0 %1192
        %1194 = vrot.lane.b32.xlu0 %v692, 20
        %v1195 = vpop.permute.xlu0 %1194
        %1196 = vrot.lane.b32.xlu0 %v695, 20
        %v1197 = vpop.permute.xlu0 %1196
        %1198 = vrot.lane.b32.xlu0 %v697, 20
        %v1199 = vpop.permute.xlu0 %1198
        %1200 = vrot.lane.b32.xlu0 %v700, 20
        %v1201 = vpop.permute.xlu0 %1200
        %1202 = vrot.lane.b32.xlu0 %v702, 20
        %v1203 = vpop.permute.xlu0 %1202
        %1204 = vrot.lane.b32.xlu0 %v705, 20
        %v1205 = vpop.permute.xlu0 %1204
        %1206 = vrot.lane.b32.xlu0 %v707, 20
        %v1207 = vpop.permute.xlu0 %1206
        %1208 = vrot.lane.b32.xlu0 %v710, 20
        %v1209 = vpop.permute.xlu0 %1208
        %1210 = vrot.lane.b32.xlu0 %v712, 20
        %v1211 = vpop.permute.xlu0 %1210
        %1212 = vrot.lane.b32.xlu0 %v715, 20
        %v1213 = vpop.permute.xlu0 %1212
        %1214 = vrot.lane.b32.xlu0 %v717, 20
        %v1215 = vpop.permute.xlu0 %1214
        %1216 = vrot.lane.b32.xlu0 %v720, 20
        %v1217 = vpop.permute.xlu0 %1216
        %1218 = vrot.lane.b32.xlu0 %v722, 20
        %v1219 = vpop.permute.xlu0 %1218
        %1220 = vrot.lane.b32.xlu0 %v725, 20
        %v1221 = vpop.permute.xlu0 %1220
        %1222 = vrot.lane.b32.xlu0 %v727, 20
        %v1223 = vpop.permute.xlu0 %1222
        %1224 = vrot.lane.b32.xlu0 %v730, 20
        %v1225 = vpop.permute.xlu0 %1224
        %1226 = vrot.lane.b32.xlu0 %v732, 20
        %v1227 = vpop.permute.xlu0 %1226
        %1228 = vrot.lane.b32.xlu0 %v735, 20
        %v1229 = vpop.permute.xlu0 %1228
        %1230 = vrot.lane.b32.xlu0 %v737, 20
        %v1231 = vpop.permute.xlu0 %1230
        %1232 = vrot.lane.b32.xlu0 %v740, 20
        %v1233 = vpop.permute.xlu0 %1232
        %1234 = vrot.lane.b32.xlu0 %v742, 20
        %v1235 = vpop.permute.xlu0 %1234
        %1236 = vrot.lane.b32.xlu0 %v745, 20
        %v1237 = vpop.permute.xlu0 %1236
        %1238 = vrot.lane.b32.xlu0 %v747, 20
        %v1239 = vpop.permute.xlu0 %1238
        %1240 = vrot.lane.b32.xlu0 %v766, 20
        %v1241 = vpop.permute.xlu0 %1240
        %1242 = vrot.lane.b32.xlu0 %v768, 20
        %v1243 = vpop.permute.xlu0 %1242
        %1244 = vrot.lane.b32.xlu0 %v771, 20
        %v1245 = vpop.permute.xlu0 %1244
        %1246 = vrot.lane.b32.xlu0 %v773, 20
        %v1247 = vpop.permute.xlu0 %1246
        %1280 = vrot.lane.b32.xlu0 %v490, 24
        %v1281 = vpop.permute.xlu0 %1280
        %1282 = vrot.lane.b32.xlu0 %v491, 24
        %v1283 = vpop.permute.xlu0 %1282
        %1284 = vrot.lane.b32.xlu0 %v493, 24
        %v1285 = vpop.permute.xlu0 %1284
        %1286 = vrot.lane.b32.xlu0 %v494, 24
        %v1287 = vpop.permute.xlu0 %1286
        %1288 = vrot.lane.b32.xlu0 %v496, 24
        %v1289 = vpop.permute.xlu0 %1288
        %1290 = vrot.lane.b32.xlu0 %v497, 24
        %v1291 = vpop.permute.xlu0 %1290
        %1292 = vrot.lane.b32.xlu0 %v499, 24
        %v1293 = vpop.permute.xlu0 %1292
        %1294 = vrot.lane.b32.xlu0 %v500, 24
        %v1295 = vpop.permute.xlu0 %1294
        %1296 = vrot.lane.b32.xlu0 %v502, 24
        %v1297 = vpop.permute.xlu0 %1296
        %1298 = vrot.lane.b32.xlu0 %v503, 24
        %v1299 = vpop.permute.xlu0 %1298
        %1300 = vrot.lane.b32.xlu0 %v505, 24
        %v1301 = vpop.permute.xlu0 %1300
        %1302 = vrot.lane.b32.xlu0 %v506, 24
        %v1303 = vpop.permute.xlu0 %1302
        %1304 = vrot.lane.b32.xlu0 %v508, 24
        %v1305 = vpop.permute.xlu0 %1304
        %1306 = vrot.lane.b32.xlu0 %v509, 24
        %v1307 = vpop.permute.xlu0 %1306
        %1308 = vrot.lane.b32.xlu0 %v511, 24
        %v1309 = vpop.permute.xlu0 %1308
        %1310 = vrot.lane.b32.xlu0 %v512, 24
        %v1311 = vpop.permute.xlu0 %1310
        %1312 = vrot.lane.b32.xlu0 %v514, 24
        %v1313 = vpop.permute.xlu0 %1312
        %1314 = vrot.lane.b32.xlu0 %v515, 24
        %v1315 = vpop.permute.xlu0 %1314
        %1316 = vrot.lane.b32.xlu0 %v517, 24
        %v1317 = vpop.permute.xlu0 %1316
        %1318 = vrot.lane.b32.xlu0 %v518, 24
        %v1319 = vpop.permute.xlu0 %1318
        %1320 = vrot.lane.b32.xlu0 %v520, 24
        %v1321 = vpop.permute.xlu0 %1320
        %1322 = vrot.lane.b32.xlu0 %v521, 24
        %v1323 = vpop.permute.xlu0 %1322
        %1324 = vrot.lane.b32.xlu0 %v523, 24
        %v1325 = vpop.permute.xlu0 %1324
        %1326 = vrot.lane.b32.xlu0 %v524, 24
        %v1327 = vpop.permute.xlu0 %1326
        %1328 = vrot.lane.b32.xlu0 %v526, 24
        %v1329 = vpop.permute.xlu0 %1328
        %1330 = vrot.lane.b32.xlu0 %v527, 24
        %v1331 = vpop.permute.xlu0 %1330
        %1332 = vrot.lane.b32.xlu0 %v529, 24
        %v1333 = vpop.permute.xlu0 %1332
        %1334 = vrot.lane.b32.xlu0 %v530, 24
        %v1335 = vpop.permute.xlu0 %1334
        %1336 = vrot.lane.b32.xlu0 %v532, 24
        %v1337 = vpop.permute.xlu0 %1336
        %1338 = vrot.lane.b32.xlu0 %v533, 24
        %v1339 = vpop.permute.xlu0 %1338
        %1340 = vrot.lane.b32.xlu0 %v535, 24
        %v1341 = vpop.permute.xlu0 %1340
        %1342 = vrot.lane.b32.xlu0 %v536, 24
        %v1343 = vpop.permute.xlu0 %1342
        %1376 = vrot.lane.b32.xlu0 %v609, 28
        %v1377 = vpop.permute.xlu0 %1376
        %1378 = vrot.lane.b32.xlu0 %v611, 28
        %v1379 = vpop.permute.xlu0 %1378
        %1380 = vrot.lane.b32.xlu0 %v614, 28
        %v1381 = vpop.permute.xlu0 %1380
        %1382 = vrot.lane.b32.xlu0 %v616, 28
        %v1383 = vpop.permute.xlu0 %1382
        %1384 = vrot.lane.b32.xlu0 %v619, 28
        %v1385 = vpop.permute.xlu0 %1384
        %1386 = vrot.lane.b32.xlu0 %v621, 28
        %v1387 = vpop.permute.xlu0 %1386
        %1388 = vrot.lane.b32.xlu0 %v624, 28
        %v1389 = vpop.permute.xlu0 %1388
        %1390 = vrot.lane.b32.xlu0 %v626, 28
        %v1391 = vpop.permute.xlu0 %1390
        %1392 = vrot.lane.b32.xlu0 %v629, 28
        %v1393 = vpop.permute.xlu0 %1392
        %1394 = vrot.lane.b32.xlu0 %v631, 28
        %v1395 = vpop.permute.xlu0 %1394
        %1396 = vrot.lane.b32.xlu0 %v634, 28
        %v1397 = vpop.permute.xlu0 %1396
        %1398 = vrot.lane.b32.xlu0 %v636, 28
        %v1399 = vpop.permute.xlu0 %1398
        %1400 = vrot.lane.b32.xlu0 %v639, 28
        %v1401 = vpop.permute.xlu0 %1400
        %1402 = vrot.lane.b32.xlu0 %v641, 28
        %v1403 = vpop.permute.xlu0 %1402
        %1404 = vrot.lane.b32.xlu0 %v644, 28
        %v1405 = vpop.permute.xlu0 %1404
        %1406 = vrot.lane.b32.xlu0 %v646, 28
        %v1407 = vpop.permute.xlu0 %1406
        %1408 = vrot.lane.b32.xlu0 %v649, 28
        %v1409 = vpop.permute.xlu0 %1408
        %1410 = vrot.lane.b32.xlu0 %v651, 28
        %v1411 = vpop.permute.xlu0 %1410
        %1412 = vrot.lane.b32.xlu0 %v654, 28
        %v1413 = vpop.permute.xlu0 %1412
        %1414 = vrot.lane.b32.xlu0 %v656, 28
        %v1415 = vpop.permute.xlu0 %1414
        %1416 = vrot.lane.b32.xlu0 %v659, 28
        %v1417 = vpop.permute.xlu0 %1416
        %1418 = vrot.lane.b32.xlu0 %v661, 28
        %v1419 = vpop.permute.xlu0 %1418
        %1420 = vrot.lane.b32.xlu0 %v664, 28
        %v1421 = vpop.permute.xlu0 %1420
        %1422 = vrot.lane.b32.xlu0 %v666, 28
        %v1423 = vpop.permute.xlu0 %1422
        %1424 = vrot.lane.b32.xlu0 %v756, 28
        %v1425 = vpop.permute.xlu0 %1424
        %1426 = vrot.lane.b32.xlu0 %v758, 28
        %v1427 = vpop.permute.xlu0 %1426
        %1428 = vrot.lane.b32.xlu0 %v761, 28
        %v1429 = vpop.permute.xlu0 %1428
        %1430 = vrot.lane.b32.xlu0 %v763, 28
        %v1431 = vpop.permute.xlu0 %1430
        %1432 = vrot.lane.b32.xlu0 %v782, 28
        %v1433 = vpop.permute.xlu0 %1432
        %1434 = vrot.lane.b32.xlu0 %v784, 28
        %v1435 = vpop.permute.xlu0 %1434
        %1436 = vrot.lane.b32.xlu0 %v787, 28
        %v1437 = vpop.permute.xlu0 %1436
        %1438 = vrot.lane.b32.xlu0 %v789, 28
        %v1439 = vpop.permute.xlu0 %1438
        %1472 = vrot.lane.b32.xlu0 %v690, 32
        %v1473 = vpop.permute.xlu0 %1472
        %1474 = vrot.lane.b32.xlu0 %v692, 32
        %v1475 = vpop.permute.xlu0 %1474
        %1476 = vrot.lane.b32.xlu0 %v695, 32
        %v1477 = vpop.permute.xlu0 %1476
        %1478 = vrot.lane.b32.xlu0 %v697, 32
        %v1479 = vpop.permute.xlu0 %1478
        %1480 = vrot.lane.b32.xlu0 %v700, 32
        %v1481 = vpop.permute.xlu0 %1480
        %1482 = vrot.lane.b32.xlu0 %v702, 32
        %v1483 = vpop.permute.xlu0 %1482
        %1484 = vrot.lane.b32.xlu0 %v705, 32
        %v1485 = vpop.permute.xlu0 %1484
        %1486 = vrot.lane.b32.xlu0 %v707, 32
        %v1487 = vpop.permute.xlu0 %1486
        %1488 = vrot.lane.b32.xlu0 %v710, 32
        %v1489 = vpop.permute.xlu0 %1488
        %1490 = vrot.lane.b32.xlu0 %v712, 32
        %v1491 = vpop.permute.xlu0 %1490
        %1492 = vrot.lane.b32.xlu0 %v715, 32
        %v1493 = vpop.permute.xlu0 %1492
        %1494 = vrot.lane.b32.xlu0 %v717, 32
        %v1495 = vpop.permute.xlu0 %1494
        %1496 = vrot.lane.b32.xlu0 %v720, 32
        %v1497 = vpop.permute.xlu0 %1496
        %1498 = vrot.lane.b32.xlu0 %v722, 32
        %v1499 = vpop.permute.xlu0 %1498
        %1500 = vrot.lane.b32.xlu0 %v725, 32
        %v1501 = vpop.permute.xlu0 %1500
        %1502 = vrot.lane.b32.xlu0 %v727, 32
        %v1503 = vpop.permute.xlu0 %1502
        %1504 = vrot.lane.b32.xlu0 %v730, 32
        %v1505 = vpop.permute.xlu0 %1504
        %1506 = vrot.lane.b32.xlu0 %v732, 32
        %v1507 = vpop.permute.xlu0 %1506
        %1508 = vrot.lane.b32.xlu0 %v735, 32
        %v1509 = vpop.permute.xlu0 %1508
        %1510 = vrot.lane.b32.xlu0 %v737, 32
        %v1511 = vpop.permute.xlu0 %1510
        %1512 = vrot.lane.b32.xlu0 %v740, 32
        %v1513 = vpop.permute.xlu0 %1512
        %1514 = vrot.lane.b32.xlu0 %v742, 32
        %v1515 = vpop.permute.xlu0 %1514
        %1516 = vrot.lane.b32.xlu0 %v745, 32
        %v1517 = vpop.permute.xlu0 %1516
        %1518 = vrot.lane.b32.xlu0 %v747, 32
        %v1519 = vpop.permute.xlu0 %1518
        %1520 = vrot.lane.b32.xlu0 %v766, 32
        %v1521 = vpop.permute.xlu0 %1520
        %1522 = vrot.lane.b32.xlu0 %v768, 32
        %v1523 = vpop.permute.xlu0 %1522
        %1524 = vrot.lane.b32.xlu0 %v771, 32
        %v1525 = vpop.permute.xlu0 %1524
        %1526 = vrot.lane.b32.xlu0 %v773, 32
        %v1527 = vpop.permute.xlu0 %1526
        %1528 = vrot.lane.b32.xlu0 %v792, 32
        %v1529 = vpop.permute.xlu0 %1528
        %1530 = vrot.lane.b32.xlu0 %v794, 32
        %v1531 = vpop.permute.xlu0 %1530
        %1532 = vrot.lane.b32.xlu0 %v797, 32
        %v1533 = vpop.permute.xlu0 %1532
        %1534 = vrot.lane.b32.xlu0 %v799, 32
        %v1535 = vpop.permute.xlu0 %1534
        %v1568 = vsel %vm445, %v478, %v801
        %v1569 = vsel %vm445, %v479, %v803
        %v1570 = vsel %vm445, %v481, %v805
        %v1571 = vsel %vm445, %v482, %v807
        %v1572 = vsel %vm445, %v484, %v809
        %v1573 = vsel %vm445, %v485, %v811
        %v1574 = vsel %vm445, %v487, %v813
        %v1575 = vsel %vm445, %v488, %v815
        %v1576 = vsel %vm445, %v490, %v817
        %v1577 = vsel %vm445, %v491, %v819
        %v1578 = vsel %vm445, %v493, %v821
        %v1579 = vsel %vm445, %v494, %v823
        %v1580 = vsel %vm445, %v496, %v825
        %v1581 = vsel %vm445, %v497, %v827
        %v1582 = vsel %vm445, %v499, %v829
        %v1583 = vsel %vm445, %v500, %v831
        %v1584 = vsel %vm445, %v502, %v833
        %v1585 = vsel %vm445, %v503, %v835
        %v1586 = vsel %vm445, %v505, %v837
        %v1587 = vsel %vm445, %v506, %v839
        %v1588 = vsel %vm445, %v508, %v841
        %v1589 = vsel %vm445, %v509, %v843
        %v1590 = vsel %vm445, %v511, %v845
        %v1591 = vsel %vm445, %v512, %v847
        %v1592 = vsel %vm445, %v514, %v849
        %v1593 = vsel %vm445, %v515, %v851
        %v1594 = vsel %vm445, %v517, %v853
        %v1595 = vsel %vm445, %v518, %v855
        %v1596 = vsel %vm445, %v520, %v857
        %v1597 = vsel %vm445, %v521, %v859
        %v1598 = vsel %vm445, %v523, %v861
        %v1599 = vsel %vm445, %v524, %v863
        %vm1600 = vcmask 64512
        %v1601 = vsel %vm1600, %v1568, %v897
        %v1602 = vsel %vm1600, %v1569, %v899
        %v1603 = vsel %vm1600, %v1570, %v901
        %v1604 = vsel %vm1600, %v1571, %v903
        %v1605 = vsel %vm1600, %v1572, %v905
        %v1606 = vsel %vm1600, %v1573, %v907
        %v1607 = vsel %vm1600, %v1574, %v909
        %v1608 = vsel %vm1600, %v1575, %v911
        %v1609 = vsel %vm1600, %v1576, %v913
        %v1610 = vsel %vm1600, %v1577, %v915
        %v1611 = vsel %vm1600, %v1578, %v917
        %v1612 = vsel %vm1600, %v1579, %v919
        %v1613 = vsel %vm1600, %v1580, %v921
        %v1614 = vsel %vm1600, %v1581, %v923
        %v1615 = vsel %vm1600, %v1582, %v925
        %v1616 = vsel %vm1600, %v1583, %v927
        %v1617 = vsel %vm1600, %v1584, %v929
        %v1618 = vsel %vm1600, %v1585, %v931
        %v1619 = vsel %vm1600, %v1586, %v933
        %v1620 = vsel %vm1600, %v1587, %v935
        %v1621 = vsel %vm1600, %v1588, %v937
        %v1622 = vsel %vm1600, %v1589, %v939
        %v1623 = vsel %vm1600, %v1590, %v941
        %v1624 = vsel %vm1600, %v1591, %v943
        %v1625 = vsel %vm1600, %v1592, %v945
        %v1626 = vsel %vm1600, %v1593, %v947
        %v1627 = vsel %vm1600, %v1594, %v949
        %v1628 = vsel %vm1600, %v1595, %v951
        %v1629 = vsel %vm1600, %v1596, %v953
        %v1630 = vsel %vm1600, %v1597, %v955
        %v1631 = vsel %vm1600, %v1598, %v957
        %v1632 = vsel %vm1600, %v1599, %v959
        %vm1633 = vcmask 97280
        %v1634 = vsel %vm1633, %v1601, %v993
        %v1635 = vsel %vm1633, %v1602, %v995
        %v1636 = vsel %vm1633, %v1603, %v997
        %v1637 = vsel %vm1633, %v1604, %v999
        %v1638 = vsel %vm1633, %v1605, %v1001
        %v1639 = vsel %vm1633, %v1606, %v1003
        %v1640 = vsel %vm1633, %v1607, %v1005
        %v1641 = vsel %vm1633, %v1608, %v1007
        %v1642 = vsel %vm1633, %v1609, %v1009
        %v1643 = vsel %vm1633, %v1610, %v1011
        %v1644 = vsel %vm1633, %v1611, %v1013
        %v1645 = vsel %vm1633, %v1612, %v1015
        %v1646 = vsel %vm1633, %v1613, %v1017
        %v1647 = vsel %vm1633, %v1614, %v1019
        %v1648 = vsel %vm1633, %v1615, %v1021
        %v1649 = vsel %vm1633, %v1616, %v1023
        %v1650 = vsel %vm1633, %v1617, %v1025
        %v1651 = vsel %vm1633, %v1618, %v1027
        %v1652 = vsel %vm1633, %v1619, %v1029
        %v1653 = vsel %vm1633, %v1620, %v1031
        %v1654 = vsel %vm1633, %v1621, %v1033
        %v1655 = vsel %vm1633, %v1622, %v1035
        %v1656 = vsel %vm1633, %v1623, %v1037
        %v1657 = vsel %vm1633, %v1624, %v1039
        %v1658 = vsel %vm1633, %v1625, %v1041
        %v1659 = vsel %vm1633, %v1626, %v1043
        %v1660 = vsel %vm1633, %v1627, %v1045
        %v1661 = vsel %vm1633, %v1628, %v1047
        %v1662 = vsel %vm1633, %v1629, %v1049
        %v1663 = vsel %vm1633, %v1630, %v1051
        %v1664 = vsel %vm1633, %v1631, %v1053
        %v1665 = vsel %vm1633, %v1632, %v1055
        %vm1666 = vcmask 130048
        %v1667 = vsel %vm1666, %v1634, %v1089
        %v1668 = vsel %vm1666, %v1635, %v1091
        %v1669 = vsel %vm1666, %v1636, %v1093
        %v1670 = vsel %vm1666, %v1637, %v1095
        %v1671 = vsel %vm1666, %v1638, %v1097
        %v1672 = vsel %vm1666, %v1639, %v1099
        %v1673 = vsel %vm1666, %v1640, %v1101
        %v1674 = vsel %vm1666, %v1641, %v1103
        %v1675 = vsel %vm1666, %v1642, %v1105
        %v1676 = vsel %vm1666, %v1643, %v1107
        %v1677 = vsel %vm1666, %v1644, %v1109
        %v1678 = vsel %vm1666, %v1645, %v1111
        %v1679 = vsel %vm1666, %v1646, %v1113
        %v1680 = vsel %vm1666, %v1647, %v1115
        %v1681 = vsel %vm1666, %v1648, %v1117
        %v1682 = vsel %vm1666, %v1649, %v1119
        %v1683 = vsel %vm1666, %v1650, %v1121
        %v1684 = vsel %vm1666, %v1651, %v1123
        %v1685 = vsel %vm1666, %v1652, %v1125
        %v1686 = vsel %vm1666, %v1653, %v1127
        %v1687 = vsel %vm1666, %v1654, %v1129
        %v1688 = vsel %vm1666, %v1655, %v1131
        %v1689 = vsel %vm1666, %v1656, %v1133
        %v1690 = vsel %vm1666, %v1657, %v1135
        %v1691 = vsel %vm1666, %v1658, %v1137
        %v1692 = vsel %vm1666, %v1659, %v1139
        %v1693 = vsel %vm1666, %v1660, %v1141
        %v1694 = vsel %vm1666, %v1661, %v1143
        %v1695 = vsel %vm1666, %v1662, %v1145
        %v1696 = vsel %vm1666, %v1663, %v1147
        %v1697 = vsel %vm1666, %v1664, %v1149
        %v1698 = vsel %vm1666, %v1665, %v1151
        %vm1699 = vcmask 162816
        %v1700 = vsel %vm1699, %v1667, %v1185
        %v1701 = vsel %vm1699, %v1668, %v1187
        %v1702 = vsel %vm1699, %v1669, %v1189
        %v1703 = vsel %vm1699, %v1670, %v1191
        %v1704 = vsel %vm1699, %v1671, %v1193
        %v1705 = vsel %vm1699, %v1672, %v1195
        %v1706 = vsel %vm1699, %v1673, %v1197
        %v1707 = vsel %vm1699, %v1674, %v1199
        %v1708 = vsel %vm1699, %v1675, %v1201
        %v1709 = vsel %vm1699, %v1676, %v1203
        %v1710 = vsel %vm1699, %v1677, %v1205
        %v1711 = vsel %vm1699, %v1678, %v1207
        %v1712 = vsel %vm1699, %v1679, %v1209
        %v1713 = vsel %vm1699, %v1680, %v1211
        %v1714 = vsel %vm1699, %v1681, %v1213
        %v1715 = vsel %vm1699, %v1682, %v1215
        %v1716 = vsel %vm1699, %v1683, %v1217
        %v1717 = vsel %vm1699, %v1684, %v1219
        %v1718 = vsel %vm1699, %v1685, %v1221
        %v1719 = vsel %vm1699, %v1686, %v1223
        %v1720 = vsel %vm1699, %v1687, %v1225
        %v1721 = vsel %vm1699, %v1688, %v1227
        %v1722 = vsel %vm1699, %v1689, %v1229
        %v1723 = vsel %vm1699, %v1690, %v1231
        %v1724 = vsel %vm1699, %v1691, %v1233
        %v1725 = vsel %vm1699, %v1692, %v1235
        %v1726 = vsel %vm1699, %v1693, %v1237
        %v1727 = vsel %vm1699, %v1694, %v1239
        %v1728 = vsel %vm1699, %v1695, %v1241
        %v1729 = vsel %vm1699, %v1696, %v1243
        %v1730 = vsel %vm1699, %v1697, %v1245
        %v1731 = vsel %vm1699, %v1698, %v1247
        %vm1732 = vcmask 195584
        %v1733 = vsel %vm1732, %v1700, %v1281
        %v1734 = vsel %vm1732, %v1701, %v1283
        %v1735 = vsel %vm1732, %v1702, %v1285
        %v1736 = vsel %vm1732, %v1703, %v1287
        %v1737 = vsel %vm1732, %v1704, %v1289
        %v1738 = vsel %vm1732, %v1705, %v1291
        %v1739 = vsel %vm1732, %v1706, %v1293
        %v1740 = vsel %vm1732, %v1707, %v1295
        %v1741 = vsel %vm1732, %v1708, %v1297
        %v1742 = vsel %vm1732, %v1709, %v1299
        %v1743 = vsel %vm1732, %v1710, %v1301
        %v1744 = vsel %vm1732, %v1711, %v1303
        %v1745 = vsel %vm1732, %v1712, %v1305
        %v1746 = vsel %vm1732, %v1713, %v1307
        %v1747 = vsel %vm1732, %v1714, %v1309
        %v1748 = vsel %vm1732, %v1715, %v1311
        %v1749 = vsel %vm1732, %v1716, %v1313
        %v1750 = vsel %vm1732, %v1717, %v1315
        %v1751 = vsel %vm1732, %v1718, %v1317
        %v1752 = vsel %vm1732, %v1719, %v1319
        %v1753 = vsel %vm1732, %v1720, %v1321
        %v1754 = vsel %vm1732, %v1721, %v1323
        %v1755 = vsel %vm1732, %v1722, %v1325
        %v1756 = vsel %vm1732, %v1723, %v1327
        %v1757 = vsel %vm1732, %v1724, %v1329
        %v1758 = vsel %vm1732, %v1725, %v1331
        %v1759 = vsel %vm1732, %v1726, %v1333
        %v1760 = vsel %vm1732, %v1727, %v1335
        %v1761 = vsel %vm1732, %v1728, %v1337
        %v1762 = vsel %vm1732, %v1729, %v1339
        %v1763 = vsel %vm1732, %v1730, %v1341
        %v1764 = vsel %vm1732, %v1731, %v1343
        %vm1765 = vcmask 228352
        %v1766 = vsel %vm1765, %v1733, %v1377
        %v1767 = vsel %vm1765, %v1734, %v1379
        %v1768 = vsel %vm1765, %v1735, %v1381
        %v1769 = vsel %vm1765, %v1736, %v1383
        %v1770 = vsel %vm1765, %v1737, %v1385
        %v1771 = vsel %vm1765, %v1738, %v1387
        %v1772 = vsel %vm1765, %v1739, %v1389
        %v1773 = vsel %vm1765, %v1740, %v1391
        %v1774 = vsel %vm1765, %v1741, %v1393
        %v1775 = vsel %vm1765, %v1742, %v1395
        %v1776 = vsel %vm1765, %v1743, %v1397
        %v1777 = vsel %vm1765, %v1744, %v1399
        %v1778 = vsel %vm1765, %v1745, %v1401
        %v1779 = vsel %vm1765, %v1746, %v1403
        %v1780 = vsel %vm1765, %v1747, %v1405
        %v1781 = vsel %vm1765, %v1748, %v1407
        %v1782 = vsel %vm1765, %v1749, %v1409
        %v1783 = vsel %vm1765, %v1750, %v1411
        %v1784 = vsel %vm1765, %v1751, %v1413
        %v1785 = vsel %vm1765, %v1752, %v1415
        %v1786 = vsel %vm1765, %v1753, %v1417
        %v1787 = vsel %vm1765, %v1754, %v1419
        %v1788 = vsel %vm1765, %v1755, %v1421
        %v1789 = vsel %vm1765, %v1756, %v1423
        %v1790 = vsel %vm1765, %v1757, %v1425
        %v1791 = vsel %vm1765, %v1758, %v1427
        %v1792 = vsel %vm1765, %v1759, %v1429
        %v1793 = vsel %vm1765, %v1760, %v1431
        %v1794 = vsel %vm1765, %v1761, %v1433
        %v1795 = vsel %vm1765, %v1762, %v1435
        %v1796 = vsel %vm1765, %v1763, %v1437
        %v1797 = vsel %vm1765, %v1764, %v1439
        %vm1798 = vcmask 261120
        %v1799 = vsel %vm1798, %v1766, %v1473
        %v1800 = vsel %vm1798, %v1767, %v1475
        %v1801 = vsel %vm1798, %v1768, %v1477
        %v1802 = vsel %vm1798, %v1769, %v1479
        %v1803 = vsel %vm1798, %v1770, %v1481
        %v1804 = vsel %vm1798, %v1771, %v1483
        %v1805 = vsel %vm1798, %v1772, %v1485
        %v1806 = vsel %vm1798, %v1773, %v1487
        %v1807 = vsel %vm1798, %v1774, %v1489
        %v1808 = vsel %vm1798, %v1775, %v1491
        %v1809 = vsel %vm1798, %v1776, %v1493
        %v1810 = vsel %vm1798, %v1777, %v1495
        %v1811 = vsel %vm1798, %v1778, %v1497
        %v1812 = vsel %vm1798, %v1779, %v1499
        %v1813 = vsel %vm1798, %v1780, %v1501
        %v1814 = vsel %vm1798, %v1781, %v1503
        %v1815 = vsel %vm1798, %v1782, %v1505
        %v1816 = vsel %vm1798, %v1783, %v1507
        %v1817 = vsel %vm1798, %v1784, %v1509
        %v1818 = vsel %vm1798, %v1785, %v1511
        %v1819 = vsel %vm1798, %v1786, %v1513
        %v1820 = vsel %vm1798, %v1787, %v1515
        %v1821 = vsel %vm1798, %v1788, %v1517
        %v1822 = vsel %vm1798, %v1789, %v1519
        %v1823 = vsel %vm1798, %v1790, %v1521
        %v1824 = vsel %vm1798, %v1791, %v1523
        %v1825 = vsel %vm1798, %v1792, %v1525
        %v1826 = vsel %vm1798, %v1793, %v1527
        %v1827 = vsel %vm1798, %v1794, %v1529
        %v1828 = vsel %vm1798, %v1795, %v1531
        %v1829 = vsel %vm1798, %v1796, %v1533
        %v1830 = vsel %vm1798, %v1797, %v1535
        %v1831 = vpack.c.bf16 %v1800, %v1799
        %v1832 = vpack.c.bf16 %v1802, %v1801
        %v1833 = vpack.c.bf16 %v1804, %v1803
        %v1834 = vpack.c.bf16 %v1806, %v1805
        %v1835 = vpack.c.bf16 %v1808, %v1807
        %v1836 = vpack.c.bf16 %v1810, %v1809
        %v1837 = vpack.c.bf16 %v1812, %v1811
        %v1838 = vpack.c.bf16 %v1814, %v1813
        %v1839 = vpack.c.bf16 %v1816, %v1815
        %v1840 = vpack.c.bf16 %v1818, %v1817
        %v1841 = vpack.c.bf16 %v1820, %v1819
        %v1842 = vpack.c.bf16 %v1822, %v1821
        %v1843 = vpack.c.bf16 %v1824, %v1823
        %v1844 = vpack.c.bf16 %v1826, %v1825
        %v1845 = vpack.c.bf16 %v1828, %v1827
        %v1846 = vpack.c.bf16 %v1830, %v1829
        %v1847 = vld [vmem:[%s1] sm:$0xf]
        %v1848 = vld [vmem:[%s1 + $0x4] sm:$0xf]
        %v1849 = vld [vmem:[%s1 + $0x8] sm:$0xf]
        %v1850 = vld [vmem:[%s1 + $0xc] sm:$0xf]
        %v1851 = vld [vmem:[%s1 + $0x10] sm:$0x3]
        %v1852 = vld [vmem:[%s3] sm:$0x1]
        %v1854 = vlaneseq
        %v1855 = vshrl.u32 %v1854, 7
        %v1856 = vsub.s32 0, %v1855
        %v1857 = vrot.slane %v1852, %v1856
        %v1864 = vunpack.c.l.b16 %v1847
        %v1865 = vunpack.c.l.b16 %v1848
        %v1866 = vunpack.c.l.b16 %v1849
        %v1867 = vunpack.c.l.b16 %v1850
        %v1868 = vunpack.c.l.b16 %v1851
        %v1869 = vpack.c.b16 %v1865, %v1864
        %v1870 = vpack.c.b16 %v1867, %v1866
        %v1871 = vpack.c.b16 %v1868, %v1868
        %vm1874 = vcmask 293888
        %v1876 = vsel %vm1874, %v1831, 0
        %v1879 = vsel %vm1874, %v1832, 0
        %v1882 = vsel %vm1874, %v1833, 0
        %v1885 = vsel %vm1874, %v1834, 0
        %v1888 = vsel %vm1874, %v1835, 0
        %v1891 = vsel %vm1874, %v1836, 0
        %v1894 = vsel %vm1874, %v1837, 0
        %v1897 = vsel %vm1874, %v1838, 0
        %v1900 = vsel %vm1874, %v1839, 0
        %v1903 = vsel %vm1874, %v1840, 0
        %v1906 = vsel %vm1874, %v1841, 0
        %v1909 = vsel %vm1874, %v1842, 0
        %v1912 = vsel %vm1874, %v1843, 0
        %v1915 = vsel %vm1874, %v1844, 0
        %v1918 = vsel %vm1874, %v1845, 0
        %v1921 = vsel %vm1874, %v1846, 0
        %vm1923 = vcmask 1041408
        %v1925 = vsel %vm1923, %v1871, 0
        %1927 = vmatprep.subr.bf16.mxu0 0
        %1928 = vmatpush1.bf16.msra.mxu0 %v1869
        %1929 = vmatprep.subr.bf16.mxu0 0
        %1930 = vmatpush1.bf16.msra.mxu0 %v1870
        %1931 = vmatprep.subr.bf16.mxu0 0
        %1932 = vmatpush1.bf16.msra.mxu0 %v1925
        %1933 = vmatprep.subr.bf16.mxu0 0
        %1934 = vmatpush1.bf16.msra.mxu0 0
        %1935 = vmatprep.subr.bf16.mxu0 0
        %1936 = vmatpush1.bf16.msra.mxu0 0
        %1937 = vmatprep.subr.bf16.mxu0 0
        %1938 = vmatpush1.bf16.msra.mxu0 0
        %1939 = vmatprep.subr.bf16.mxu0 0
        %1940 = vmatpush1.bf16.msra.mxu0 0
        %1941 = vmatprep.subr.bf16.mxu0 0
        %1942 = vmatpush1.bf16.msra.mxu0 0
        %1943 = vmatprep.subr.bf16.mxu0 0
        %1944 = vmatpush1.bf16.msra.mxu0 0
        %1945 = vmatprep.subr.bf16.mxu0 0
        %1946 = vmatpush1.bf16.msra.mxu0 0
        %1947 = vmatprep.subr.bf16.mxu0 0
        %1948 = vmatpush1.bf16.msra.mxu0 0
        %1949 = vmatprep.subr.bf16.mxu0 0
        %1950 = vmatpush1.bf16.msra.mxu0 0
        %1951 = vmatprep.subr.bf16.mxu0 0
        %1952 = vmatpush1.bf16.msra.mxu0 0
        %1953 = vmatprep.subr.bf16.mxu0 0
        %1954 = vmatpush1.bf16.msra.mxu0 0
        %1955 = vmatprep.subr.bf16.mxu0 0
        %1956 = vmatpush1.bf16.msra.mxu0 0
        %1957 = vmatprep.subr.bf16.mxu0 0
        %1958 = vmatpush1.bf16.msra.mxu0 0
        %1959 = vmatprep.mubr.bf16.mxu0 0
        %1960 = vmatmul.mubr.bf16.gmra.mrb[0].mxu0 %v1876
        %v1961 = vpop.f32.mrb[0].mxu0
        %v1962 = vadd.f32 %v1857, %v1961
        %v1963 = vpop.f32.mrb[0].mxu0
        %v1964 = vpop.f32.mrb[0].mxu0
        %v1965 = vadd.f32 %v1857, %v1964
        %v1966 = vpop.f32.mrb[0].mxu0
        %1967 = vmatprep.mubr.bf16.mxu0 0
        %1968 = vmatmul.mubr.bf16.gmra.mrb[0].mxu0 %v1879
        %v1969 = vpop.f32.mrb[0].mxu0
        %v1970 = vadd.f32 %v1857, %v1969
        %v1971 = vpop.f32.mrb[0].mxu0
        %v1972 = vpop.f32.mrb[0].mxu0
        %v1973 = vadd.f32 %v1857, %v1972
        %v1974 = vpop.f32.mrb[0].mxu0
        %1975 = vmatprep.mubr.bf16.mxu0 0
        %1976 = vmatmul.mubr.bf16.gmra.mrb[0].mxu0 %v1882
        %v1977 = vpop.f32.mrb[0].mxu0
        %v1978 = vadd.f32 %v1857, %v1977
        %v1979 = vpop.f32.mrb[0].mxu0
        %v1980 = vpop.f32.mrb[0].mxu0
        %v1981 = vadd.f32 %v1857, %v1980
        %v1982 = vpop.f32.mrb[0].mxu0
        %1983 = vmatprep.mubr.bf16.mxu0 0
        %1984 = vmatmul.mubr.bf16.gmra.mrb[0].mxu0 %v1885
        %v1985 = vpop.f32.mrb[0].mxu0
        %v1986 = vadd.f32 %v1857, %v1985
        %v1987 = vpop.f32.mrb[0].mxu0
        %v1988 = vpop.f32.mrb[0].mxu0
        %v1989 = vadd.f32 %v1857, %v1988
        %v1990 = vpop.f32.mrb[0].mxu0
        %1991 = vmatprep.mubr.bf16.mxu0 0
        %1992 = vmatmul.mubr.bf16.gmra.mrb[0].mxu0 %v1888
        %v1993 = vpop.f32.mrb[0].mxu0
        %v1994 = vadd.f32 %v1857, %v1993
        %v1995 = vpop.f32.mrb[0].mxu0
        %v1996 = vpop.f32.mrb[0].mxu0
        %v1997 = vadd.f32 %v1857, %v1996
        %v1998 = vpop.f32.mrb[0].mxu0
        %1999 = vmatprep.mubr.bf16.mxu0 0
        %2000 = vmatmul.mubr.bf16.gmra.mrb[0].mxu0 %v1891
        %v2001 = vpop.f32.mrb[0].mxu0
        %v2002 = vadd.f32 %v1857, %v2001
        %v2003 = vpop.f32.mrb[0].mxu0
        %v2004 = vpop.f32.mrb[0].mxu0
        %v2005 = vadd.f32 %v1857, %v2004
        %v2006 = vpop.f32.mrb[0].mxu0
        %2007 = vmatprep.mubr.bf16.mxu0 0
        %2008 = vmatmul.mubr.bf16.gmra.mrb[0].mxu0 %v1894
        %v2009 = vpop.f32.mrb[0].mxu0
        %v2010 = vadd.f32 %v1857, %v2009
        %v2011 = vpop.f32.mrb[0].mxu0
        %v2012 = vpop.f32.mrb[0].mxu0
        %v2013 = vadd.f32 %v1857, %v2012
        %v2014 = vpop.f32.mrb[0].mxu0
        %2015 = vmatprep.mubr.bf16.mxu0 0
        %2016 = vmatmul.mubr.bf16.gmra.mrb[0].mxu0 %v1897
        %v2017 = vpop.f32.mrb[0].mxu0
        %v2018 = vadd.f32 %v1857, %v2017
        %v2019 = vpop.f32.mrb[0].mxu0
        %v2020 = vpop.f32.mrb[0].mxu0
        %v2021 = vadd.f32 %v1857, %v2020
        %v2022 = vpop.f32.mrb[0].mxu0
        %2023 = vmatprep.mubr.bf16.mxu0 0
        %2024 = vmatmul.mubr.bf16.gmra.mrb[0].mxu0 %v1900
        %v2025 = vpop.f32.mrb[0].mxu0
        %v2026 = vadd.f32 %v1857, %v2025
        %v2027 = vpop.f32.mrb[0].mxu0
        %v2028 = vpop.f32.mrb[0].mxu0
        %v2029 = vadd.f32 %v1857, %v2028
        %v2030 = vpop.f32.mrb[0].mxu0
        %2031 = vmatprep.mubr.bf16.mxu0 0
        %2032 = vmatmul.mubr.bf16.gmra.mrb[0].mxu0 %v1903
        %v2033 = vpop.f32.mrb[0].mxu0
        %v2034 = vadd.f32 %v1857, %v2033
        %v2035 = vpop.f32.mrb[0].mxu0
        %v2036 = vpop.f32.mrb[0].mxu0
        %v2037 = vadd.f32 %v1857, %v2036
        %v2038 = vpop.f32.mrb[0].mxu0
        %2039 = vmatprep.mubr.bf16.mxu0 0
        %2040 = vmatmul.mubr.bf16.gmra.mrb[0].mxu0 %v1906
        %v2041 = vpop.f32.mrb[0].mxu0
        %v2042 = vadd.f32 %v1857, %v2041
        %v2043 = vpop.f32.mrb[0].mxu0
        %v2044 = vpop.f32.mrb[0].mxu0
        %v2045 = vadd.f32 %v1857, %v2044
        %v2046 = vpop.f32.mrb[0].mxu0
        %2047 = vmatprep.mubr.bf16.mxu0 0
        %2048 = vmatmul.mubr.bf16.gmra.mrb[0].mxu0 %v1909
        %v2049 = vpop.f32.mrb[0].mxu0
        %v2050 = vadd.f32 %v1857, %v2049
        %v2051 = vpop.f32.mrb[0].mxu0
        %v2052 = vpop.f32.mrb[0].mxu0
        %v2053 = vadd.f32 %v1857, %v2052
        %v2054 = vpop.f32.mrb[0].mxu0
        %2055 = vmatprep.mubr.bf16.mxu0 0
        %2056 = vmatmul.mubr.bf16.gmra.mrb[0].mxu0 %v1912
        %v2057 = vpop.f32.mrb[0].mxu0
        %v2058 = vadd.f32 %v1857, %v2057
        %v2059 = vpop.f32.mrb[0].mxu0
        %v2060 = vpop.f32.mrb[0].mxu0
        %v2061 = vadd.f32 %v1857, %v2060
        %v2062 = vpop.f32.mrb[0].mxu0
        %2063 = vmatprep.mubr.bf16.mxu0 0
        %2064 = vmatmul.mubr.bf16.gmra.mrb[0].mxu0 %v1915
        %v2065 = vpop.f32.mrb[0].mxu0
        %v2066 = vadd.f32 %v1857, %v2065
        %v2067 = vpop.f32.mrb[0].mxu0
        %v2068 = vpop.f32.mrb[0].mxu0
        %v2069 = vadd.f32 %v1857, %v2068
        %v2070 = vpop.f32.mrb[0].mxu0
        %2071 = vmatprep.mubr.bf16.mxu0 0
        %2072 = vmatmul.mubr.bf16.gmra.mrb[0].mxu0 %v1918
        %v2073 = vpop.f32.mrb[0].mxu0
        %v2074 = vadd.f32 %v1857, %v2073
        %v2075 = vpop.f32.mrb[0].mxu0
        %v2076 = vpop.f32.mrb[0].mxu0
        %v2077 = vadd.f32 %v1857, %v2076
        %v2078 = vpop.f32.mrb[0].mxu0
        %2079 = vmatprep.mubr.bf16.mxu0 0
        %2080 = vmatmul.mubr.bf16.gmra.mrb[0].mxu0 %v1921
        %v2081 = vpop.f32.mrb[0].mxu0
        %v2082 = vadd.f32 %v1857, %v2081
        %v2083 = vpop.f32.mrb[0].mxu0
        %v2084 = vpop.f32.mrb[0].mxu0
        %v2085 = vadd.f32 %v1857, %v2084
        %v2086 = vpop.f32.mrb[0].mxu0
        %2087 = vdwg.mxu0
        // Predicated region
        $region45: #{tpu_custom_call.1} parent=39 // pred_check
          %p2088 = pneg %p290
        $region46: #{tpu_custom_call.1} parent=39 // pred_check_branch
          %2090 = sbr.rel (%p2088) target = $region48
        $region47: #{tpu_custom_call.1} parent=39 // pred_region
          %v2091 = vxor.u32 %v1962, 2147483648
          %v2092 = vxor.u32 %v1965, 2147483648
          %v2093 = vxor.u32 %v1970, 2147483648
          %v2094 = vxor.u32 %v1973, 2147483648
          %v2095 = vxor.u32 %v1978, 2147483648
          %v2096 = vxor.u32 %v1981, 2147483648
          %v2097 = vxor.u32 %v1986, 2147483648
          %v2098 = vxor.u32 %v1989, 2147483648
          %v2099 = vxor.u32 %v1994, 2147483648
          %v2100 = vxor.u32 %v1997, 2147483648
          %v2101 = vxor.u32 %v2002, 2147483648
          %v2102 = vxor.u32 %v2005, 2147483648
          %v2103 = vxor.u32 %v2010, 2147483648
          %v2104 = vxor.u32 %v2013, 2147483648
          %v2105 = vxor.u32 %v2018, 2147483648
          %v2106 = vxor.u32 %v2021, 2147483648
          %v2107 = vxor.u32 %v2026, 2147483648
          %v2108 = vxor.u32 %v2029, 2147483648
          %v2109 = vxor.u32 %v2034, 2147483648
          %v2110 = vxor.u32 %v2037, 2147483648
          %v2111 = vxor.u32 %v2042, 2147483648
          %v2112 = vxor.u32 %v2045, 2147483648
          %v2113 = vxor.u32 %v2050, 2147483648
          %v2114 = vxor.u32 %v2053, 2147483648
          %v2115 = vxor.u32 %v2058, 2147483648
          %v2116 = vxor.u32 %v2061, 2147483648
          %v2117 = vxor.u32 %v2066, 2147483648
          %v2118 = vxor.u32 %v2069, 2147483648
          %v2119 = vxor.u32 %v2074, 2147483648
          %v2120 = vxor.u32 %v2077, 2147483648
          %v2121 = vxor.u32 %v2082, 2147483648
          %v2122 = vxor.u32 %v2085, 2147483648
          %v2123 = vmul.f32 %v2091, 1.442695
          %v2124 = vpow.pop %v2123
          %v2125 = vmul.f32 %v2092, 1.442695
          %v2126 = vpow.pop %v2125
          %v2127 = vmul.f32 %v2093, 1.442695
          %v2128 = vpow.pop %v2127
          %v2129 = vmul.f32 %v2094, 1.442695
          %v2130 = vpow.pop %v2129
          %v2131 = vmul.f32 %v2095, 1.442695
          %v2132 = vpow.pop %v2131
          %v2133 = vmul.f32 %v2096, 1.442695
          %v2134 = vpow.pop %v2133
          %v2135 = vmul.f32 %v2097, 1.442695
          %v2136 = vpow.pop %v2135
          %v2137 = vmul.f32 %v2098, 1.442695
          %v2138 = vpow.pop %v2137
          %v2139 = vmul.f32 %v2099, 1.442695
          %v2140 = vpow.pop %v2139
          %v2141 = vmul.f32 %v2100, 1.442695
          %v2142 = vpow.pop %v2141
          %v2143 = vmul.f32 %v2101, 1.442695
          %v2144 = vpow.pop %v2143
          %v2145 = vmul.f32 %v2102, 1.442695
          %v2146 = vpow.pop %v2145
          %v2147 = vmul.f32 %v2103, 1.442695
          %v2148 = vpow.pop %v2147
          %v2149 = vmul.f32 %v2104, 1.442695
          %v2150 = vpow.pop %v2149
          %v2151 = vmul.f32 %v2105, 1.442695
          %v2152 = vpow.pop %v2151
          %v2153 = vmul.f32 %v2106, 1.442695
          %v2154 = vpow.pop %v2153
          %v2155 = vmul.f32 %v2107, 1.442695
          %v2156 = vpow.pop %v2155
          %v2157 = vmul.f32 %v2108, 1.442695
          %v2158 = vpow.pop %v2157
          %v2159 = vmul.f32 %v2109, 1.442695
          %v2160 = vpow.pop %v2159
          %v2161 = vmul.f32 %v2110, 1.442695
          %v2162 = vpow.pop %v2161
          %v2163 = vmul.f32 %v2111, 1.442695
          %v2164 = vpow.pop %v2163
          %v2165 = vmul.f32 %v2112, 1.442695
          %v2166 = vpow.pop %v2165
          %v2167 = vmul.f32 %v2113, 1.442695
          %v2168 = vpow.pop %v2167
          %v2169 = vmul.f32 %v2114, 1.442695
          %v2170 = vpow.pop %v2169
          %v2171 = vmul.f32 %v2115, 1.442695
          %v2172 = vpow.pop %v2171
          %v2173 = vmul.f32 %v2116, 1.442695
          %v2174 = vpow.pop %v2173
          %v2175 = vmul.f32 %v2117, 1.442695
          %v2176 = vpow.pop %v2175
          %v2177 = vmul.f32 %v2118, 1.442695
          %v2178 = vpow.pop %v2177
          %v2179 = vmul.f32 %v2119, 1.442695
          %v2180 = vpow.pop %v2179
          %v2181 = vmul.f32 %v2120, 1.442695
          %v2182 = vpow.pop %v2181
          %v2183 = vmul.f32 %v2121, 1.442695
          %v2184 = vpow.pop %v2183
          %v2185 = vmul.f32 %v2122, 1.442695
          %v2186 = vpow.pop %v2185
          %v2187 = vadd.f32 %v2124, 1.0
          %v2188 = vadd.f32 %v2126, 1.0
          %v2189 = vadd.f32 %v2128, 1.0
          %v2190 = vadd.f32 %v2130, 1.0
          %v2191 = vadd.f32 %v2132, 1.0
          %v2192 = vadd.f32 %v2134, 1.0
          %v2193 = vadd.f32 %v2136, 1.0
          %v2194 = vadd.f32 %v2138, 1.0
          %v2195 = vadd.f32 %v2140, 1.0
          %v2196 = vadd.f32 %v2142, 1.0
          %v2197 = vadd.f32 %v2144, 1.0
          %v2198 = vadd.f32 %v2146, 1.0
          %v2199 = vadd.f32 %v2148, 1.0
          %v2200 = vadd.f32 %v2150, 1.0
          %v2201 = vadd.f32 %v2152, 1.0
          %v2202 = vadd.f32 %v2154, 1.0
          %v2203 = vadd.f32 %v2156, 1.0
          %v2204 = vadd.f32 %v2158, 1.0
          %v2205 = vadd.f32 %v2160, 1.0
          %v2206 = vadd.f32 %v2162, 1.0
          %v2207 = vadd.f32 %v2164, 1.0
          %v2208 = vadd.f32 %v2166, 1.0
          %v2209 = vadd.f32 %v2168, 1.0
          %v2210 = vadd.f32 %v2170, 1.0
          %v2211 = vadd.f32 %v2172, 1.0
          %v2212 = vadd.f32 %v2174, 1.0
          %v2213 = vadd.f32 %v2176, 1.0
          %v2214 = vadd.f32 %v2178, 1.0
          %v2215 = vadd.f32 %v2180, 1.0
          %v2216 = vadd.f32 %v2182, 1.0
          %v2217 = vadd.f32 %v2184, 1.0
          %v2218 = vadd.f32 %v2186, 1.0
          %v2219 = vrcp.pop %v2187
          %v2220 = vmul.f32 1.0, %v2219
          %v2221 = vrcp.pop %v2188
          %v2222 = vmul.f32 1.0, %v2221
          %v2223 = vrcp.pop %v2189
          %v2224 = vmul.f32 1.0, %v2223
          %v2225 = vrcp.pop %v2190
          %v2226 = vmul.f32 1.0, %v2225
          %v2227 = vrcp.pop %v2191
          %v2228 = vmul.f32 1.0, %v2227
          %v2229 = vrcp.pop %v2192
          %v2230 = vmul.f32 1.0, %v2229
          %v2231 = vrcp.pop %v2193
          %v2232 = vmul.f32 1.0, %v2231
          %v2233 = vrcp.pop %v2194
          %v2234 = vmul.f32 1.0, %v2233
          %v2235 = vrcp.pop %v2195
          %v2236 = vmul.f32 1.0, %v2235
          %v2237 = vrcp.pop %v2196
          %v2238 = vmul.f32 1.0, %v2237
          %v2239 = vrcp.pop %v2197
          %v2240 = vmul.f32 1.0, %v2239
          %v2241 = vrcp.pop %v2198
          %v2242 = vmul.f32 1.0, %v2241
          %v2243 = vrcp.pop %v2199
          %v2244 = vmul.f32 1.0, %v2243
          %v2245 = vrcp.pop %v2200
          %v2246 = vmul.f32 1.0, %v2245
          %v2247 = vrcp.pop %v2201
          %v2248 = vmul.f32 1.0, %v2247
          %v2249 = vrcp.pop %v2202
          %v2250 = vmul.f32 1.0, %v2249
          %v2251 = vrcp.pop %v2203
          %v2252 = vmul.f32 1.0, %v2251
          %v2253 = vrcp.pop %v2204
          %v2254 = vmul.f32 1.0, %v2253
          %v2255 = vrcp.pop %v2205
          %v2256 = vmul.f32 1.0, %v2255
          %v2257 = vrcp.pop %v2206
          %v2258 = vmul.f32 1.0, %v2257
          %v2259 = vrcp.pop %v2207
          %v2260 = vmul.f32 1.0, %v2259
          %v2261 = vrcp.pop %v2208
          %v2262 = vmul.f32 1.0, %v2261
          %v2263 = vrcp.pop %v2209
          %v2264 = vmul.f32 1.0, %v2263
          %v2265 = vrcp.pop %v2210
          %v2266 = vmul.f32 1.0, %v2265
          %v2267 = vrcp.pop %v2211
          %v2268 = vmul.f32 1.0, %v2267
          %v2269 = vrcp.pop %v2212
          %v2270 = vmul.f32 1.0, %v2269
          %v2271 = vrcp.pop %v2213
          %v2272 = vmul.f32 1.0, %v2271
          %v2273 = vrcp.pop %v2214
          %v2274 = vmul.f32 1.0, %v2273
          %v2275 = vrcp.pop %v2215
          %v2276 = vmul.f32 1.0, %v2275
          %v2277 = vrcp.pop %v2216
          %v2278 = vmul.f32 1.0, %v2277
          %v2279 = vrcp.pop %v2217
          %v2280 = vmul.f32 1.0, %v2279
          %v2281 = vrcp.pop %v2218
          %v2282 = vmul.f32 1.0, %v2281
          %v2283 = vtanh.pop %v1962
          %v2284 = vtanh.pop %v1965
          %v2285 = vtanh.pop %v1970
          %v2286 = vtanh.pop %v1973
          %v2287 = vtanh.pop %v1978
          %v2288 = vtanh.pop %v1981
          %v2289 = vtanh.pop %v1986
          %v2290 = vtanh.pop %v1989
          %v2291 = vtanh.pop %v1994
          %v2292 = vtanh.pop %v1997
          %v2293 = vtanh.pop %v2002
          %v2294 = vtanh.pop %v2005
          %v2295 = vtanh.pop %v2010
          %v2296 = vtanh.pop %v2013
          %v2297 = vtanh.pop %v2018
          %v2298 = vtanh.pop %v2021
          %v2299 = vtanh.pop %v2026
          %v2300 = vtanh.pop %v2029
          %v2301 = vtanh.pop %v2034
          %v2302 = vtanh.pop %v2037
          %v2303 = vtanh.pop %v2042
          %v2304 = vtanh.pop %v2045
          %v2305 = vtanh.pop %v2050
          %v2306 = vtanh.pop %v2053
          %v2307 = vtanh.pop %v2058
          %v2308 = vtanh.pop %v2061
          %v2309 = vtanh.pop %v2066
          %v2310 = vtanh.pop %v2069
          %v2311 = vtanh.pop %v2074
          %v2312 = vtanh.pop %v2077
          %v2313 = vtanh.pop %v2082
          %v2314 = vtanh.pop %v2085
          %2347 = vrot.lane.b32.xlu0 %v2283, 64
          %v2348 = vpop.permute.xlu0 %2347
          %2349 = vrot.lane.b32.xlu0 %v2284, 64
          %v2350 = vpop.permute.xlu0 %2349
          %2351 = vrot.lane.b32.xlu0 %v2285, 64
          %v2352 = vpop.permute.xlu0 %2351
          %2353 = vrot.lane.b32.xlu0 %v2286, 64
          %v2354 = vpop.permute.xlu0 %2353
          %2355 = vrot.lane.b32.xlu0 %v2287, 64
          %v2356 = vpop.permute.xlu0 %2355
          %2357 = vrot.lane.b32.xlu0 %v2288, 64
          %v2358 = vpop.permute.xlu0 %2357
          %2359 = vrot.lane.b32.xlu0 %v2289, 64
          %v2360 = vpop.permute.xlu0 %2359
          %2361 = vrot.lane.b32.xlu0 %v2290, 64
          %v2362 = vpop.permute.xlu0 %2361
          %2363 = vrot.lane.b32.xlu0 %v2291, 64
          %v2364 = vpop.permute.xlu0 %2363
          %2365 = vrot.lane.b32.xlu0 %v2292, 64
          %v2366 = vpop.permute.xlu0 %2365
          %2367 = vrot.lane.b32.xlu0 %v2293, 64
          %v2368 = vpop.permute.xlu0 %2367
          %2369 = vrot.lane.b32.xlu0 %v2294, 64
          %v2370 = vpop.permute.xlu0 %2369
          %2371 = vrot.lane.b32.xlu0 %v2295, 64
          %v2372 = vpop.permute.xlu0 %2371
          %2373 = vrot.lane.b32.xlu0 %v2296, 64
          %v2374 = vpop.permute.xlu0 %2373
          %2375 = vrot.lane.b32.xlu0 %v2297, 64
          %v2376 = vpop.permute.xlu0 %2375
          %2377 = vrot.lane.b32.xlu0 %v2298, 64
          %v2378 = vpop.permute.xlu0 %2377
          %2379 = vrot.lane.b32.xlu0 %v2299, 64
          %v2380 = vpop.permute.xlu0 %2379
          %2381 = vrot.lane.b32.xlu0 %v2300, 64
          %v2382 = vpop.permute.xlu0 %2381
          %2383 = vrot.lane.b32.xlu0 %v2301, 64
          %v2384 = vpop.permute.xlu0 %2383
          %2385 = vrot.lane.b32.xlu0 %v2302, 64
          %v2386 = vpop.permute.xlu0 %2385
          %2387 = vrot.lane.b32.xlu0 %v2303, 64
          %v2388 = vpop.permute.xlu0 %2387
          %2389 = vrot.lane.b32.xlu0 %v2304, 64
          %v2390 = vpop.permute.xlu0 %2389
          %2391 = vrot.lane.b32.xlu0 %v2305, 64
          %v2392 = vpop.permute.xlu0 %2391
          %2393 = vrot.lane.b32.xlu0 %v2306, 64
          %v2394 = vpop.permute.xlu0 %2393
          %2395 = vrot.lane.b32.xlu0 %v2307, 64
          %v2396 = vpop.permute.xlu0 %2395
          %2397 = vrot.lane.b32.xlu0 %v2308, 64
          %v2398 = vpop.permute.xlu0 %2397
          %2399 = vrot.lane.b32.xlu0 %v2309, 64
          %v2400 = vpop.permute.xlu0 %2399
          %2401 = vrot.lane.b32.xlu0 %v2310, 64
          %v2402 = vpop.permute.xlu0 %2401
          %2403 = vrot.lane.b32.xlu0 %v2311, 64
          %v2404 = vpop.permute.xlu0 %2403
          %2405 = vrot.lane.b32.xlu0 %v2312, 64
          %v2406 = vpop.permute.xlu0 %2405
          %2407 = vrot.lane.b32.xlu0 %v2313, 64
          %v2408 = vpop.permute.xlu0 %2407
          %2409 = vrot.lane.b32.xlu0 %v2314, 64
          %v2410 = vpop.permute.xlu0 %2409
          %v2443 = vmul.f32 %v2220, %v2348
          %v2444 = vmul.f32 %v2222, %v2350
          %v2445 = vmul.f32 %v2224, %v2352
          %v2446 = vmul.f32 %v2226, %v2354
          %v2447 = vmul.f32 %v2228, %v2356
          %v2448 = vmul.f32 %v2230, %v2358
          %v2449 = vmul.f32 %v2232, %v2360
          %v2450 = vmul.f32 %v2234, %v2362
          %v2451 = vmul.f32 %v2236, %v2364
          %v2452 = vmul.f32 %v2238, %v2366
          %v2453 = vmul.f32 %v2240, %v2368
          %v2454 = vmul.f32 %v2242, %v2370
          %v2455 = vmul.f32 %v2244, %v2372
          %v2456 = vmul.f32 %v2246, %v2374
          %v2457 = vmul.f32 %v2248, %v2376
          %v2458 = vmul.f32 %v2250, %v2378
          %v2459 = vmul.f32 %v2252, %v2380
          %v2460 = vmul.f32 %v2254, %v2382
          %v2461 = vmul.f32 %v2256, %v2384
          %v2462 = vmul.f32 %v2258, %v2386
          %v2463 = vmul.f32 %v2260, %v2388
          %v2464 = vmul.f32 %v2262, %v2390
          %v2465 = vmul.f32 %v2264, %v2392
          %v2466 = vmul.f32 %v2266, %v2394
          %v2467 = vmul.f32 %v2268, %v2396
          %v2468 = vmul.f32 %v2270, %v2398
          %v2469 = vmul.f32 %v2272, %v2400
          %v2470 = vmul.f32 %v2274, %v2402
          %v2471 = vmul.f32 %v2276, %v2404
          %v2472 = vmul.f32 %v2278, %v2406
          %v2473 = vmul.f32 %v2280, %v2408
          %v2474 = vmul.f32 %v2282, %v2410
          %2507 = vrot.lane.b32.xlu0 %v2443, 32
          %v2508 = vpop.permute.xlu0 %2507
          %2509 = vrot.lane.b32.xlu0 %v2444, 32
          %v2510 = vpop.permute.xlu0 %2509
          %2511 = vrot.lane.b32.xlu0 %v2445, 32
          %v2512 = vpop.permute.xlu0 %2511
          %2513 = vrot.lane.b32.xlu0 %v2446, 32
          %v2514 = vpop.permute.xlu0 %2513
          %2515 = vrot.lane.b32.xlu0 %v2447, 32
          %v2516 = vpop.permute.xlu0 %2515
          %2517 = vrot.lane.b32.xlu0 %v2448, 32
          %v2518 = vpop.permute.xlu0 %2517
          %2519 = vrot.lane.b32.xlu0 %v2449, 32
          %v2520 = vpop.permute.xlu0 %2519
          %2521 = vrot.lane.b32.xlu0 %v2450, 32
          %v2522 = vpop.permute.xlu0 %2521
          %2523 = vrot.lane.b32.xlu0 %v2451, 32
          %v2524 = vpop.permute.xlu0 %2523
          %2525 = vrot.lane.b32.xlu0 %v2452, 32
          %v2526 = vpop.permute.xlu0 %2525
          %2527 = vrot.lane.b32.xlu0 %v2453, 32
          %v2528 = vpop.permute.xlu0 %2527
          %2529 = vrot.lane.b32.xlu0 %v2454, 32
          %v2530 = vpop.permute.xlu0 %2529
          %2531 = vrot.lane.b32.xlu0 %v2455, 32
          %v2532 = vpop.permute.xlu0 %2531
          %2533 = vrot.lane.b32.xlu0 %v2456, 32
          %v2534 = vpop.permute.xlu0 %2533
          %2535 = vrot.lane.b32.xlu0 %v2457, 32
          %v2536 = vpop.permute.xlu0 %2535
          %2537 = vrot.lane.b32.xlu0 %v2458, 32
          %v2538 = vpop.permute.xlu0 %2537
          %2539 = vrot.lane.b32.xlu0 %v2459, 32
          %v2540 = vpop.permute.xlu0 %2539
          %2541 = vrot.lane.b32.xlu0 %v2460, 32
          %v2542 = vpop.permute.xlu0 %2541
          %2543 = vrot.lane.b32.xlu0 %v2461, 32
          %v2544 = vpop.permute.xlu0 %2543
          %2545 = vrot.lane.b32.xlu0 %v2462, 32
          %v2546 = vpop.permute.xlu0 %2545
          %2547 = vrot.lane.b32.xlu0 %v2463, 32
          %v2548 = vpop.permute.xlu0 %2547
          %2549 = vrot.lane.b32.xlu0 %v2464, 32
          %v2550 = vpop.permute.xlu0 %2549
          %2551 = vrot.lane.b32.xlu0 %v2465, 32
          %v2552 = vpop.permute.xlu0 %2551
          %2553 = vrot.lane.b32.xlu0 %v2466, 32
          %v2554 = vpop.permute.xlu0 %2553
          %2555 = vrot.lane.b32.xlu0 %v2467, 32
          %v2556 = vpop.permute.xlu0 %2555
          %2557 = vrot.lane.b32.xlu0 %v2468, 32
          %v2558 = vpop.permute.xlu0 %2557
          %2559 = vrot.lane.b32.xlu0 %v2469, 32
          %v2560 = vpop.permute.xlu0 %2559
          %2561 = vrot.lane.b32.xlu0 %v2470, 32
          %v2562 = vpop.permute.xlu0 %2561
          %2563 = vrot.lane.b32.xlu0 %v2471, 32
          %v2564 = vpop.permute.xlu0 %2563
          %2565 = vrot.lane.b32.xlu0 %v2472, 32
          %v2566 = vpop.permute.xlu0 %2565
          %2567 = vrot.lane.b32.xlu0 %v2473, 32
          %v2568 = vpop.permute.xlu0 %2567
          %2569 = vrot.lane.b32.xlu0 %v2474, 32
          %v2570 = vpop.permute.xlu0 %2569
          %v2603 = vmul.f32 %v2220, %v2508
          %v2604 = vmul.f32 %v2222, %v2510
          %v2605 = vmul.f32 %v2224, %v2512
          %v2606 = vmul.f32 %v2226, %v2514
          %v2607 = vmul.f32 %v2228, %v2516
          %v2608 = vmul.f32 %v2230, %v2518
          %v2609 = vmul.f32 %v2232, %v2520
          %v2610 = vmul.f32 %v2234, %v2522
          %v2611 = vmul.f32 %v2236, %v2524
          %v2612 = vmul.f32 %v2238, %v2526
          %v2613 = vmul.f32 %v2240, %v2528
          %v2614 = vmul.f32 %v2242, %v2530
          %v2615 = vmul.f32 %v2244, %v2532
          %v2616 = vmul.f32 %v2246, %v2534
          %v2617 = vmul.f32 %v2248, %v2536
          %v2618 = vmul.f32 %v2250, %v2538
          %v2619 = vmul.f32 %v2252, %v2540
          %v2620 = vmul.f32 %v2254, %v2542
          %v2621 = vmul.f32 %v2256, %v2544
          %v2622 = vmul.f32 %v2258, %v2546
          %v2623 = vmul.f32 %v2260, %v2548
          %v2624 = vmul.f32 %v2262, %v2550
          %v2625 = vmul.f32 %v2264, %v2552
          %v2626 = vmul.f32 %v2266, %v2554
          %v2627 = vmul.f32 %v2268, %v2556
          %v2628 = vmul.f32 %v2270, %v2558
          %v2629 = vmul.f32 %v2272, %v2560
          %v2630 = vmul.f32 %v2274, %v2562
          %v2631 = vmul.f32 %v2276, %v2564
          %v2632 = vmul.f32 %v2278, %v2566
          %v2633 = vmul.f32 %v2280, %v2568
          %v2634 = vmul.f32 %v2282, %v2570
          %vm2635 = vcmp.ge.f32.partialorder %v2603, 0.0
          %vm2636 = vcmp.ge.f32.partialorder %v2604, 0.0
          %vm2637 = vcmp.ge.f32.partialorder %v2605, 0.0
          %vm2638 = vcmp.ge.f32.partialorder %v2606, 0.0
          %vm2639 = vcmp.ge.f32.partialorder %v2607, 0.0
          %vm2640 = vcmp.ge.f32.partialorder %v2608, 0.0
          %vm2641 = vcmp.ge.f32.partialorder %v2609, 0.0
          %vm2642 = vcmp.ge.f32.partialorder %v2610, 0.0
          %vm2643 = vcmp.ge.f32.partialorder %v2611, 0.0
          %vm2644 = vcmp.ge.f32.partialorder %v2612, 0.0
          %vm2645 = vcmp.ge.f32.partialorder %v2613, 0.0
          %vm2646 = vcmp.ge.f32.partialorder %v2614, 0.0
          %vm2647 = vcmp.ge.f32.partialorder %v2615, 0.0
          %vm2648 = vcmp.ge.f32.partialorder %v2616, 0.0
          %vm2649 = vcmp.ge.f32.partialorder %v2617, 0.0
          %vm2650 = vcmp.ge.f32.partialorder %v2618, 0.0
          %vm2651 = vcmp.ge.f32.partialorder %v2619, 0.0
          %vm2652 = vcmp.ge.f32.partialorder %v2620, 0.0
          %vm2653 = vcmp.ge.f32.partialorder %v2621, 0.0
          %vm2654 = vcmp.ge.f32.partialorder %v2622, 0.0
          %vm2655 = vcmp.ge.f32.partialorder %v2623, 0.0
          %vm2656 = vcmp.ge.f32.partialorder %v2624, 0.0
          %vm2657 = vcmp.ge.f32.partialorder %v2625, 0.0
          %vm2658 = vcmp.ge.f32.partialorder %v2626, 0.0
          %vm2659 = vcmp.ge.f32.partialorder %v2627, 0.0
          %vm2660 = vcmp.ge.f32.partialorder %v2628, 0.0
          %vm2661 = vcmp.ge.f32.partialorder %v2629, 0.0
          %vm2662 = vcmp.ge.f32.partialorder %v2630, 0.0
          %vm2663 = vcmp.ge.f32.partialorder %v2631, 0.0
          %vm2664 = vcmp.ge.f32.partialorder %v2632, 0.0
          %vm2665 = vcmp.ge.f32.partialorder %v2633, 0.0
          %vm2666 = vcmp.ge.f32.partialorder %v2634, 0.0
          %v2667 = vmul.f32 %v2603, 0.2
          %v2668 = vmul.f32 %v2604, 0.2
          %v2669 = vmul.f32 %v2605, 0.2
          %v2670 = vmul.f32 %v2606, 0.2
          %v2671 = vmul.f32 %v2607, 0.2
          %v2672 = vmul.f32 %v2608, 0.2
          %v2673 = vmul.f32 %v2609, 0.2
          %v2674 = vmul.f32 %v2610, 0.2
          %v2675 = vmul.f32 %v2611, 0.2
          %v2676 = vmul.f32 %v2612, 0.2
          %v2677 = vmul.f32 %v2613, 0.2
          %v2678 = vmul.f32 %v2614, 0.2
          %v2679 = vmul.f32 %v2615, 0.2
          %v2680 = vmul.f32 %v2616, 0.2
          %v2681 = vmul.f32 %v2617, 0.2
          %v2682 = vmul.f32 %v2618, 0.2
          %v2683 = vmul.f32 %v2619, 0.2
          %v2684 = vmul.f32 %v2620, 0.2
          %v2685 = vmul.f32 %v2621, 0.2
          %v2686 = vmul.f32 %v2622, 0.2
          %v2687 = vmul.f32 %v2623, 0.2
          %v2688 = vmul.f32 %v2624, 0.2
          %v2689 = vmul.f32 %v2625, 0.2
          %v2690 = vmul.f32 %v2626, 0.2
          %v2691 = vmul.f32 %v2627, 0.2
          %v2692 = vmul.f32 %v2628, 0.2
          %v2693 = vmul.f32 %v2629, 0.2
          %v2694 = vmul.f32 %v2630, 0.2
          %v2695 = vmul.f32 %v2631, 0.2
          %v2696 = vmul.f32 %v2632, 0.2
          %v2697 = vmul.f32 %v2633, 0.2
          %v2698 = vmul.f32 %v2634, 0.2
          %v2699 = vsel %vm2635, %v2603, %v2667
          %v2700 = vsel %vm2636, %v2604, %v2668
          %v2701 = vsel %vm2637, %v2605, %v2669
          %v2702 = vsel %vm2638, %v2606, %v2670
          %v2703 = vsel %vm2639, %v2607, %v2671
          %v2704 = vsel %vm2640, %v2608, %v2672
          %v2705 = vsel %vm2641, %v2609, %v2673
          %v2706 = vsel %vm2642, %v2610, %v2674
          %v2707 = vsel %vm2643, %v2611, %v2675
          %v2708 = vsel %vm2644, %v2612, %v2676
          %v2709 = vsel %vm2645, %v2613, %v2677
          %v2710 = vsel %vm2646, %v2614, %v2678
          %v2711 = vsel %vm2647, %v2615, %v2679
          %v2712 = vsel %vm2648, %v2616, %v2680
          %v2713 = vsel %vm2649, %v2617, %v2681
          %v2714 = vsel %vm2650, %v2618, %v2682
          %v2715 = vsel %vm2651, %v2619, %v2683
          %v2716 = vsel %vm2652, %v2620, %v2684
          %v2717 = vsel %vm2653, %v2621, %v2685
          %v2718 = vsel %vm2654, %v2622, %v2686
          %v2719 = vsel %vm2655, %v2623, %v2687
          %v2720 = vsel %vm2656, %v2624, %v2688
          %v2721 = vsel %vm2657, %v2625, %v2689
          %v2722 = vsel %vm2658, %v2626, %v2690
          %v2723 = vsel %vm2659, %v2627, %v2691
          %v2724 = vsel %vm2660, %v2628, %v2692
          %v2725 = vsel %vm2661, %v2629, %v2693
          %v2726 = vsel %vm2662, %v2630, %v2694
          %v2727 = vsel %vm2663, %v2631, %v2695
          %v2728 = vsel %vm2664, %v2632, %v2696
          %v2729 = vsel %vm2665, %v2633, %v2697
          %v2730 = vsel %vm2666, %v2634, %v2698
          %2731 = vrot.lane.b32.xlu0 %v2443, 96
          %v2732 = vpop.permute.xlu0 %2731
          %2733 = vrot.lane.b32.xlu0 %v2444, 96
          %v2734 = vpop.permute.xlu0 %2733
          %2735 = vrot.lane.b32.xlu0 %v2445, 96
          %v2736 = vpop.permute.xlu0 %2735
          %2737 = vrot.lane.b32.xlu0 %v2446, 96
          %v2738 = vpop.permute.xlu0 %2737
          %2739 = vrot.lane.b32.xlu0 %v2447, 96
          %v2740 = vpop.permute.xlu0 %2739
          %2741 = vrot.lane.b32.xlu0 %v2448, 96
          %v2742 = vpop.permute.xlu0 %2741
          %2743 = vrot.lane.b32.xlu0 %v2449, 96
          %v2744 = vpop.permute.xlu0 %2743
          %2745 = vrot.lane.b32.xlu0 %v2450, 96
          %v2746 = vpop.permute.xlu0 %2745
          %2747 = vrot.lane.b32.xlu0 %v2451, 96
          %v2748 = vpop.permute.xlu0 %2747
          %2749 = vrot.lane.b32.xlu0 %v2452, 96
          %v2750 = vpop.permute.xlu0 %2749
          %2751 = vrot.lane.b32.xlu0 %v2453, 96
          %v2752 = vpop.permute.xlu0 %2751
          %2753 = vrot.lane.b32.xlu0 %v2454, 96
          %v2754 = vpop.permute.xlu0 %2753
          %2755 = vrot.lane.b32.xlu0 %v2455, 96
          %v2756 = vpop.permute.xlu0 %2755
          %2757 = vrot.lane.b32.xlu0 %v2456, 96
          %v2758 = vpop.permute.xlu0 %2757
          %2759 = vrot.lane.b32.xlu0 %v2457, 96
          %v2760 = vpop.permute.xlu0 %2759
          %2761 = vrot.lane.b32.xlu0 %v2458, 96
          %v2762 = vpop.permute.xlu0 %2761
          %2763 = vrot.lane.b32.xlu0 %v2459, 96
          %v2764 = vpop.permute.xlu0 %2763
          %2765 = vrot.lane.b32.xlu0 %v2460, 96
          %v2766 = vpop.permute.xlu0 %2765
          %2767 = vrot.lane.b32.xlu0 %v2461, 96
          %v2768 = vpop.permute.xlu0 %2767
          %2769 = vrot.lane.b32.xlu0 %v2462, 96
          %v2770 = vpop.permute.xlu0 %2769
          %2771 = vrot.lane.b32.xlu0 %v2463, 96
          %v2772 = vpop.permute.xlu0 %2771
          %2773 = vrot.lane.b32.xlu0 %v2464, 96
          %v2774 = vpop.permute.xlu0 %2773
          %2775 = vrot.lane.b32.xlu0 %v2465, 96
          %v2776 = vpop.permute.xlu0 %2775
          %2777 = vrot.lane.b32.xlu0 %v2466, 96
          %v2778 = vpop.permute.xlu0 %2777
          %2779 = vrot.lane.b32.xlu0 %v2467, 96
          %v2780 = vpop.permute.xlu0 %2779
          %2781 = vrot.lane.b32.xlu0 %v2468, 96
          %v2782 = vpop.permute.xlu0 %2781
          %2783 = vrot.lane.b32.xlu0 %v2469, 96
          %v2784 = vpop.permute.xlu0 %2783
          %2785 = vrot.lane.b32.xlu0 %v2470, 96
          %v2786 = vpop.permute.xlu0 %2785
          %2787 = vrot.lane.b32.xlu0 %v2471, 96
          %v2788 = vpop.permute.xlu0 %2787
          %2789 = vrot.lane.b32.xlu0 %v2472, 96
          %v2790 = vpop.permute.xlu0 %2789
          %2791 = vrot.lane.b32.xlu0 %v2473, 96
          %v2792 = vpop.permute.xlu0 %2791
          %2793 = vrot.lane.b32.xlu0 %v2474, 96
          %v2794 = vpop.permute.xlu0 %2793
          %2827 = vst.msk [vmem:[#allocation4] sm:$0xff] %vm1798, %v2732
          %2828 = vst.msk [vmem:[#allocation4 + $0x8] sm:$0xff] %vm1798, %v2734
          %2829 = vst.msk [vmem:[#allocation4 + $0x10] sm:$0xff] %vm1798, %v2736
          %2830 = vst.msk [vmem:[#allocation4 + $0x18] sm:$0xff] %vm1798, %v2738
          %2831 = vst.msk [vmem:[#allocation4 + $0x20] sm:$0xff] %vm1798, %v2740
          %2832 = vst.msk [vmem:[#allocation4 + $0x28] sm:$0xff] %vm1798, %v2742
          %2833 = vst.msk [vmem:[#allocation4 + $0x30] sm:$0xff] %vm1798, %v2744
          %2834 = vst.msk [vmem:[#allocation4 + $0x38] sm:$0xff] %vm1798, %v2746
          %2835 = vst.msk [vmem:[#allocation4 + $0x40] sm:$0xff] %vm1798, %v2748
          %2836 = vst.msk [vmem:[#allocation4 + $0x48] sm:$0xff] %vm1798, %v2750
          %2837 = vst.msk [vmem:[#allocation4 + $0x50] sm:$0xff] %vm1798, %v2752
          %2838 = vst.msk [vmem:[#allocation4 + $0x58] sm:$0xff] %vm1798, %v2754
          %2839 = vst.msk [vmem:[#allocation4 + $0x60] sm:$0xff] %vm1798, %v2756
          %2840 = vst.msk [vmem:[#allocation4 + $0x68] sm:$0xff] %vm1798, %v2758
          %2841 = vst.msk [vmem:[#allocation4 + $0x70] sm:$0xff] %vm1798, %v2760
          %2842 = vst.msk [vmem:[#allocation4 + $0x78] sm:$0xff] %vm1798, %v2762
          %2843 = vst.msk [vmem:[#allocation4 + $0x80] sm:$0xff] %vm1798, %v2764
          %2844 = vst.msk [vmem:[#allocation4 + $0x88] sm:$0xff] %vm1798, %v2766
          %2845 = vst.msk [vmem:[#allocation4 + $0x90] sm:$0xff] %vm1798, %v2768
          %2846 = vst.msk [vmem:[#allocation4 + $0x98] sm:$0xff] %vm1798, %v2770
          %2847 = vst.msk [vmem:[#allocation4 + $0xa0] sm:$0xff] %vm1798, %v2772
          %2848 = vst.msk [vmem:[#allocation4 + $0xa8] sm:$0xff] %vm1798, %v2774
          %2849 = vst.msk [vmem:[#allocation4 + $0xb0] sm:$0xff] %vm1798, %v2776
          %2850 = vst.msk [vmem:[#allocation4 + $0xb8] sm:$0xff] %vm1798, %v2778
          %2851 = vst.msk [vmem:[#allocation4 + $0xc0] sm:$0xff] %vm1798, %v2780
          %2852 = vst.msk [vmem:[#allocation4 + $0xc8] sm:$0xff] %vm1798, %v2782
          %2853 = vst.msk [vmem:[#allocation4 + $0xd0] sm:$0xff] %vm1798, %v2784
          %2854 = vst.msk [vmem:[#allocation4 + $0xd8] sm:$0xff] %vm1798, %v2786
          %2855 = vst.msk [vmem:[#allocation4 + $0xe0] sm:$0xff] %vm1798, %v2788
          %2856 = vst.msk [vmem:[#allocation4 + $0xe8] sm:$0xff] %vm1798, %v2790
          %2857 = vst.msk [vmem:[#allocation4 + $0xf0] sm:$0xff] %vm1798, %v2792
          %2858 = vst.msk [vmem:[#allocation4 + $0xf8] sm:$0xff] %vm1798, %v2794
          %2891 = vrot.lane.b32.xlu0 %v2699, 64
          %v2892 = vpop.permute.xlu0 %2891
          %2893 = vrot.lane.b32.xlu0 %v2700, 64
          %v2894 = vpop.permute.xlu0 %2893
          %2895 = vrot.lane.b32.xlu0 %v2701, 64
          %v2896 = vpop.permute.xlu0 %2895
          %2897 = vrot.lane.b32.xlu0 %v2702, 64
          %v2898 = vpop.permute.xlu0 %2897
          %2899 = vrot.lane.b32.xlu0 %v2703, 64
          %v2900 = vpop.permute.xlu0 %2899
          %2901 = vrot.lane.b32.xlu0 %v2704, 64
          %v2902 = vpop.permute.xlu0 %2901
          %2903 = vrot.lane.b32.xlu0 %v2705, 64
          %v2904 = vpop.permute.xlu0 %2903
          %2905 = vrot.lane.b32.xlu0 %v2706, 64
          %v2906 = vpop.permute.xlu0 %2905
          %2907 = vrot.lane.b32.xlu0 %v2707, 64
          %v2908 = vpop.permute.xlu0 %2907
          %2909 = vrot.lane.b32.xlu0 %v2708, 64
          %v2910 = vpop.permute.xlu0 %2909
          %2911 = vrot.lane.b32.xlu0 %v2709, 64
          %v2912 = vpop.permute.xlu0 %2911
          %2913 = vrot.lane.b32.xlu0 %v2710, 64
          %v2914 = vpop.permute.xlu0 %2913
          %2915 = vrot.lane.b32.xlu0 %v2711, 64
          %v2916 = vpop.permute.xlu0 %2915
          %2917 = vrot.lane.b32.xlu0 %v2712, 64
          %v2918 = vpop.permute.xlu0 %2917
          %2919 = vrot.lane.b32.xlu0 %v2713, 64
          %v2920 = vpop.permute.xlu0 %2919
          %2921 = vrot.lane.b32.xlu0 %v2714, 64
          %v2922 = vpop.permute.xlu0 %2921
          %2923 = vrot.lane.b32.xlu0 %v2715, 64
          %v2924 = vpop.permute.xlu0 %2923
          %2925 = vrot.lane.b32.xlu0 %v2716, 64
          %v2926 = vpop.permute.xlu0 %2925
          %2927 = vrot.lane.b32.xlu0 %v2717, 64
          %v2928 = vpop.permute.xlu0 %2927
          %2929 = vrot.lane.b32.xlu0 %v2718, 64
          %v2930 = vpop.permute.xlu0 %2929
          %2931 = vrot.lane.b32.xlu0 %v2719, 64
          %v2932 = vpop.permute.xlu0 %2931
          %2933 = vrot.lane.b32.xlu0 %v2720, 64
          %v2934 = vpop.permute.xlu0 %2933
          %2935 = vrot.lane.b32.xlu0 %v2721, 64
          %v2936 = vpop.permute.xlu0 %2935
          %2937 = vrot.lane.b32.xlu0 %v2722, 64
          %v2938 = vpop.permute.xlu0 %2937
          %2939 = vrot.lane.b32.xlu0 %v2723, 64
          %v2940 = vpop.permute.xlu0 %2939
          %2941 = vrot.lane.b32.xlu0 %v2724, 64
          %v2942 = vpop.permute.xlu0 %2941
          %2943 = vrot.lane.b32.xlu0 %v2725, 64
          %v2944 = vpop.permute.xlu0 %2943
          %2945 = vrot.lane.b32.xlu0 %v2726, 64
          %v2946 = vpop.permute.xlu0 %2945
          %2947 = vrot.lane.b32.xlu0 %v2727, 64
          %v2948 = vpop.permute.xlu0 %2947
          %2949 = vrot.lane.b32.xlu0 %v2728, 64
          %v2950 = vpop.permute.xlu0 %2949
          %2951 = vrot.lane.b32.xlu0 %v2729, 64
          %v2952 = vpop.permute.xlu0 %2951
          %2953 = vrot.lane.b32.xlu0 %v2730, 64
          %v2954 = vpop.permute.xlu0 %2953
          %s2987 = scalar_lea.vmem [#allocation3], 24
          %2988 = vst.msk [vmem:[%s2987 + $0x1] sm:$0xff] %vm1798, %v2892
          %2989 = vst.msk [vmem:[%s2987 + $0x9] sm:$0xff] %vm1798, %v2894
          %2990 = vst.msk [vmem:[%s2987 + $0x19] sm:$0xff] %vm1798, %v2896
          %2991 = vst.msk [vmem:[%s2987 + $0x21] sm:$0xff] %vm1798, %v2898
          %2992 = vst.msk [vmem:[%s2987 + $0x31] sm:$0xff] %vm1798, %v2900
          %2993 = vst.msk [vmem:[%s2987 + $0x39] sm:$0xff] %vm1798, %v2902
          %2994 = vst.msk [vmem:[%s2987 + $0x49] sm:$0xff] %vm1798, %v2904
          %2995 = vst.msk [vmem:[%s2987 + $0x51] sm:$0xff] %vm1798, %v2906
          %2996 = vst.msk [vmem:[%s2987 + $0x61] sm:$0xff] %vm1798, %v2908
          %2997 = vst.msk [vmem:[%s2987 + $0x69] sm:$0xff] %vm1798, %v2910
          %2998 = vst.msk [vmem:[%s2987 + $0x79] sm:$0xff] %vm1798, %v2912
          %2999 = vst.msk [vmem:[%s2987 + $0x81] sm:$0xff] %vm1798, %v2914
          %3000 = vst.msk [vmem:[%s2987 + $0x91] sm:$0xff] %vm1798, %v2916
          %3001 = vst.msk [vmem:[%s2987 + $0x99] sm:$0xff] %vm1798, %v2918
          %3002 = vst.msk [vmem:[%s2987 + $0xa9] sm:$0xff] %vm1798, %v2920
          %3003 = vst.msk [vmem:[%s2987 + $0xb1] sm:$0xff] %vm1798, %v2922
          %3004 = vst.msk [vmem:[%s2987 + $0xc1] sm:$0xff] %vm1798, %v2924
          %3005 = vst.msk [vmem:[%s2987 + $0xc9] sm:$0xff] %vm1798, %v2926
          %3006 = vst.msk [vmem:[%s2987 + $0xd9] sm:$0xff] %vm1798, %v2928
          %3007 = vst.msk [vmem:[%s2987 + $0xe1] sm:$0xff] %vm1798, %v2930
          %3008 = vst.msk [vmem:[%s2987 + $0xf1] sm:$0xff] %vm1798, %v2932
          %3009 = vst.msk [vmem:[%s2987 + $0xf9] sm:$0xff] %vm1798, %v2934
          %3010 = vst.msk [vmem:[%s2987 + $0x109] sm:$0xff] %vm1798, %v2936
          %3011 = vst.msk [vmem:[%s2987 + $0x111] sm:$0xff] %vm1798, %v2938
          %3012 = vst.msk [vmem:[%s2987 + $0x121] sm:$0xff] %vm1798, %v2940
          %3013 = vst.msk [vmem:[%s2987 + $0x129] sm:$0xff] %vm1798, %v2942
          %3014 = vst.msk [vmem:[%s2987 + $0x139] sm:$0xff] %vm1798, %v2944
          %3015 = vst.msk [vmem:[%s2987 + $0x141] sm:$0xff] %vm1798, %v2946
          %3016 = vst.msk [vmem:[%s2987 + $0x151] sm:$0xff] %vm1798, %v2948
          %3017 = vst.msk [vmem:[%s2987 + $0x159] sm:$0xff] %vm1798, %v2950
          %3018 = vst.msk [vmem:[%s2987 + $0x169] sm:$0xff] %vm1798, %v2952
          %3019 = vst.msk [vmem:[%s2987 + $0x171] sm:$0xff] %vm1798, %v2954
          %3020 = vst.msk [vmem:[%s272] sm:$0xff] %vm1798, %v2892
          %3021 = vst.msk [vmem:[%s272 + $0x8] sm:$0xff] %vm1798, %v2894
          %3022 = vst.msk [vmem:[%s272 + $0x10] sm:$0xff] %vm1798, %v2896
          %3023 = vst.msk [vmem:[%s272 + $0x18] sm:$0xff] %vm1798, %v2898
          %3024 = vst.msk [vmem:[%s272 + $0x20] sm:$0xff] %vm1798, %v2900
          %3025 = vst.msk [vmem:[%s272 + $0x28] sm:$0xff] %vm1798, %v2902
          %3026 = vst.msk [vmem:[%s272 + $0x30] sm:$0xff] %vm1798, %v2904
          %3027 = vst.msk [vmem:[%s272 + $0x38] sm:$0xff] %vm1798, %v2906
          %3028 = vst.msk [vmem:[%s272 + $0x40] sm:$0xff] %vm1798, %v2908
          %3029 = vst.msk [vmem:[%s272 + $0x48] sm:$0xff] %vm1798, %v2910
          %3030 = vst.msk [vmem:[%s272 + $0x50] sm:$0xff] %vm1798, %v2912
          %3031 = vst.msk [vmem:[%s272 + $0x58] sm:$0xff] %vm1798, %v2914
          %3032 = vst.msk [vmem:[%s272 + $0x60] sm:$0xff] %vm1798, %v2916
          %3033 = vst.msk [vmem:[%s272 + $0x68] sm:$0xff] %vm1798, %v2918
          %3034 = vst.msk [vmem:[%s272 + $0x70] sm:$0xff] %vm1798, %v2920
          %3035 = vst.msk [vmem:[%s272 + $0x78] sm:$0xff] %vm1798, %v2922
          %3036 = vst.msk [vmem:[%s272 + $0x80] sm:$0xff] %vm1798, %v2924
          %3037 = vst.msk [vmem:[%s272 + $0x88] sm:$0xff] %vm1798, %v2926
          %3038 = vst.msk [vmem:[%s272 + $0x90] sm:$0xff] %vm1798, %v2928
          %3039 = vst.msk [vmem:[%s272 + $0x98] sm:$0xff] %vm1798, %v2930
          %3040 = vst.msk [vmem:[%s272 + $0xa0] sm:$0xff] %vm1798, %v2932
          %3041 = vst.msk [vmem:[%s272 + $0xa8] sm:$0xff] %vm1798, %v2934
          %3042 = vst.msk [vmem:[%s272 + $0xb0] sm:$0xff] %vm1798, %v2936
          %3043 = vst.msk [vmem:[%s272 + $0xb8] sm:$0xff] %vm1798, %v2938
          %3044 = vst.msk [vmem:[%s272 + $0xc0] sm:$0xff] %vm1798, %v2940
          %3045 = vst.msk [vmem:[%s272 + $0xc8] sm:$0xff] %vm1798, %v2942
          %3046 = vst.msk [vmem:[%s272 + $0xd0] sm:$0xff] %vm1798, %v2944
          %3047 = vst.msk [vmem:[%s272 + $0xd8] sm:$0xff] %vm1798, %v2946
          %3048 = vst.msk [vmem:[%s272 + $0xe0] sm:$0xff] %vm1798, %v2948
          %3049 = vst.msk [vmem:[%s272 + $0xe8] sm:$0xff] %vm1798, %v2950
          %3050 = vst.msk [vmem:[%s272 + $0xf0] sm:$0xff] %vm1798, %v2952
          %3051 = vst.msk [vmem:[%s272 + $0xf8] sm:$0xff] %vm1798, %v2954
          %3052 = vst.msk [vmem:[%s279] sm:$0xff] %vm1798, %v2732
          %3053 = vst.msk [vmem:[%s279 + $0x8] sm:$0xff] %vm1798, %v2734
          %3054 = vst.msk [vmem:[%s279 + $0x10] sm:$0xff] %vm1798, %v2736
          %3055 = vst.msk [vmem:[%s279 + $0x18] sm:$0xff] %vm1798, %v2738
          %3056 = vst.msk [vmem:[%s279 + $0x20] sm:$0xff] %vm1798, %v2740
          %3057 = vst.msk [vmem:[%s279 + $0x28] sm:$0xff] %vm1798, %v2742
          %3058 = vst.msk [vmem:[%s279 + $0x30] sm:$0xff] %vm1798, %v2744
          %3059 = vst.msk [vmem:[%s279 + $0x38] sm:$0xff] %vm1798, %v2746
          %3060 = vst.msk [vmem:[%s279 + $0x40] sm:$0xff] %vm1798, %v2748
          %3061 = vst.msk [vmem:[%s279 + $0x48] sm:$0xff] %vm1798, %v2750
          %3062 = vst.msk [vmem:[%s279 + $0x50] sm:$0xff] %vm1798, %v2752
          %3063 = vst.msk [vmem:[%s279 + $0x58] sm:$0xff] %vm1798, %v2754
          %3064 = vst.msk [vmem:[%s279 + $0x60] sm:$0xff] %vm1798, %v2756
          %3065 = vst.msk [vmem:[%s279 + $0x68] sm:$0xff] %vm1798, %v2758
          %3066 = vst.msk [vmem:[%s279 + $0x70] sm:$0xff] %vm1798, %v2760
          %3067 = vst.msk [vmem:[%s279 + $0x78] sm:$0xff] %vm1798, %v2762
          %3068 = vst.msk [vmem:[%s279 + $0x80] sm:$0xff] %vm1798, %v2764
          %3069 = vst.msk [vmem:[%s279 + $0x88] sm:$0xff] %vm1798, %v2766
          %3070 = vst.msk [vmem:[%s279 + $0x90] sm:$0xff] %vm1798, %v2768
          %3071 = vst.msk [vmem:[%s279 + $0x98] sm:$0xff] %vm1798, %v2770
          %3072 = vst.msk [vmem:[%s279 + $0xa0] sm:$0xff] %vm1798, %v2772
          %3073 = vst.msk [vmem:[%s279 + $0xa8] sm:$0xff] %vm1798, %v2774
          %3074 = vst.msk [vmem:[%s279 + $0xb0] sm:$0xff] %vm1798, %v2776
          %3075 = vst.msk [vmem:[%s279 + $0xb8] sm:$0xff] %vm1798, %v2778
          %3076 = vst.msk [vmem:[%s279 + $0xc0] sm:$0xff] %vm1798, %v2780
          %3077 = vst.msk [vmem:[%s279 + $0xc8] sm:$0xff] %vm1798, %v2782
          %3078 = vst.msk [vmem:[%s279 + $0xd0] sm:$0xff] %vm1798, %v2784
          %3079 = vst.msk [vmem:[%s279 + $0xd8] sm:$0xff] %vm1798, %v2786
          %3080 = vst.msk [vmem:[%s279 + $0xe0] sm:$0xff] %vm1798, %v2788
          %3081 = vst.msk [vmem:[%s279 + $0xe8] sm:$0xff] %vm1798, %v2790
          %3082 = vst.msk [vmem:[%s279 + $0xf0] sm:$0xff] %vm1798, %v2792
          %3083 = vst.msk [vmem:[%s279 + $0xf8] sm:$0xff] %vm1798, %v2794
        $region48: #{tpu_custom_call.1} parent=39 // pred_fallthru
          _
        %p3084 = scmp.ne.s32.totalorder %s29, 0
        // Predicated region
        $region49: #{tpu_custom_call.1} parent=39 // pred_check
          %p3085 = pneg %p3084
        $region50: #{tpu_custom_call.1} parent=39 // pred_check_branch
          %3087 = sbr.rel (%p3085) target = $region52
        $region51: #{tpu_custom_call.1} parent=39 // pred_region
          %v3088 = vld [vmem:[#allocation3] sm:$0xff]
          %v3089 = vld [vmem:[#allocation3 + $0x8] sm:$0xff]
          %v3090 = vld [vmem:[#allocation3 + $0x10] sm:$0x3]
          %v3091 = vld [vmem:[#allocation3 + $0x18] sm:$0xff]
          %v3092 = vld [vmem:[#allocation3 + $0x20] sm:$0xff]
          %v3093 = vld [vmem:[#allocation3 + $0x28] sm:$0x3]
          %v3094 = vld [vmem:[#allocation3 + $0x30] sm:$0xff]
          %v3095 = vld [vmem:[#allocation3 + $0x38] sm:$0xff]
          %v3096 = vld [vmem:[#allocation3 + $0x40] sm:$0x3]
          %v3097 = vld [vmem:[#allocation3 + $0x48] sm:$0xff]
          %v3098 = vld [vmem:[#allocation3 + $0x50] sm:$0xff]
          %v3099 = vld [vmem:[#allocation3 + $0x58] sm:$0x3]
          %v3100 = vld [vmem:[#allocation3 + $0x60] sm:$0xff]
          %v3101 = vld [vmem:[#allocation3 + $0x68] sm:$0xff]
          %v3102 = vld [vmem:[#allocation3 + $0x70] sm:$0x3]
          %v3103 = vld [vmem:[#allocation3 + $0x78] sm:$0xff]
          %v3104 = vld [vmem:[#allocation3 + $0x80] sm:$0xff]
          %v3105 = vld [vmem:[#allocation3 + $0x88] sm:$0x3]
          %v3106 = vld [vmem:[#allocation3 + $0x90] sm:$0xff]
          %v3107 = vld [vmem:[#allocation3 + $0x98] sm:$0xff]
          %v3108 = vld [vmem:[#allocation3 + $0xa0] sm:$0x3]
          %v3109 = vld [vmem:[#allocation3 + $0xa8] sm:$0xff]
          %v3110 = vld [vmem:[#allocation3 + $0xb0] sm:$0xff]
          %v3111 = vld [vmem:[#allocation3 + $0xb8] sm:$0x3]
          %v3112 = vld [vmem:[#allocation3 + $0xc0] sm:$0xff]
          %v3113 = vld [vmem:[#allocation3 + $0xc8] sm:$0xff]
          %v3114 = vld [vmem:[#allocation3 + $0xd0] sm:$0x3]
          %v3115 = vld [vmem:[#allocation3 + $0xd8] sm:$0xff]
          %v3116 = vld [vmem:[#allocation3 + $0xe0] sm:$0xff]
          %v3117 = vld [vmem:[#allocation3 + $0xe8] sm:$0x3]
          %v3118 = vld [vmem:[#allocation3 + $0xf0] sm:$0xff]
          %v3119 = vld [vmem:[#allocation3 + $0xf8] sm:$0xff]
          %v3120 = vld [vmem:[#allocation3 + $0x100] sm:$0x3]
          %v3121 = vld [vmem:[#allocation3 + $0x108] sm:$0xff]
          %v3122 = vld [vmem:[#allocation3 + $0x110] sm:$0xff]
          %v3123 = vld [vmem:[#allocation3 + $0x118] sm:$0x3]
          %v3124 = vld [vmem:[#allocation3 + $0x120] sm:$0xff]
          %v3125 = vld [vmem:[#allocation3 + $0x128] sm:$0xff]
          %v3126 = vld [vmem:[#allocation3 + $0x130] sm:$0x3]
          %v3127 = vld [vmem:[#allocation3 + $0x138] sm:$0xff]
          %v3128 = vld [vmem:[#allocation3 + $0x140] sm:$0xff]
          %v3129 = vld [vmem:[#allocation3 + $0x148] sm:$0x3]
          %v3130 = vld [vmem:[#allocation3 + $0x150] sm:$0xff]
          %v3131 = vld [vmem:[#allocation3 + $0x158] sm:$0xff]
          %v3132 = vld [vmem:[#allocation3 + $0x160] sm:$0x3]
          %v3133 = vld [vmem:[#allocation3 + $0x168] sm:$0xff]
          %v3134 = vld [vmem:[#allocation3 + $0x170] sm:$0xff]
          %v3135 = vld [vmem:[#allocation3 + $0x178] sm:$0x3]
          %v3136 = vld [vmem:[#allocation3 + $0x180] sm:$0xff]
          %v3137 = vld [vmem:[#allocation3 + $0x188] sm:$0xff]
          %v3138 = vld [vmem:[#allocation3 + $0x190] sm:$0x3]
          %v3139 = vld [vmem:[#allocation3 + $0x198] sm:$0xff]
          %v3140 = vld [vmem:[#allocation3 + $0x1a0] sm:$0xff]
          %v3141 = vld [vmem:[#allocation3 + $0x1a8] sm:$0x3]
          %vm3190 = vcmask 1046528
          %v3191 = vrot.slane %v3088, 1
          %v3192 = vrot.slane %v3089, 1
          %v3193 = vsel %vm3190, %v3191, %v3192
          %v3194 = vrot.slane %v3090, 1
          %v3195 = vsel %vm3190, %v3192, %v3194
          %v3196 = vrot.slane %v3091, 1
          %v3197 = vrot.slane %v3092, 1
          %v3198 = vsel %vm3190, %v3196, %v3197
          %v3199 = vrot.slane %v3093, 1
          %v3200 = vsel %vm3190, %v3197, %v3199
          %v3201 = vrot.slane %v3094, 1
          %v3202 = vrot.slane %v3095, 1
          %v3203 = vsel %vm3190, %v3201, %v3202
          %v3204 = vrot.slane %v3096, 1
          %v3205 = vsel %vm3190, %v3202, %v3204
          %v3206 = vrot.slane %v3097, 1
          %v3207 = vrot.slane %v3098, 1
          %v3208 = vsel %vm3190, %v3206, %v3207
          %v3209 = vrot.slane %v3099, 1
          %v3210 = vsel %vm3190, %v3207, %v3209
          %v3211 = vrot.slane %v3100, 1
          %v3212 = vrot.slane %v3101, 1
          %v3213 = vsel %vm3190, %v3211, %v3212
          %v3214 = vrot.slane %v3102, 1
          %v3215 = vsel %vm3190, %v3212, %v3214
          %v3216 = vrot.slane %v3103, 1
          %v3217 = vrot.slane %v3104, 1
          %v3218 = vsel %vm3190, %v3216, %v3217
          %v3219 = vrot.slane %v3105, 1
          %v3220 = vsel %vm3190, %v3217, %v3219
          %v3221 = vrot.slane %v3106, 1
          %v3222 = vrot.slane %v3107, 1
          %v3223 = vsel %vm3190, %v3221, %v3222
          %v3224 = vrot.slane %v3108, 1
          %v3225 = vsel %vm3190, %v3222, %v3224
          %v3226 = vrot.slane %v3109, 1
          %v3227 = vrot.slane %v3110, 1
          %v3228 = vsel %vm3190, %v3226, %v3227
          %v3229 = vrot.slane %v3111, 1
          %v3230 = vsel %vm3190, %v3227, %v3229
          %v3231 = vrot.slane %v3112, 1
          %v3232 = vrot.slane %v3113, 1
          %v3233 = vsel %vm3190, %v3231, %v3232
          %v3234 = vrot.slane %v3114, 1
          %v3235 = vsel %vm3190, %v3232, %v3234
          %v3236 = vrot.slane %v3115, 1
          %v3237 = vrot.slane %v3116, 1
          %v3238 = vsel %vm3190, %v3236, %v3237
          %v3239 = vrot.slane %v3117, 1
          %v3240 = vsel %vm3190, %v3237, %v3239
          %v3241 = vrot.slane %v3118, 1
          %v3242 = vrot.slane %v3119, 1
          %v3243 = vsel %vm3190, %v3241, %v3242
          %v3244 = vrot.slane %v3120, 1
          %v3245 = vsel %vm3190, %v3242, %v3244
          %v3246 = vrot.slane %v3121, 1
          %v3247 = vrot.slane %v3122, 1
          %v3248 = vsel %vm3190, %v3246, %v3247
          %v3249 = vrot.slane %v3123, 1
          %v3250 = vsel %vm3190, %v3247, %v3249
          %v3251 = vrot.slane %v3124, 1
          %v3252 = vrot.slane %v3125, 1
          %v3253 = vsel %vm3190, %v3251, %v3252
          %v3254 = vrot.slane %v3126, 1
          %v3255 = vsel %vm3190, %v3252, %v3254
          %v3256 = vrot.slane %v3127, 1
          %v3257 = vrot.slane %v3128, 1
          %v3258 = vsel %vm3190, %v3256, %v3257
          %v3259 = vrot.slane %v3129, 1
          %v3260 = vsel %vm3190, %v3257, %v3259
          %v3261 = vrot.slane %v3130, 1
          %v3262 = vrot.slane %v3131, 1
          %v3263 = vsel %vm3190, %v3261, %v3262
          %v3264 = vrot.slane %v3132, 1
          %v3265 = vsel %vm3190, %v3262, %v3264
          %v3266 = vrot.slane %v3133, 1
          %v3267 = vrot.slane %v3134, 1
          %v3268 = vsel %vm3190, %v3266, %v3267
          %v3269 = vrot.slane %v3135, 1
          %v3270 = vsel %vm3190, %v3267, %v3269
          %v3271 = vrot.slane %v3088, 2
          %v3272 = vrot.slane %v3089, 2
          %v3273 = vsel %vm586, %v3271, %v3272
          %v3274 = vrot.slane %v3090, 2
          %v3275 = vsel %vm586, %v3272, %v3274
          %v3276 = vrot.slane %v3091, 2
          %v3277 = vrot.slane %v3092, 2
          %v3278 = vsel %vm586, %v3276, %v3277
          %v3279 = vrot.slane %v3093, 2
          %v3280 = vsel %vm586, %v3277, %v3279
          %v3281 = vrot.slane %v3094, 2
          %v3282 = vrot.slane %v3095, 2
          %v3283 = vsel %vm586, %v3281, %v3282
          %v3284 = vrot.slane %v3096, 2
          %v3285 = vsel %vm586, %v3282, %v3284
          %v3286 = vrot.slane %v3097, 2
          %v3287 = vrot.slane %v3098, 2
          %v3288 = vsel %vm586, %v3286, %v3287
          %v3289 = vrot.slane %v3099, 2
          %v3290 = vsel %vm586, %v3287, %v3289
          %v3291 = vrot.slane %v3100, 2
          %v3292 = vrot.slane %v3101, 2
          %v3293 = vsel %vm586, %v3291, %v3292
          %v3294 = vrot.slane %v3102, 2
          %v3295 = vsel %vm586, %v3292, %v3294
          %v3296 = vrot.slane %v3103, 2
          %v3297 = vrot.slane %v3104, 2
          %v3298 = vsel %vm586, %v3296, %v3297
          %v3299 = vrot.slane %v3105, 2
          %v3300 = vsel %vm586, %v3297, %v3299
          %v3301 = vrot.slane %v3106, 2
          %v3302 = vrot.slane %v3107, 2
          %v3303 = vsel %vm586, %v3301, %v3302
          %v3304 = vrot.slane %v3108, 2
          %v3305 = vsel %vm586, %v3302, %v3304
          %v3306 = vrot.slane %v3109, 2
          %v3307 = vrot.slane %v3110, 2
          %v3308 = vsel %vm586, %v3306, %v3307
          %v3309 = vrot.slane %v3111, 2
          %v3310 = vsel %vm586, %v3307, %v3309
          %v3311 = vrot.slane %v3112, 2
          %v3312 = vrot.slane %v3113, 2
          %v3313 = vsel %vm586, %v3311, %v3312
          %v3314 = vrot.slane %v3114, 2
          %v3315 = vsel %vm586, %v3312, %v3314
          %v3316 = vrot.slane %v3115, 2
          %v3317 = vrot.slane %v3116, 2
          %v3318 = vsel %vm586, %v3316, %v3317
          %v3319 = vrot.slane %v3117, 2
          %v3320 = vsel %vm586, %v3317, %v3319
          %v3321 = vrot.slane %v3118, 2
          %v3322 = vrot.slane %v3119, 2
          %v3323 = vsel %vm586, %v3321, %v3322
          %v3324 = vrot.slane %v3120, 2
          %v3325 = vsel %vm586, %v3322, %v3324
          %v3326 = vrot.slane %v3121, 2
          %v3327 = vrot.slane %v3122, 2
          %v3328 = vsel %vm586, %v3326, %v3327
          %v3329 = vrot.slane %v3123, 2
          %v3330 = vsel %vm586, %v3327, %v3329
          %v3331 = vrot.slane %v3124, 2
          %v3332 = vrot.slane %v3125, 2
          %v3333 = vsel %vm586, %v3331, %v3332
          %v3334 = vrot.slane %v3126, 2
          %v3335 = vsel %vm586, %v3332, %v3334
          %v3336 = vrot.slane %v3127, 2
          %v3337 = vrot.slane %v3128, 2
          %v3338 = vsel %vm586, %v3336, %v3337
          %v3339 = vrot.slane %v3129, 2
          %v3340 = vsel %vm586, %v3337, %v3339
          %v3341 = vrot.slane %v3130, 2
          %v3342 = vrot.slane %v3131, 2
          %v3343 = vsel %vm586, %v3341, %v3342
          %v3344 = vrot.slane %v3132, 2
          %v3345 = vsel %vm586, %v3342, %v3344
          %v3346 = vrot.slane %v3133, 2
          %v3347 = vrot.slane %v3134, 2
          %v3348 = vsel %vm586, %v3346, %v3347
          %v3349 = vrot.slane %v3135, 2
          %v3350 = vsel %vm586, %v3347, %v3349
          %v3354 = vrot.slane %v3136, 1
          %v3355 = vrot.slane %v3137, 1
          %v3356 = vsel %vm3190, %v3354, %v3355
          %v3357 = vrot.slane %v3138, 1
          %v3358 = vsel %vm3190, %v3355, %v3357
          %v3391 = vrot.slane %v3136, 2
          %v3392 = vrot.slane %v3137, 2
          %v3393 = vsel %vm586, %v3391, %v3392
          %v3394 = vrot.slane %v3138, 2
          %v3395 = vsel %vm586, %v3392, %v3394
          %v3399 = vrot.slane %v3139, 1
          %v3400 = vrot.slane %v3140, 1
          %v3401 = vsel %vm3190, %v3399, %v3400
          %v3402 = vrot.slane %v3141, 1
          %v3403 = vsel %vm3190, %v3400, %v3402
          %v3404 = vrot.slane %v3139, 2
          %v3405 = vrot.slane %v3140, 2
          %v3406 = vsel %vm586, %v3404, %v3405
          %v3407 = vrot.slane %v3141, 2
          %v3408 = vsel %vm586, %v3405, %v3407
          %3441 = vrot.lane.b32.xlu0 %v3193, 32
          %v3442 = vpop.permute.xlu0 %3441
          %3443 = vrot.lane.b32.xlu0 %v3195, 32
          %v3444 = vpop.permute.xlu0 %3443
          %3445 = vrot.lane.b32.xlu0 %v3198, 32
          %v3446 = vpop.permute.xlu0 %3445
          %3447 = vrot.lane.b32.xlu0 %v3200, 32
          %v3448 = vpop.permute.xlu0 %3447
          %3449 = vrot.lane.b32.xlu0 %v3203, 32
          %v3450 = vpop.permute.xlu0 %3449
          %3451 = vrot.lane.b32.xlu0 %v3205, 32
          %v3452 = vpop.permute.xlu0 %3451
          %3453 = vrot.lane.b32.xlu0 %v3208, 32
          %v3454 = vpop.permute.xlu0 %3453
          %3455 = vrot.lane.b32.xlu0 %v3210, 32
          %v3456 = vpop.permute.xlu0 %3455
          %3457 = vrot.lane.b32.xlu0 %v3213, 32
          %v3458 = vpop.permute.xlu0 %3457
          %3459 = vrot.lane.b32.xlu0 %v3215, 32
          %v3460 = vpop.permute.xlu0 %3459
          %3461 = vrot.lane.b32.xlu0 %v3218, 32
          %v3462 = vpop.permute.xlu0 %3461
          %3463 = vrot.lane.b32.xlu0 %v3220, 32
          %v3464 = vpop.permute.xlu0 %3463
          %3465 = vrot.lane.b32.xlu0 %v3223, 32
          %v3466 = vpop.permute.xlu0 %3465
          %3467 = vrot.lane.b32.xlu0 %v3225, 32
          %v3468 = vpop.permute.xlu0 %3467
          %3469 = vrot.lane.b32.xlu0 %v3228, 32
          %v3470 = vpop.permute.xlu0 %3469
          %3471 = vrot.lane.b32.xlu0 %v3230, 32
          %v3472 = vpop.permute.xlu0 %3471
          %3473 = vrot.lane.b32.xlu0 %v3233, 32
          %v3474 = vpop.permute.xlu0 %3473
          %3475 = vrot.lane.b32.xlu0 %v3235, 32
          %v3476 = vpop.permute.xlu0 %3475
          %3477 = vrot.lane.b32.xlu0 %v3238, 32
          %v3478 = vpop.permute.xlu0 %3477
          %3479 = vrot.lane.b32.xlu0 %v3240, 32
          %v3480 = vpop.permute.xlu0 %3479
          %3481 = vrot.lane.b32.xlu0 %v3243, 32
          %v3482 = vpop.permute.xlu0 %3481
          %3483 = vrot.lane.b32.xlu0 %v3245, 32
          %v3484 = vpop.permute.xlu0 %3483
          %3485 = vrot.lane.b32.xlu0 %v3248, 32
          %v3486 = vpop.permute.xlu0 %3485
          %3487 = vrot.lane.b32.xlu0 %v3250, 32
          %v3488 = vpop.permute.xlu0 %3487
          %3489 = vrot.lane.b32.xlu0 %v3253, 32
          %v3490 = vpop.permute.xlu0 %3489
          %3491 = vrot.lane.b32.xlu0 %v3255, 32
          %v3492 = vpop.permute.xlu0 %3491
          %3493 = vrot.lane.b32.xlu0 %v3258, 32
          %v3494 = vpop.permute.xlu0 %3493
          %3495 = vrot.lane.b32.xlu0 %v3260, 32
          %v3496 = vpop.permute.xlu0 %3495
          %3497 = vrot.lane.b32.xlu0 %v3263, 32
          %v3498 = vpop.permute.xlu0 %3497
          %3499 = vrot.lane.b32.xlu0 %v3265, 32
          %v3500 = vpop.permute.xlu0 %3499
          %3501 = vrot.lane.b32.xlu0 %v3268, 32
          %v3502 = vpop.permute.xlu0 %3501
          %3503 = vrot.lane.b32.xlu0 %v3270, 32
          %v3504 = vpop.permute.xlu0 %3503
          %3537 = vrot.lane.b32.xlu0 %v3273, 64
          %v3538 = vpop.permute.xlu0 %3537
          %3539 = vrot.lane.b32.xlu0 %v3275, 64
          %v3540 = vpop.permute.xlu0 %3539
          %3541 = vrot.lane.b32.xlu0 %v3278, 64
          %v3542 = vpop.permute.xlu0 %3541
          %3543 = vrot.lane.b32.xlu0 %v3280, 64
          %v3544 = vpop.permute.xlu0 %3543
          %3545 = vrot.lane.b32.xlu0 %v3283, 64
          %v3546 = vpop.permute.xlu0 %3545
          %3547 = vrot.lane.b32.xlu0 %v3285, 64
          %v3548 = vpop.permute.xlu0 %3547
          %3549 = vrot.lane.b32.xlu0 %v3288, 64
          %v3550 = vpop.permute.xlu0 %3549
          %3551 = vrot.lane.b32.xlu0 %v3290, 64
          %v3552 = vpop.permute.xlu0 %3551
          %3553 = vrot.lane.b32.xlu0 %v3293, 64
          %v3554 = vpop.permute.xlu0 %3553
          %3555 = vrot.lane.b32.xlu0 %v3295, 64
          %v3556 = vpop.permute.xlu0 %3555
          %3557 = vrot.lane.b32.xlu0 %v3298, 64
          %v3558 = vpop.permute.xlu0 %3557
          %3559 = vrot.lane.b32.xlu0 %v3300, 64
          %v3560 = vpop.permute.xlu0 %3559
          %3561 = vrot.lane.b32.xlu0 %v3303, 64
          %v3562 = vpop.permute.xlu0 %3561
          %3563 = vrot.lane.b32.xlu0 %v3305, 64
          %v3564 = vpop.permute.xlu0 %3563
          %3565 = vrot.lane.b32.xlu0 %v3308, 64
          %v3566 = vpop.permute.xlu0 %3565
          %3567 = vrot.lane.b32.xlu0 %v3310, 64
          %v3568 = vpop.permute.xlu0 %3567
          %3569 = vrot.lane.b32.xlu0 %v3313, 64
          %v3570 = vpop.permute.xlu0 %3569
          %3571 = vrot.lane.b32.xlu0 %v3315, 64
          %v3572 = vpop.permute.xlu0 %3571
          %3573 = vrot.lane.b32.xlu0 %v3318, 64
          %v3574 = vpop.permute.xlu0 %3573
          %3575 = vrot.lane.b32.xlu0 %v3320, 64
          %v3576 = vpop.permute.xlu0 %3575
          %3577 = vrot.lane.b32.xlu0 %v3323, 64
          %v3578 = vpop.permute.xlu0 %3577
          %3579 = vrot.lane.b32.xlu0 %v3325, 64
          %v3580 = vpop.permute.xlu0 %3579
          %3581 = vrot.lane.b32.xlu0 %v3328, 64
          %v3582 = vpop.permute.xlu0 %3581
          %3583 = vrot.lane.b32.xlu0 %v3330, 64
          %v3584 = vpop.permute.xlu0 %3583
          %3585 = vrot.lane.b32.xlu0 %v3333, 64
          %v3586 = vpop.permute.xlu0 %3585
          %3587 = vrot.lane.b32.xlu0 %v3335, 64
          %v3588 = vpop.permute.xlu0 %3587
          %3589 = vrot.lane.b32.xlu0 %v3338, 64
          %v3590 = vpop.permute.xlu0 %3589
          %3591 = vrot.lane.b32.xlu0 %v3340, 64
          %v3592 = vpop.permute.xlu0 %3591
          %3593 = vrot.lane.b32.xlu0 %v3343, 64
          %v3594 = vpop.permute.xlu0 %3593
          %3595 = vrot.lane.b32.xlu0 %v3345, 64
          %v3596 = vpop.permute.xlu0 %3595
          %3597 = vrot.lane.b32.xlu0 %v3348, 64
          %v3598 = vpop.permute.xlu0 %3597
          %3599 = vrot.lane.b32.xlu0 %v3350, 64
          %v3600 = vpop.permute.xlu0 %3599
          %3633 = vrot.lane.b32.xlu0 %v3091, 96
          %v3634 = vpop.permute.xlu0 %3633
          %3635 = vrot.lane.b32.xlu0 %v3092, 96
          %v3636 = vpop.permute.xlu0 %3635
          %3637 = vrot.lane.b32.xlu0 %v3094, 96
          %v3638 = vpop.permute.xlu0 %3637
          %3639 = vrot.lane.b32.xlu0 %v3095, 96
          %v3640 = vpop.permute.xlu0 %3639
          %3641 = vrot.lane.b32.xlu0 %v3097, 96
          %v3642 = vpop.permute.xlu0 %3641
          %3643 = vrot.lane.b32.xlu0 %v3098, 96
          %v3644 = vpop.permute.xlu0 %3643
          %3645 = vrot.lane.b32.xlu0 %v3100, 96
          %v3646 = vpop.permute.xlu0 %3645
          %3647 = vrot.lane.b32.xlu0 %v3101, 96
          %v3648 = vpop.permute.xlu0 %3647
          %3649 = vrot.lane.b32.xlu0 %v3103, 96
          %v3650 = vpop.permute.xlu0 %3649
          %3651 = vrot.lane.b32.xlu0 %v3104, 96
          %v3652 = vpop.permute.xlu0 %3651
          %3653 = vrot.lane.b32.xlu0 %v3106, 96
          %v3654 = vpop.permute.xlu0 %3653
          %3655 = vrot.lane.b32.xlu0 %v3107, 96
          %v3656 = vpop.permute.xlu0 %3655
          %3657 = vrot.lane.b32.xlu0 %v3109, 96
          %v3658 = vpop.permute.xlu0 %3657
          %3659 = vrot.lane.b32.xlu0 %v3110, 96
          %v3660 = vpop.permute.xlu0 %3659
          %3661 = vrot.lane.b32.xlu0 %v3112, 96
          %v3662 = vpop.permute.xlu0 %3661
          %3663 = vrot.lane.b32.xlu0 %v3113, 96
          %v3664 = vpop.permute.xlu0 %3663
          %3665 = vrot.lane.b32.xlu0 %v3115, 96
          %v3666 = vpop.permute.xlu0 %3665
          %3667 = vrot.lane.b32.xlu0 %v3116, 96
          %v3668 = vpop.permute.xlu0 %3667
          %3669 = vrot.lane.b32.xlu0 %v3118, 96
          %v3670 = vpop.permute.xlu0 %3669
          %3671 = vrot.lane.b32.xlu0 %v3119, 96
          %v3672 = vpop.permute.xlu0 %3671
          %3673 = vrot.lane.b32.xlu0 %v3121, 96
          %v3674 = vpop.permute.xlu0 %3673
          %3675 = vrot.lane.b32.xlu0 %v3122, 96
          %v3676 = vpop.permute.xlu0 %3675
          %3677 = vrot.lane.b32.xlu0 %v3124, 96
          %v3678 = vpop.permute.xlu0 %3677
          %3679 = vrot.lane.b32.xlu0 %v3125, 96
          %v3680 = vpop.permute.xlu0 %3679
          %3681 = vrot.lane.b32.xlu0 %v3127, 96
          %v3682 = vpop.permute.xlu0 %3681
          %3683 = vrot.lane.b32.xlu0 %v3128, 96
          %v3684 = vpop.permute.xlu0 %3683
          %3685 = vrot.lane.b32.xlu0 %v3130, 96
          %v3686 = vpop.permute.xlu0 %3685
          %3687 = vrot.lane.b32.xlu0 %v3131, 96
          %v3688 = vpop.permute.xlu0 %3687
          %3689 = vrot.lane.b32.xlu0 %v3133, 96
          %v3690 = vpop.permute.xlu0 %3689
          %3691 = vrot.lane.b32.xlu0 %v3134, 96
          %v3692 = vpop.permute.xlu0 %3691
          %3693 = vrot.lane.b32.xlu0 %v3136, 96
          %v3694 = vpop.permute.xlu0 %3693
          %3695 = vrot.lane.b32.xlu0 %v3137, 96
          %v3696 = vpop.permute.xlu0 %3695
          %3729 = vrot.lane.b32.xlu0 %v3278, 32
          %v3730 = vpop.permute.xlu0 %3729
          %3731 = vrot.lane.b32.xlu0 %v3280, 32
          %v3732 = vpop.permute.xlu0 %3731
          %3733 = vrot.lane.b32.xlu0 %v3283, 32
          %v3734 = vpop.permute.xlu0 %3733
          %3735 = vrot.lane.b32.xlu0 %v3285, 32
          %v3736 = vpop.permute.xlu0 %3735
          %3737 = vrot.lane.b32.xlu0 %v3288, 32
          %v3738 = vpop.permute.xlu0 %3737
          %3739 = vrot.lane.b32.xlu0 %v3290, 32
          %v3740 = vpop.permute.xlu0 %3739
          %3741 = vrot.lane.b32.xlu0 %v3293, 32
          %v3742 = vpop.permute.xlu0 %3741
          %3743 = vrot.lane.b32.xlu0 %v3295, 32
          %v3744 = vpop.permute.xlu0 %3743
          %3745 = vrot.lane.b32.xlu0 %v3298, 32
          %v3746 = vpop.permute.xlu0 %3745
          %3747 = vrot.lane.b32.xlu0 %v3300, 32
          %v3748 = vpop.permute.xlu0 %3747
          %3749 = vrot.lane.b32.xlu0 %v3303, 32
          %v3750 = vpop.permute.xlu0 %3749
          %3751 = vrot.lane.b32.xlu0 %v3305, 32
          %v3752 = vpop.permute.xlu0 %3751
          %3753 = vrot.lane.b32.xlu0 %v3308, 32
          %v3754 = vpop.permute.xlu0 %3753
          %3755 = vrot.lane.b32.xlu0 %v3310, 32
          %v3756 = vpop.permute.xlu0 %3755
          %3757 = vrot.lane.b32.xlu0 %v3313, 32
          %v3758 = vpop.permute.xlu0 %3757
          %3759 = vrot.lane.b32.xlu0 %v3315, 32
          %v3760 = vpop.permute.xlu0 %3759
          %3761 = vrot.lane.b32.xlu0 %v3318, 32
          %v3762 = vpop.permute.xlu0 %3761
          %3763 = vrot.lane.b32.xlu0 %v3320, 32
          %v3764 = vpop.permute.xlu0 %3763
          %3765 = vrot.lane.b32.xlu0 %v3323, 32
          %v3766 = vpop.permute.xlu0 %3765
          %3767 = vrot.lane.b32.xlu0 %v3325, 32
          %v3768 = vpop.permute.xlu0 %3767
          %3769 = vrot.lane.b32.xlu0 %v3328, 32
          %v3770 = vpop.permute.xlu0 %3769
          %3771 = vrot.lane.b32.xlu0 %v3330, 32
          %v3772 = vpop.permute.xlu0 %3771
          %3773 = vrot.lane.b32.xlu0 %v3333, 32
          %v3774 = vpop.permute.xlu0 %3773
          %3775 = vrot.lane.b32.xlu0 %v3335, 32
          %v3776 = vpop.permute.xlu0 %3775
          %3777 = vrot.lane.b32.xlu0 %v3338, 32
          %v3778 = vpop.permute.xlu0 %3777
          %3779 = vrot.lane.b32.xlu0 %v3340, 32
          %v3780 = vpop.permute.xlu0 %3779
          %3781 = vrot.lane.b32.xlu0 %v3343, 32
          %v3782 = vpop.permute.xlu0 %3781
          %3783 = vrot.lane.b32.xlu0 %v3345, 32
          %v3784 = vpop.permute.xlu0 %3783
          %3785 = vrot.lane.b32.xlu0 %v3348, 32
          %v3786 = vpop.permute.xlu0 %3785
          %3787 = vrot.lane.b32.xlu0 %v3350, 32
          %v3788 = vpop.permute.xlu0 %3787
          %3789 = vrot.lane.b32.xlu0 %v3393, 32
          %v3790 = vpop.permute.xlu0 %3789
          %3791 = vrot.lane.b32.xlu0 %v3395, 32
          %v3792 = vpop.permute.xlu0 %3791
          %3825 = vrot.lane.b32.xlu0 %v3094, 64
          %v3826 = vpop.permute.xlu0 %3825
          %3827 = vrot.lane.b32.xlu0 %v3095, 64
          %v3828 = vpop.permute.xlu0 %3827
          %3829 = vrot.lane.b32.xlu0 %v3097, 64
          %v3830 = vpop.permute.xlu0 %3829
          %3831 = vrot.lane.b32.xlu0 %v3098, 64
          %v3832 = vpop.permute.xlu0 %3831
          %3833 = vrot.lane.b32.xlu0 %v3100, 64
          %v3834 = vpop.permute.xlu0 %3833
          %3835 = vrot.lane.b32.xlu0 %v3101, 64
          %v3836 = vpop.permute.xlu0 %3835
          %3837 = vrot.lane.b32.xlu0 %v3103, 64
          %v3838 = vpop.permute.xlu0 %3837
          %3839 = vrot.lane.b32.xlu0 %v3104, 64
          %v3840 = vpop.permute.xlu0 %3839
          %3841 = vrot.lane.b32.xlu0 %v3106, 64
          %v3842 = vpop.permute.xlu0 %3841
          %3843 = vrot.lane.b32.xlu0 %v3107, 64
          %v3844 = vpop.permute.xlu0 %3843
          %3845 = vrot.lane.b32.xlu0 %v3109, 64
          %v3846 = vpop.permute.xlu0 %3845
          %3847 = vrot.lane.b32.xlu0 %v3110, 64
          %v3848 = vpop.permute.xlu0 %3847
          %3849 = vrot.lane.b32.xlu0 %v3112, 64
          %v3850 = vpop.permute.xlu0 %3849
          %3851 = vrot.lane.b32.xlu0 %v3113, 64
          %v3852 = vpop.permute.xlu0 %3851
          %3853 = vrot.lane.b32.xlu0 %v3115, 64
          %v3854 = vpop.permute.xlu0 %3853
          %3855 = vrot.lane.b32.xlu0 %v3116, 64
          %v3856 = vpop.permute.xlu0 %3855
          %3857 = vrot.lane.b32.xlu0 %v3118, 64
          %v3858 = vpop.permute.xlu0 %3857
          %3859 = vrot.lane.b32.xlu0 %v3119, 64
          %v3860 = vpop.permute.xlu0 %3859
          %3861 = vrot.lane.b32.xlu0 %v3121, 64
          %v3862 = vpop.permute.xlu0 %3861
          %3863 = vrot.lane.b32.xlu0 %v3122, 64
          %v3864 = vpop.permute.xlu0 %3863
          %3865 = vrot.lane.b32.xlu0 %v3124, 64
          %v3866 = vpop.permute.xlu0 %3865
          %3867 = vrot.lane.b32.xlu0 %v3125, 64
          %v3868 = vpop.permute.xlu0 %3867
          %3869 = vrot.lane.b32.xlu0 %v3127, 64
          %v3870 = vpop.permute.xlu0 %3869
          %3871 = vrot.lane.b32.xlu0 %v3128, 64
          %v3872 = vpop.permute.xlu0 %3871
          %3873 = vrot.lane.b32.xlu0 %v3130, 64
          %v3874 = vpop.permute.xlu0 %3873
          %3875 = vrot.lane.b32.xlu0 %v3131, 64
          %v3876 = vpop.permute.xlu0 %3875
          %3877 = vrot.lane.b32.xlu0 %v3133, 64
          %v3878 = vpop.permute.xlu0 %3877
          %3879 = vrot.lane.b32.xlu0 %v3134, 64
          %v3880 = vpop.permute.xlu0 %3879
          %3881 = vrot.lane.b32.xlu0 %v3136, 64
          %v3882 = vpop.permute.xlu0 %3881
          %3883 = vrot.lane.b32.xlu0 %v3137, 64
          %v3884 = vpop.permute.xlu0 %3883
          %3885 = vrot.lane.b32.xlu0 %v3139, 64
          %v3886 = vpop.permute.xlu0 %3885
          %3887 = vrot.lane.b32.xlu0 %v3140, 64
          %v3888 = vpop.permute.xlu0 %3887
          %3921 = vrot.lane.b32.xlu0 %v3203, 96
          %v3922 = vpop.permute.xlu0 %3921
          %3923 = vrot.lane.b32.xlu0 %v3205, 96
          %v3924 = vpop.permute.xlu0 %3923
          %3925 = vrot.lane.b32.xlu0 %v3208, 96
          %v3926 = vpop.permute.xlu0 %3925
          %3927 = vrot.lane.b32.xlu0 %v3210, 96
          %v3928 = vpop.permute.xlu0 %3927
          %3929 = vrot.lane.b32.xlu0 %v3213, 96
          %v3930 = vpop.permute.xlu0 %3929
          %3931 = vrot.lane.b32.xlu0 %v3215, 96
          %v3932 = vpop.permute.xlu0 %3931
          %3933 = vrot.lane.b32.xlu0 %v3218, 96
          %v3934 = vpop.permute.xlu0 %3933
          %3935 = vrot.lane.b32.xlu0 %v3220, 96
          %v3936 = vpop.permute.xlu0 %3935
          %3937 = vrot.lane.b32.xlu0 %v3223, 96
          %v3938 = vpop.permute.xlu0 %3937
          %3939 = vrot.lane.b32.xlu0 %v3225, 96
          %v3940 = vpop.permute.xlu0 %3939
          %3941 = vrot.lane.b32.xlu0 %v3228, 96
          %v3942 = vpop.permute.xlu0 %3941
          %3943 = vrot.lane.b32.xlu0 %v3230, 96
          %v3944 = vpop.permute.xlu0 %3943
          %3945 = vrot.lane.b32.xlu0 %v3233, 96
          %v3946 = vpop.permute.xlu0 %3945
          %3947 = vrot.lane.b32.xlu0 %v3235, 96
          %v3948 = vpop.permute.xlu0 %3947
          %3949 = vrot.lane.b32.xlu0 %v3238, 96
          %v3950 = vpop.permute.xlu0 %3949
          %3951 = vrot.lane.b32.xlu0 %v3240, 96
          %v3952 = vpop.permute.xlu0 %3951
          %3953 = vrot.lane.b32.xlu0 %v3243, 96
          %v3954 = vpop.permute.xlu0 %3953
          %3955 = vrot.lane.b32.xlu0 %v3245, 96
          %v3956 = vpop.permute.xlu0 %3955
          %3957 = vrot.lane.b32.xlu0 %v3248, 96
          %v3958 = vpop.permute.xlu0 %3957
          %3959 = vrot.lane.b32.xlu0 %v3250, 96
          %v3960 = vpop.permute.xlu0 %3959
          %3961 = vrot.lane.b32.xlu0 %v3253, 96
          %v3962 = vpop.permute.xlu0 %3961
          %3963 = vrot.lane.b32.xlu0 %v3255, 96
          %v3964 = vpop.permute.xlu0 %3963
          %3965 = vrot.lane.b32.xlu0 %v3258, 96
          %v3966 = vpop.permute.xlu0 %3965
          %3967 = vrot.lane.b32.xlu0 %v3260, 96
          %v3968 = vpop.permute.xlu0 %3967
          %3969 = vrot.lane.b32.xlu0 %v3263, 96
          %v3970 = vpop.permute.xlu0 %3969
          %3971 = vrot.lane.b32.xlu0 %v3265, 96
          %v3972 = vpop.permute.xlu0 %3971
          %3973 = vrot.lane.b32.xlu0 %v3268, 96
          %v3974 = vpop.permute.xlu0 %3973
          %3975 = vrot.lane.b32.xlu0 %v3270, 96
          %v3976 = vpop.permute.xlu0 %3975
          %3977 = vrot.lane.b32.xlu0 %v3356, 96
          %v3978 = vpop.permute.xlu0 %3977
          %3979 = vrot.lane.b32.xlu0 %v3358, 96
          %v3980 = vpop.permute.xlu0 %3979
          %3981 = vrot.lane.b32.xlu0 %v3401, 96
          %v3982 = vpop.permute.xlu0 %3981
          %3983 = vrot.lane.b32.xlu0 %v3403, 96
          %v3984 = vpop.permute.xlu0 %3983
          %v4017 = vsel %vm1798, %v3088, %v3442
          %v4018 = vsel %vm1798, %v3089, %v3444
          %v4019 = vsel %vm1798, %v3091, %v3446
          %v4020 = vsel %vm1798, %v3092, %v3448
          %v4021 = vsel %vm1798, %v3094, %v3450
          %v4022 = vsel %vm1798, %v3095, %v3452
          %v4023 = vsel %vm1798, %v3097, %v3454
          %v4024 = vsel %vm1798, %v3098, %v3456
          %v4025 = vsel %vm1798, %v3100, %v3458
          %v4026 = vsel %vm1798, %v3101, %v3460
          %v4027 = vsel %vm1798, %v3103, %v3462
          %v4028 = vsel %vm1798, %v3104, %v3464
          %v4029 = vsel %vm1798, %v3106, %v3466
          %v4030 = vsel %vm1798, %v3107, %v3468
          %v4031 = vsel %vm1798, %v3109, %v3470
          %v4032 = vsel %vm1798, %v3110, %v3472
          %v4033 = vsel %vm1798, %v3112, %v3474
          %v4034 = vsel %vm1798, %v3113, %v3476
          %v4035 = vsel %vm1798, %v3115, %v3478
          %v4036 = vsel %vm1798, %v3116, %v3480
          %v4037 = vsel %vm1798, %v3118, %v3482
          %v4038 = vsel %vm1798, %v3119, %v3484
          %v4039 = vsel %vm1798, %v3121, %v3486
          %v4040 = vsel %vm1798, %v3122, %v3488
          %v4041 = vsel %vm1798, %v3124, %v3490
          %v4042 = vsel %vm1798, %v3125, %v3492
          %v4043 = vsel %vm1798, %v3127, %v3494
          %v4044 = vsel %vm1798, %v3128, %v3496
          %v4045 = vsel %vm1798, %v3130, %v3498
          %v4046 = vsel %vm1798, %v3131, %v3500
          %v4047 = vsel %vm1798, %v3133, %v3502
          %v4048 = vsel %vm1798, %v3134, %v3504
          %vm4049 = vcmask 523264
          %v4050 = vsel %vm4049, %v4017, %v3538
          %v4051 = vsel %vm4049, %v4018, %v3540
          %v4052 = vsel %vm4049, %v4019, %v3542
          %v4053 = vsel %vm4049, %v4020, %v3544
          %v4054 = vsel %vm4049, %v4021, %v3546
          %v4055 = vsel %vm4049, %v4022, %v3548
          %v4056 = vsel %vm4049, %v4023, %v3550
          %v4057 = vsel %vm4049, %v4024, %v3552
          %v4058 = vsel %vm4049, %v4025, %v3554
          %v4059 = vsel %vm4049, %v4026, %v3556
          %v4060 = vsel %vm4049, %v4027, %v3558
          %v4061 = vsel %vm4049, %v4028, %v3560
          %v4062 = vsel %vm4049, %v4029, %v3562
          %v4063 = vsel %vm4049, %v4030, %v3564
          %v4064 = vsel %vm4049, %v4031, %v3566
          %v4065 = vsel %vm4049, %v4032, %v3568
          %v4066 = vsel %vm4049, %v4033, %v3570
          %v4067 = vsel %vm4049, %v4034, %v3572
          %v4068 = vsel %vm4049, %v4035, %v3574
          %v4069 = vsel %vm4049, %v4036, %v3576
          %v4070 = vsel %vm4049, %v4037, %v3578
          %v4071 = vsel %vm4049, %v4038, %v3580
          %v4072 = vsel %vm4049, %v4039, %v3582
          %v4073 = vsel %vm4049, %v4040, %v3584
          %v4074 = vsel %vm4049, %v4041, %v3586
          %v4075 = vsel %vm4049, %v4042, %v3588
          %v4076 = vsel %vm4049, %v4043, %v3590
          %v4077 = vsel %vm4049, %v4044, %v3592
          %v4078 = vsel %vm4049, %v4045, %v3594
          %v4079 = vsel %vm4049, %v4046, %v3596
          %v4080 = vsel %vm4049, %v4047, %v3598
          %v4081 = vsel %vm4049, %v4048, %v3600
          %vm4082 = vcmask 785408
          %v4083 = vsel %vm4082, %v4050, %v3634
          %v4084 = vsel %vm4082, %v4051, %v3636
          %v4085 = vsel %vm4082, %v4052, %v3638
          %v4086 = vsel %vm4082, %v4053, %v3640
          %v4087 = vsel %vm4082, %v4054, %v3642
          %v4088 = vsel %vm4082, %v4055, %v3644
          %v4089 = vsel %vm4082, %v4056, %v3646
          %v4090 = vsel %vm4082, %v4057, %v3648
          %v4091 = vsel %vm4082, %v4058, %v3650
          %v4092 = vsel %vm4082, %v4059, %v3652
          %v4093 = vsel %vm4082, %v4060, %v3654
          %v4094 = vsel %vm4082, %v4061, %v3656
          %v4095 = vsel %vm4082, %v4062, %v3658
          %v4096 = vsel %vm4082, %v4063, %v3660
          %v4097 = vsel %vm4082, %v4064, %v3662
          %v4098 = vsel %vm4082, %v4065, %v3664
          %v4099 = vsel %vm4082, %v4066, %v3666
          %v4100 = vsel %vm4082, %v4067, %v3668
          %v4101 = vsel %vm4082, %v4068, %v3670
          %v4102 = vsel %vm4082, %v4069, %v3672
          %v4103 = vsel %vm4082, %v4070, %v3674
          %v4104 = vsel %vm4082, %v4071, %v3676
          %v4105 = vsel %vm4082, %v4072, %v3678
          %v4106 = vsel %vm4082, %v4073, %v3680
          %v4107 = vsel %vm4082, %v4074, %v3682
          %v4108 = vsel %vm4082, %v4075, %v3684
          %v4109 = vsel %vm4082, %v4076, %v3686
          %v4110 = vsel %vm4082, %v4077, %v3688
          %v4111 = vsel %vm4082, %v4078, %v3690
          %v4112 = vsel %vm4082, %v4079, %v3692
          %v4113 = vsel %vm4082, %v4080, %v3694
          %v4114 = vsel %vm4082, %v4081, %v3696
          %v4115 = vsel %vm1798, %v3198, %v3730
          %v4116 = vsel %vm1798, %v3200, %v3732
          %v4117 = vsel %vm1798, %v3203, %v3734
          %v4118 = vsel %vm1798, %v3205, %v3736
          %v4119 = vsel %vm1798, %v3208, %v3738
          %v4120 = vsel %vm1798, %v3210, %v3740
          %v4121 = vsel %vm1798, %v3213, %v3742
          %v4122 = vsel %vm1798, %v3215, %v3744
          %v4123 = vsel %vm1798, %v3218, %v3746
          %v4124 = vsel %vm1798, %v3220, %v3748
          %v4125 = vsel %vm1798, %v3223, %v3750
          %v4126 = vsel %vm1798, %v3225, %v3752
          %v4127 = vsel %vm1798, %v3228, %v3754
          %v4128 = vsel %vm1798, %v3230, %v3756
          %v4129 = vsel %vm1798, %v3233, %v3758
          %v4130 = vsel %vm1798, %v3235, %v3760
          %v4131 = vsel %vm1798, %v3238, %v3762
          %v4132 = vsel %vm1798, %v3240, %v3764
          %v4133 = vsel %vm1798, %v3243, %v3766
          %v4134 = vsel %vm1798, %v3245, %v3768
          %v4135 = vsel %vm1798, %v3248, %v3770
          %v4136 = vsel %vm1798, %v3250, %v3772
          %v4137 = vsel %vm1798, %v3253, %v3774
          %v4138 = vsel %vm1798, %v3255, %v3776
          %v4139 = vsel %vm1798, %v3258, %v3778
          %v4140 = vsel %vm1798, %v3260, %v3780
          %v4141 = vsel %vm1798, %v3263, %v3782
          %v4142 = vsel %vm1798, %v3265, %v3784
          %v4143 = vsel %vm1798, %v3268, %v3786
          %v4144 = vsel %vm1798, %v3270, %v3788
          %v4145 = vsel %vm1798, %v3356, %v3790
          %v4146 = vsel %vm1798, %v3358, %v3792
          %v4147 = vsel %vm4049, %v4115, %v3826
          %v4148 = vsel %vm4049, %v4116, %v3828
          %v4149 = vsel %vm4049, %v4117, %v3830
          %v4150 = vsel %vm4049, %v4118, %v3832
          %v4151 = vsel %vm4049, %v4119, %v3834
          %v4152 = vsel %vm4049, %v4120, %v3836
          %v4153 = vsel %vm4049, %v4121, %v3838
          %v4154 = vsel %vm4049, %v4122, %v3840
          %v4155 = vsel %vm4049, %v4123, %v3842
          %v4156 = vsel %vm4049, %v4124, %v3844
          %v4157 = vsel %vm4049, %v4125, %v3846
          %v4158 = vsel %vm4049, %v4126, %v3848
          %v4159 = vsel %vm4049, %v4127, %v3850
          %v4160 = vsel %vm4049, %v4128, %v3852
          %v4161 = vsel %vm4049, %v4129, %v3854
          %v4162 = vsel %vm4049, %v4130, %v3856
          %v4163 = vsel %vm4049, %v4131, %v3858
          %v4164 = vsel %vm4049, %v4132, %v3860
          %v4165 = vsel %vm4049, %v4133, %v3862
          %v4166 = vsel %vm4049, %v4134, %v3864
          %v4167 = vsel %vm4049, %v4135, %v3866
          %v4168 = vsel %vm4049, %v4136, %v3868
          %v4169 = vsel %vm4049, %v4137, %v3870
          %v4170 = vsel %vm4049, %v4138, %v3872
          %v4171 = vsel %vm4049, %v4139, %v3874
          %v4172 = vsel %vm4049, %v4140, %v3876
          %v4173 = vsel %vm4049, %v4141, %v3878
          %v4174 = vsel %vm4049, %v4142, %v3880
          %v4175 = vsel %vm4049, %v4143, %v3882
          %v4176 = vsel %vm4049, %v4144, %v3884
          %v4177 = vsel %vm4049, %v4145, %v3886
          %v4178 = vsel %vm4049, %v4146, %v3888
          %v4179 = vsel %vm4082, %v4147, %v3922
          %v4180 = vsel %vm4082, %v4148, %v3924
          %v4181 = vsel %vm4082, %v4149, %v3926
          %v4182 = vsel %vm4082, %v4150, %v3928
          %v4183 = vsel %vm4082, %v4151, %v3930
          %v4184 = vsel %vm4082, %v4152, %v3932
          %v4185 = vsel %vm4082, %v4153, %v3934
          %v4186 = vsel %vm4082, %v4154, %v3936
          %v4187 = vsel %vm4082, %v4155, %v3938
          %v4188 = vsel %vm4082, %v4156, %v3940
          %v4189 = vsel %vm4082, %v4157, %v3942
          %v4190 = vsel %vm4082, %v4158, %v3944
          %v4191 = vsel %vm4082, %v4159, %v3946
          %v4192 = vsel %vm4082, %v4160, %v3948
          %v4193 = vsel %vm4082, %v4161, %v3950
          %v4194 = vsel %vm4082, %v4162, %v3952
          %v4195 = vsel %vm4082, %v4163, %v3954
          %v4196 = vsel %vm4082, %v4164, %v3956
          %v4197 = vsel %vm4082, %v4165, %v3958
          %v4198 = vsel %vm4082, %v4166, %v3960
          %v4199 = vsel %vm4082, %v4167, %v3962
          %v4200 = vsel %vm4082, %v4168, %v3964
          %v4201 = vsel %vm4082, %v4169, %v3966
          %v4202 = vsel %vm4082, %v4170, %v3968
          %v4203 = vsel %vm4082, %v4171, %v3970
          %v4204 = vsel %vm4082, %v4172, %v3972
          %v4205 = vsel %vm4082, %v4173, %v3974
          %v4206 = vsel %vm4082, %v4174, %v3976
          %v4207 = vsel %vm4082, %v4175, %v3978
          %v4208 = vsel %vm4082, %v4176, %v3980
          %v4209 = vsel %vm4082, %v4177, %v3982
          %v4210 = vsel %vm4082, %v4178, %v3984
          %v4211 = vpack.c.bf16 %v4084, %v4083
          %v4212 = vpack.c.bf16 %v4180, %v4179
          %v4213 = vpack.c.bf16 %v3285, %v3283
          %v4214 = vpack.c.bf16 %v4086, %v4085
          %v4215 = vpack.c.bf16 %v4182, %v4181
          %v4216 = vpack.c.bf16 %v3290, %v3288
          %v4217 = vpack.c.bf16 %v4088, %v4087
          %v4218 = vpack.c.bf16 %v4184, %v4183
          %v4219 = vpack.c.bf16 %v3295, %v3293
          %v4220 = vpack.c.bf16 %v4090, %v4089
          %v4221 = vpack.c.bf16 %v4186, %v4185
          %v4222 = vpack.c.bf16 %v3300, %v3298
          %v4223 = vpack.c.bf16 %v4092, %v4091
          %v4224 = vpack.c.bf16 %v4188, %v4187
          %v4225 = vpack.c.bf16 %v3305, %v3303
          %v4226 = vpack.c.bf16 %v4094, %v4093
          %v4227 = vpack.c.bf16 %v4190, %v4189
          %v4228 = vpack.c.bf16 %v3310, %v3308
          %v4229 = vpack.c.bf16 %v4096, %v4095
          %v4230 = vpack.c.bf16 %v4192, %v4191
          %v4231 = vpack.c.bf16 %v3315, %v3313
          %v4232 = vpack.c.bf16 %v4098, %v4097
          %v4233 = vpack.c.bf16 %v4194, %v4193
          %v4234 = vpack.c.bf16 %v3320, %v3318
          %v4235 = vpack.c.bf16 %v4100, %v4099
          %v4236 = vpack.c.bf16 %v4196, %v4195
          %v4237 = vpack.c.bf16 %v3325, %v3323
          %v4238 = vpack.c.bf16 %v4102, %v4101
          %v4239 = vpack.c.bf16 %v4198, %v4197
          %v4240 = vpack.c.bf16 %v3330, %v3328
          %v4241 = vpack.c.bf16 %v4104, %v4103
          %v4242 = vpack.c.bf16 %v4200, %v4199
          %v4243 = vpack.c.bf16 %v3335, %v3333
          %v4244 = vpack.c.bf16 %v4106, %v4105
          %v4245 = vpack.c.bf16 %v4202, %v4201
          %v4246 = vpack.c.bf16 %v3340, %v3338
          %v4247 = vpack.c.bf16 %v4108, %v4107
          %v4248 = vpack.c.bf16 %v4204, %v4203
          %v4249 = vpack.c.bf16 %v3345, %v3343
          %v4250 = vpack.c.bf16 %v4110, %v4109
          %v4251 = vpack.c.bf16 %v4206, %v4205
          %v4252 = vpack.c.bf16 %v3350, %v3348
          %v4253 = vpack.c.bf16 %v4112, %v4111
          %v4254 = vpack.c.bf16 %v4208, %v4207
          %v4255 = vpack.c.bf16 %v3395, %v3393
          %v4256 = vpack.c.bf16 %v4114, %v4113
          %v4257 = vpack.c.bf16 %v4210, %v4209
          %v4258 = vpack.c.bf16 %v3408, %v3406
          %v4259 = vld [vmem:[%s2] sm:$0xf]
          %v4260 = vld [vmem:[%s2 + $0x4] sm:$0xf]
          %v4261 = vld [vmem:[%s2 + $0x8] sm:$0xf]
          %v4262 = vld [vmem:[%s2 + $0xc] sm:$0xf]
          %v4263 = vld [vmem:[%s2 + $0x10] sm:$0xf]
          %v4264 = vld [vmem:[%s2 + $0x14] sm:$0xf]
          %v4265 = vld [vmem:[%s2 + $0x18] sm:$0xf]
          %v4266 = vld [vmem:[%s2 + $0x1c] sm:$0xf]
          %v4267 = vld [vmem:[%s2 + $0x20] sm:$0xf]
          %v4268 = vld [vmem:[%s2 + $0x24] sm:$0xf]
          %v4269 = vld [vmem:[%s2 + $0x28] sm:$0xf]
          %v4270 = vld [vmem:[%s2 + $0x2c] sm:$0xf]
          %v4271 = vld [vmem:[%s2 + $0x30] sm:$0xf]
          %v4272 = vld [vmem:[%s2 + $0x34] sm:$0xf]
          %v4273 = vld [vmem:[%s2 + $0x38] sm:$0xf]
          %v4274 = vld [vmem:[%s2 + $0x3c] sm:$0xf]
          %v4275 = vld [vmem:[%s2 + $0x40] sm:$0xf]
          %v4276 = vld [vmem:[%s2 + $0x44] sm:$0xf]
          %v4277 = vld [vmem:[%s2 + $0x48] sm:$0xf]
          %v4278 = vld [vmem:[%s2 + $0x4c] sm:$0xf]
          %v4279 = vld [vmem:[%s2 + $0x50] sm:$0xf]
          %v4280 = vld [vmem:[%s2 + $0x54] sm:$0xf]
          %v4281 = vld [vmem:[%s2 + $0x58] sm:$0xf]
          %v4282 = vld [vmem:[%s2 + $0x5c] sm:$0xf]
          %v4283 = vld [vmem:[%s2 + $0x60] sm:$0xf]
          %v4284 = vld [vmem:[%s2 + $0x64] sm:$0xf]
          %v4285 = vld [vmem:[%s2 + $0x68] sm:$0xf]
          %v4286 = vld [vmem:[%s2 + $0x6c] sm:$0xf]
          %v4287 = vld [vmem:[%s2 + $0x70] sm:$0xf]
          %v4288 = vld [vmem:[%s2 + $0x74] sm:$0xf]
          %v4289 = vld [vmem:[%s2 + $0x78] sm:$0xf]
          %v4290 = vld [vmem:[%s2 + $0x7c] sm:$0xf]
          %v4291 = vld [vmem:[%s2 + $0x80] sm:$0xf]
          %v4292 = vld [vmem:[%s2 + $0x84] sm:$0xf]
          %v4293 = vld [vmem:[%s2 + $0x88] sm:$0xf]
          %v4294 = vld [vmem:[%s2 + $0x8c] sm:$0xf]
          %v4331 = vunpack.c.l.b16 %v4259
          %v4332 = vunpack.c.l.b16 %v4260
          %v4333 = vunpack.c.l.b16 %v4261
          %v4334 = vunpack.c.l.b16 %v4262
          %v4335 = vunpack.c.l.b16 %v4263
          %v4336 = vunpack.c.l.b16 %v4264
          %v4337 = vunpack.c.l.b16 %v4265
          %v4338 = vunpack.c.l.b16 %v4266
          %v4339 = vunpack.c.l.b16 %v4267
          %v4340 = vunpack.c.l.b16 %v4268
          %v4341 = vunpack.c.l.b16 %v4269
          %v4342 = vunpack.c.l.b16 %v4270
          %v4343 = vunpack.c.l.b16 %v4271
          %v4344 = vunpack.c.l.b16 %v4272
          %v4345 = vunpack.c.l.b16 %v4273
          %v4346 = vunpack.c.l.b16 %v4274
          %v4347 = vunpack.c.l.b16 %v4275
          %v4348 = vunpack.c.l.b16 %v4276
          %v4349 = vunpack.c.l.b16 %v4277
          %v4350 = vunpack.c.l.b16 %v4278
          %v4351 = vunpack.c.l.b16 %v4279
          %v4352 = vunpack.c.l.b16 %v4280
          %v4353 = vunpack.c.l.b16 %v4281
          %v4354 = vunpack.c.l.b16 %v4282
          %v4355 = vunpack.c.l.b16 %v4283
          %v4356 = vunpack.c.l.b16 %v4284
          %v4357 = vunpack.c.l.b16 %v4285
          %v4358 = vunpack.c.l.b16 %v4286
          %v4359 = vunpack.c.l.b16 %v4287
          %v4360 = vunpack.c.l.b16 %v4288
          %v4361 = vunpack.c.l.b16 %v4289
          %v4362 = vunpack.c.l.b16 %v4290
          %v4363 = vunpack.c.l.b16 %v4291
          %v4364 = vunpack.c.l.b16 %v4292
          %v4365 = vunpack.c.l.b16 %v4293
          %v4366 = vunpack.c.l.b16 %v4294
          %v4367 = vpack.c.b16 %v4332, %v4331
          %v4368 = vpack.c.b16 %v4334, %v4333
          %v4369 = vpack.c.b16 %v4336, %v4335
          %v4370 = vpack.c.b16 %v4338, %v4337
          %v4371 = vpack.c.b16 %v4340, %v4339
          %v4372 = vpack.c.b16 %v4342, %v4341
          %v4373 = vpack.c.b16 %v4344, %v4343
          %v4374 = vpack.c.b16 %v4346, %v4345
          %v4375 = vpack.c.b16 %v4348, %v4347
          %v4376 = vpack.c.b16 %v4350, %v4349
          %v4377 = vpack.c.b16 %v4352, %v4351
          %v4378 = vpack.c.b16 %v4354, %v4353
          %v4379 = vpack.c.b16 %v4356, %v4355
          %v4380 = vpack.c.b16 %v4358, %v4357
          %v4381 = vpack.c.b16 %v4360, %v4359
          %v4382 = vpack.c.b16 %v4362, %v4361
          %v4383 = vpack.c.b16 %v4364, %v4363
          %v4384 = vpack.c.b16 %v4366, %v4365
          %v4404 = vsel %vm1798, %v4213, 0
          %v4407 = vsel %vm1798, %v4216, 0
          %v4410 = vsel %vm1798, %v4219, 0
          %v4413 = vsel %vm1798, %v4222, 0
          %v4416 = vsel %vm1798, %v4225, 0
          %v4419 = vsel %vm1798, %v4228, 0
          %v4422 = vsel %vm1798, %v4231, 0
          %v4425 = vsel %vm1798, %v4234, 0
          %v4428 = vsel %vm1798, %v4237, 0
          %v4431 = vsel %vm1798, %v4240, 0
          %v4434 = vsel %vm1798, %v4243, 0
          %v4437 = vsel %vm1798, %v4246, 0
          %v4440 = vsel %vm1798, %v4249, 0
          %v4443 = vsel %vm1798, %v4252, 0
          %v4446 = vsel %vm1798, %v4255, 0
          %v4449 = vsel %vm1798, %v4258, 0
          %4451 = vmatprep.subr.bf16.mxu0 0
          %4452 = vmatpush1.bf16.msra.mxu0 %v4367
          %4453 = vmatprep.subr.bf16.mxu0 0
          %4454 = vmatpush1.bf16.msra.mxu0 %v4368
          %4455 = vmatprep.subr.bf16.mxu0 0
          %4456 = vmatpush1.bf16.msra.mxu0 %v4369
          %4457 = vmatprep.subr.bf16.mxu0 0
          %4458 = vmatpush1.bf16.msra.mxu0 %v4370
          %4459 = vmatprep.subr.bf16.mxu0 0
          %4460 = vmatpush1.bf16.msra.mxu0 %v4371
          %4461 = vmatprep.subr.bf16.mxu0 0
          %4462 = vmatpush1.bf16.msra.mxu0 %v4372
          %4463 = vmatprep.subr.bf16.mxu0 0
          %4464 = vmatpush1.bf16.msra.mxu0 %v4373
          %4465 = vmatprep.subr.bf16.mxu0 0
          %4466 = vmatpush1.bf16.msra.mxu0 %v4374
          %4467 = vmatprep.subr.bf16.mxu0 0
          %4468 = vmatpush1.bf16.msra.mxu0 %v4375
          %4469 = vmatprep.subr.bf16.mxu0 0
          %4470 = vmatpush1.bf16.msra.mxu0 %v4376
          %4471 = vmatprep.subr.bf16.mxu0 0
          %4472 = vmatpush1.bf16.msra.mxu0 %v4377
          %4473 = vmatprep.subr.bf16.mxu0 0
          %4474 = vmatpush1.bf16.msra.mxu0 %v4378
          %4475 = vmatprep.subr.bf16.mxu0 0
          %4476 = vmatpush1.bf16.msra.mxu0 %v4379
          %4477 = vmatprep.subr.bf16.mxu0 0
          %4478 = vmatpush1.bf16.msra.mxu0 %v4380
          %4479 = vmatprep.subr.bf16.mxu0 0
          %4480 = vmatpush1.bf16.msra.mxu0 %v4381
          %4481 = vmatprep.subr.bf16.mxu0 0
          %4482 = vmatpush1.bf16.msra.mxu0 %v4382
          %4483 = vmatprep.mubr.bf16.mxu0 %v4212
          %4484 = vmatmul.mubr.bf16.gmra.mrb[0].mxu0 %v4211
          %v4485 = vpop.f32.mrb[0].mxu0
          %v4486 = vadd.f32 0.0, %v4485
          %v4487 = vpop.f32.mrb[0].mxu0
          %v4488 = vpop.f32.mrb[0].mxu0
          %v4489 = vadd.f32 0.0, %v4488
          %v4490 = vpop.f32.mrb[0].mxu0
          %4491 = vmatprep.mubr.bf16.mxu0 %v4215
          %4492 = vmatmul.mubr.bf16.gmra.mrb[0].mxu0 %v4214
          %v4493 = vpop.f32.mrb[0].mxu0
          %v4494 = vadd.f32 0.0, %v4493
          %v4495 = vpop.f32.mrb[0].mxu0
          %v4496 = vpop.f32.mrb[0].mxu0
          %v4497 = vadd.f32 0.0, %v4496
          %v4498 = vpop.f32.mrb[0].mxu0
          %4499 = vmatprep.mubr.bf16.mxu0 %v4218
          %4500 = vmatmul.mubr.bf16.gmra.mrb[0].mxu0 %v4217
          %v4501 = vpop.f32.mrb[0].mxu0
          %v4502 = vadd.f32 0.0, %v4501
          %v4503 = vpop.f32.mrb[0].mxu0
          %v4504 = vpop.f32.mrb[0].mxu0
          %v4505 = vadd.f32 0.0, %v4504
          %v4506 = vpop.f32.mrb[0].mxu0
          %4507 = vmatprep.mubr.bf16.mxu0 %v4221
          %4508 = vmatmul.mubr.bf16.gmra.mrb[0].mxu0 %v4220
          %v4509 = vpop.f32.mrb[0].mxu0
          %v4510 = vadd.f32 0.0, %v4509
          %v4511 = vpop.f32.mrb[0].mxu0
          %v4512 = vpop.f32.mrb[0].mxu0
          %v4513 = vadd.f32 0.0, %v4512
          %v4514 = vpop.f32.mrb[0].mxu0
          %4515 = vmatprep.mubr.bf16.mxu0 %v4224
          %4516 = vmatmul.mubr.bf16.gmra.mrb[0].mxu0 %v4223
          %v4517 = vpop.f32.mrb[0].mxu0
          %v4518 = vadd.f32 0.0, %v4517
          %v4519 = vpop.f32.mrb[0].mxu0
          %v4520 = vpop.f32.mrb[0].mxu0
          %v4521 = vadd.f32 0.0, %v4520
          %v4522 = vpop.f32.mrb[0].mxu0
          %4523 = vmatprep.mubr.bf16.mxu0 %v4227
          %4524 = vmatmul.mubr.bf16.gmra.mrb[0].mxu0 %v4226
          %v4525 = vpop.f32.mrb[0].mxu0
          %v4526 = vadd.f32 0.0, %v4525
          %v4527 = vpop.f32.mrb[0].mxu0
          %v4528 = vpop.f32.mrb[0].mxu0
          %v4529 = vadd.f32 0.0, %v4528
          %v4530 = vpop.f32.mrb[0].mxu0
          %4531 = vmatprep.mubr.bf16.mxu0 %v4230
          %4532 = vmatmul.mubr.bf16.gmra.mrb[0].mxu0 %v4229
          %v4533 = vpop.f32.mrb[0].mxu0
          %v4534 = vadd.f32 0.0, %v4533
          %v4535 = vpop.f32.mrb[0].mxu0
          %v4536 = vpop.f32.mrb[0].mxu0
          %v4537 = vadd.f32 0.0, %v4536
          %v4538 = vpop.f32.mrb[0].mxu0
          %4539 = vmatprep.mubr.bf16.mxu0 %v4233
          %4540 = vmatmul.mubr.bf16.gmra.mrb[0].mxu0 %v4232
          %v4541 = vpop.f32.mrb[0].mxu0
          %v4542 = vadd.f32 0.0, %v4541
          %v4543 = vpop.f32.mrb[0].mxu0
          %v4544 = vpop.f32.mrb[0].mxu0
          %v4545 = vadd.f32 0.0, %v4544
          %v4546 = vpop.f32.mrb[0].mxu0
          %4547 = vmatprep.mubr.bf16.mxu0 %v4236
          %4548 = vmatmul.mubr.bf16.gmra.mrb[0].mxu0 %v4235
          %v4549 = vpop.f32.mrb[0].mxu0
          %v4550 = vadd.f32 0.0, %v4549
          %v4551 = vpop.f32.mrb[0].mxu0
          %v4552 = vpop.f32.mrb[0].mxu0
          %v4553 = vadd.f32 0.0, %v4552
          %v4554 = vpop.f32.mrb[0].mxu0
          %4555 = vmatprep.mubr.bf16.mxu0 %v4239
          %4556 = vmatmul.mubr.bf16.gmra.mrb[0].mxu0 %v4238
          %v4557 = vpop.f32.mrb[0].mxu0
          %v4558 = vadd.f32 0.0, %v4557
          %v4559 = vpop.f32.mrb[0].mxu0
          %v4560 = vpop.f32.mrb[0].mxu0
          %v4561 = vadd.f32 0.0, %v4560
          %v4562 = vpop.f32.mrb[0].mxu0
          %4563 = vmatprep.mubr.bf16.mxu0 %v4242
          %4564 = vmatmul.mubr.bf16.gmra.mrb[0].mxu0 %v4241
          %v4565 = vpop.f32.mrb[0].mxu0
          %v4566 = vadd.f32 0.0, %v4565
          %v4567 = vpop.f32.mrb[0].mxu0
          %v4568 = vpop.f32.mrb[0].mxu0
          %v4569 = vadd.f32 0.0, %v4568
          %v4570 = vpop.f32.mrb[0].mxu0
          %4571 = vmatprep.mubr.bf16.mxu0 %v4245
          %4572 = vmatmul.mubr.bf16.gmra.mrb[0].mxu0 %v4244
          %v4573 = vpop.f32.mrb[0].mxu0
          %v4574 = vadd.f32 0.0, %v4573
          %v4575 = vpop.f32.mrb[0].mxu0
          %v4576 = vpop.f32.mrb[0].mxu0
          %v4577 = vadd.f32 0.0, %v4576
          %v4578 = vpop.f32.mrb[0].mxu0
          %4579 = vmatprep.mubr.bf16.mxu0 %v4248
          %4580 = vmatmul.mubr.bf16.gmra.mrb[0].mxu0 %v4247
          %v4581 = vpop.f32.mrb[0].mxu0
          %v4582 = vadd.f32 0.0, %v4581
          %v4583 = vpop.f32.mrb[0].mxu0
          %v4584 = vpop.f32.mrb[0].mxu0
          %v4585 = vadd.f32 0.0, %v4584
          %v4586 = vpop.f32.mrb[0].mxu0
          %4587 = vmatprep.mubr.bf16.mxu0 %v4251
          %4588 = vmatmul.mubr.bf16.gmra.mrb[0].mxu0 %v4250
          %v4589 = vpop.f32.mrb[0].mxu0
          %v4590 = vadd.f32 0.0, %v4589
          %v4591 = vpop.f32.mrb[0].mxu0
          %v4592 = vpop.f32.mrb[0].mxu0
          %v4593 = vadd.f32 0.0, %v4592
          %v4594 = vpop.f32.mrb[0].mxu0
          %4595 = vmatprep.mubr.bf16.mxu0 %v4254
          %4596 = vmatmul.mubr.bf16.gmra.mrb[0].mxu0 %v4253
          %v4597 = vpop.f32.mrb[0].mxu0
          %v4598 = vadd.f32 0.0, %v4597
          %v4599 = vpop.f32.mrb[0].mxu0
          %v4600 = vpop.f32.mrb[0].mxu0
          %v4601 = vadd.f32 0.0, %v4600
          %v4602 = vpop.f32.mrb[0].mxu0
          %4603 = vmatprep.mubr.bf16.mxu0 %v4257
          %4604 = vmatmul.mubr.bf16.gmra.mrb[0].mxu0 %v4256
          %v4605 = vpop.f32.mrb[0].mxu0
          %v4606 = vadd.f32 0.0, %v4605
          %v4607 = vpop.f32.mrb[0].mxu0
          %v4608 = vpop.f32.mrb[0].mxu0
          %v4609 = vadd.f32 0.0, %v4608
          %v4610 = vpop.f32.mrb[0].mxu0
          %4611 = vdwg.mxu0
          %4612 = vmatprep.subr.bf16.mxu0 0
          %4613 = vmatpush1.bf16.msra.mxu0 %v4383
          %4614 = vmatprep.subr.bf16.mxu0 0
          %4615 = vmatpush1.bf16.msra.mxu0 %v4384
          %4616 = vmatprep.subr.bf16.mxu0 0
          %4617 = vmatpush1.bf16.msra.mxu0 0
          %4618 = vmatprep.subr.bf16.mxu0 0
          %4619 = vmatpush1.bf16.msra.mxu0 0
          %4620 = vmatprep.subr.bf16.mxu0 0
          %4621 = vmatpush1.bf16.msra.mxu0 0
          %4622 = vmatprep.subr.bf16.mxu0 0
          %4623 = vmatpush1.bf16.msra.mxu0 0
          %4624 = vmatprep.subr.bf16.mxu0 0
          %4625 = vmatpush1.bf16.msra.mxu0 0
          %4626 = vmatprep.subr.bf16.mxu0 0
          %4627 = vmatpush1.bf16.msra.mxu0 0
          %4628 = vmatprep.subr.bf16.mxu0 0
          %4629 = vmatpush1.bf16.msra.mxu0 0
          %4630 = vmatprep.subr.bf16.mxu0 0
          %4631 = vmatpush1.bf16.msra.mxu0 0
          %4632 = vmatprep.subr.bf16.mxu0 0
          %4633 = vmatpush1.bf16.msra.mxu0 0
          %4634 = vmatprep.subr.bf16.mxu0 0
          %4635 = vmatpush1.bf16.msra.mxu0 0
          %4636 = vmatprep.subr.bf16.mxu0 0
          %4637 = vmatpush1.bf16.msra.mxu0 0
          %4638 = vmatprep.subr.bf16.mxu0 0
          %4639 = vmatpush1.bf16.msra.mxu0 0
          %4640 = vmatprep.subr.bf16.mxu0 0
          %4641 = vmatpush1.bf16.msra.mxu0 0
          %4642 = vmatprep.subr.bf16.mxu0 0
          %4643 = vmatpush1.bf16.msra.mxu0 0
          %4644 = vmatprep.mubr.bf16.mxu0 0
          %4645 = vmatmul.mubr.bf16.gmra.mrb[0].mxu0 %v4404
          %v4646 = vpop.f32.mrb[0].mxu0
          %v4647 = vadd.f32 %v4486, %v4646
          %v4648 = vpop.f32.mrb[0].mxu0
          %v4649 = vpop.f32.mrb[0].mxu0
          %v4650 = vadd.f32 %v4489, %v4649
          %v4651 = vpop.f32.mrb[0].mxu0
          %4652 = vmatprep.mubr.bf16.mxu0 0
          %4653 = vmatmul.mubr.bf16.gmra.mrb[0].mxu0 %v4407
          %v4654 = vpop.f32.mrb[0].mxu0
          %v4655 = vadd.f32 %v4494, %v4654
          %v4656 = vpop.f32.mrb[0].mxu0
          %v4657 = vpop.f32.mrb[0].mxu0
          %v4658 = vadd.f32 %v4497, %v4657
          %v4659 = vpop.f32.mrb[0].mxu0
          %4660 = vmatprep.mubr.bf16.mxu0 0
          %4661 = vmatmul.mubr.bf16.gmra.mrb[0].mxu0 %v4410
          %v4662 = vpop.f32.mrb[0].mxu0
          %v4663 = vadd.f32 %v4502, %v4662
          %v4664 = vpop.f32.mrb[0].mxu0
          %v4665 = vpop.f32.mrb[0].mxu0
          %v4666 = vadd.f32 %v4505, %v4665
          %v4667 = vpop.f32.mrb[0].mxu0
          %4668 = vmatprep.mubr.bf16.mxu0 0
          %4669 = vmatmul.mubr.bf16.gmra.mrb[0].mxu0 %v4413
          %v4670 = vpop.f32.mrb[0].mxu0
          %v4671 = vadd.f32 %v4510, %v4670
          %v4672 = vpop.f32.mrb[0].mxu0
          %v4673 = vpop.f32.mrb[0].mxu0
          %v4674 = vadd.f32 %v4513, %v4673
          %v4675 = vpop.f32.mrb[0].mxu0
          %4676 = vmatprep.mubr.bf16.mxu0 0
          %4677 = vmatmul.mubr.bf16.gmra.mrb[0].mxu0 %v4416
          %v4678 = vpop.f32.mrb[0].mxu0
          %v4679 = vadd.f32 %v4518, %v4678
          %v4680 = vpop.f32.mrb[0].mxu0
          %v4681 = vpop.f32.mrb[0].mxu0
          %v4682 = vadd.f32 %v4521, %v4681
          %v4683 = vpop.f32.mrb[0].mxu0
          %4684 = vmatprep.mubr.bf16.mxu0 0
          %4685 = vmatmul.mubr.bf16.gmra.mrb[0].mxu0 %v4419
          %v4686 = vpop.f32.mrb[0].mxu0
          %v4687 = vadd.f32 %v4526, %v4686
          %v4688 = vpop.f32.mrb[0].mxu0
          %v4689 = vpop.f32.mrb[0].mxu0
          %v4690 = vadd.f32 %v4529, %v4689
          %v4691 = vpop.f32.mrb[0].mxu0
          %4692 = vmatprep.mubr.bf16.mxu0 0
          %4693 = vmatmul.mubr.bf16.gmra.mrb[0].mxu0 %v4422
          %v4694 = vpop.f32.mrb[0].mxu0
          %v4695 = vadd.f32 %v4534, %v4694
          %v4696 = vpop.f32.mrb[0].mxu0
          %v4697 = vpop.f32.mrb[0].mxu0
          %v4698 = vadd.f32 %v4537, %v4697
          %v4699 = vpop.f32.mrb[0].mxu0
          %4700 = vmatprep.mubr.bf16.mxu0 0
          %4701 = vmatmul.mubr.bf16.gmra.mrb[0].mxu0 %v4425
          %v4702 = vpop.f32.mrb[0].mxu0
          %v4703 = vadd.f32 %v4542, %v4702
          %v4704 = vpop.f32.mrb[0].mxu0
          %v4705 = vpop.f32.mrb[0].mxu0
          %v4706 = vadd.f32 %v4545, %v4705
          %v4707 = vpop.f32.mrb[0].mxu0
          %4708 = vmatprep.mubr.bf16.mxu0 0
          %4709 = vmatmul.mubr.bf16.gmra.mrb[0].mxu0 %v4428
          %v4710 = vpop.f32.mrb[0].mxu0
          %v4711 = vadd.f32 %v4550, %v4710
          %v4712 = vpop.f32.mrb[0].mxu0
          %v4713 = vpop.f32.mrb[0].mxu0
          %v4714 = vadd.f32 %v4553, %v4713
          %v4715 = vpop.f32.mrb[0].mxu0
          %4716 = vmatprep.mubr.bf16.mxu0 0
          %4717 = vmatmul.mubr.bf16.gmra.mrb[0].mxu0 %v4431
          %v4718 = vpop.f32.mrb[0].mxu0
          %v4719 = vadd.f32 %v4558, %v4718
          %v4720 = vpop.f32.mrb[0].mxu0
          %v4721 = vpop.f32.mrb[0].mxu0
          %v4722 = vadd.f32 %v4561, %v4721
          %v4723 = vpop.f32.mrb[0].mxu0
          %4724 = vmatprep.mubr.bf16.mxu0 0
          %4725 = vmatmul.mubr.bf16.gmra.mrb[0].mxu0 %v4434
          %v4726 = vpop.f32.mrb[0].mxu0
          %v4727 = vadd.f32 %v4566, %v4726
          %v4728 = vpop.f32.mrb[0].mxu0
          %v4729 = vpop.f32.mrb[0].mxu0
          %v4730 = vadd.f32 %v4569, %v4729
          %v4731 = vpop.f32.mrb[0].mxu0
          %4732 = vmatprep.mubr.bf16.mxu0 0
          %4733 = vmatmul.mubr.bf16.gmra.mrb[0].mxu0 %v4437
          %v4734 = vpop.f32.mrb[0].mxu0
          %v4735 = vadd.f32 %v4574, %v4734
          %v4736 = vpop.f32.mrb[0].mxu0
          %v4737 = vpop.f32.mrb[0].mxu0
          %v4738 = vadd.f32 %v4577, %v4737
          %v4739 = vpop.f32.mrb[0].mxu0
          %4740 = vmatprep.mubr.bf16.mxu0 0
          %4741 = vmatmul.mubr.bf16.gmra.mrb[0].mxu0 %v4440
          %v4742 = vpop.f32.mrb[0].mxu0
          %v4743 = vadd.f32 %v4582, %v4742
          %v4744 = vpop.f32.mrb[0].mxu0
          %v4745 = vpop.f32.mrb[0].mxu0
          %v4746 = vadd.f32 %v4585, %v4745
          %v4747 = vpop.f32.mrb[0].mxu0
          %4748 = vmatprep.mubr.bf16.mxu0 0
          %4749 = vmatmul.mubr.bf16.gmra.mrb[0].mxu0 %v4443
          %v4750 = vpop.f32.mrb[0].mxu0
          %v4751 = vadd.f32 %v4590, %v4750
          %v4752 = vpop.f32.mrb[0].mxu0
          %v4753 = vpop.f32.mrb[0].mxu0
          %v4754 = vadd.f32 %v4593, %v4753
          %v4755 = vpop.f32.mrb[0].mxu0
          %4756 = vmatprep.mubr.bf16.mxu0 0
          %4757 = vmatmul.mubr.bf16.gmra.mrb[0].mxu0 %v4446
          %v4758 = vpop.f32.mrb[0].mxu0
          %v4759 = vadd.f32 %v4598, %v4758
          %v4760 = vpop.f32.mrb[0].mxu0
          %v4761 = vpop.f32.mrb[0].mxu0
          %v4762 = vadd.f32 %v4601, %v4761
          %v4763 = vpop.f32.mrb[0].mxu0
          %4764 = vmatprep.mubr.bf16.mxu0 0
          %4765 = vmatmul.mubr.bf16.gmra.mrb[0].mxu0 %v4449
          %v4766 = vpop.f32.mrb[0].mxu0
          %v4767 = vadd.f32 %v4606, %v4766
          %v4768 = vpop.f32.mrb[0].mxu0
          %v4769 = vpop.f32.mrb[0].mxu0
          %v4770 = vadd.f32 %v4609, %v4769
          %v4771 = vpop.f32.mrb[0].mxu0
          %4772 = vdwg.mxu0
          %v4773 = vadd.f32 %v1962, %v4647
          %v4774 = vadd.f32 %v1965, %v4650
          %v4775 = vadd.f32 %v1970, %v4655
          %v4776 = vadd.f32 %v1973, %v4658
          %v4777 = vadd.f32 %v1978, %v4663
          %v4778 = vadd.f32 %v1981, %v4666
          %v4779 = vadd.f32 %v1986, %v4671
          %v4780 = vadd.f32 %v1989, %v4674
          %v4781 = vadd.f32 %v1994, %v4679
          %v4782 = vadd.f32 %v1997, %v4682
          %v4783 = vadd.f32 %v2002, %v4687
          %v4784 = vadd.f32 %v2005, %v4690
          %v4785 = vadd.f32 %v2010, %v4695
          %v4786 = vadd.f32 %v2013, %v4698
          %v4787 = vadd.f32 %v2018, %v4703
          %v4788 = vadd.f32 %v2021, %v4706
          %v4789 = vadd.f32 %v2026, %v4711
          %v4790 = vadd.f32 %v2029, %v4714
          %v4791 = vadd.f32 %v2034, %v4719
          %v4792 = vadd.f32 %v2037, %v4722
          %v4793 = vadd.f32 %v2042, %v4727
          %v4794 = vadd.f32 %v2045, %v4730
          %v4795 = vadd.f32 %v2050, %v4735
          %v4796 = vadd.f32 %v2053, %v4738
          %v4797 = vadd.f32 %v2058, %v4743
          %v4798 = vadd.f32 %v2061, %v4746
          %v4799 = vadd.f32 %v2066, %v4751
          %v4800 = vadd.f32 %v2069, %v4754
          %v4801 = vadd.f32 %v2074, %v4759
          %v4802 = vadd.f32 %v2077, %v4762
          %v4803 = vadd.f32 %v2082, %v4767
          %v4804 = vadd.f32 %v2085, %v4770
          %v4805 = vld [vmem:[%s4] sm:$0x1]
          %v4807 = vlaneseq
          %v4808 = vshrl.u32 %v4807, 7
          %v4809 = vsub.s32 0, %v4808
          %v4810 = vrot.slane %v4805, %v4809
          %v4812 = vadd.f32 %v4773, %v4810
          %v4813 = vadd.f32 %v4774, %v4810
          %v4814 = vadd.f32 %v4775, %v4810
          %v4815 = vadd.f32 %v4776, %v4810
          %v4816 = vadd.f32 %v4777, %v4810
          %v4817 = vadd.f32 %v4778, %v4810
          %v4818 = vadd.f32 %v4779, %v4810
          %v4819 = vadd.f32 %v4780, %v4810
          %v4820 = vadd.f32 %v4781, %v4810
          %v4821 = vadd.f32 %v4782, %v4810
          %v4822 = vadd.f32 %v4783, %v4810
          %v4823 = vadd.f32 %v4784, %v4810
          %v4824 = vadd.f32 %v4785, %v4810
          %v4825 = vadd.f32 %v4786, %v4810
          %v4826 = vadd.f32 %v4787, %v4810
          %v4827 = vadd.f32 %v4788, %v4810
          %v4828 = vadd.f32 %v4789, %v4810
          %v4829 = vadd.f32 %v4790, %v4810
          %v4830 = vadd.f32 %v4791, %v4810
          %v4831 = vadd.f32 %v4792, %v4810
          %v4832 = vadd.f32 %v4793, %v4810
          %v4833 = vadd.f32 %v4794, %v4810
          %v4834 = vadd.f32 %v4795, %v4810
          %v4835 = vadd.f32 %v4796, %v4810
          %v4836 = vadd.f32 %v4797, %v4810
          %v4837 = vadd.f32 %v4798, %v4810
          %v4838 = vadd.f32 %v4799, %v4810
          %v4839 = vadd.f32 %v4800, %v4810
          %v4840 = vadd.f32 %v4801, %v4810
          %v4841 = vadd.f32 %v4802, %v4810
          %v4842 = vadd.f32 %v4803, %v4810
          %v4843 = vadd.f32 %v4804, %v4810
          %v4844 = vxor.u32 %v4812, 2147483648
          %v4845 = vxor.u32 %v4813, 2147483648
          %v4846 = vxor.u32 %v4814, 2147483648
          %v4847 = vxor.u32 %v4815, 2147483648
          %v4848 = vxor.u32 %v4816, 2147483648
          %v4849 = vxor.u32 %v4817, 2147483648
          %v4850 = vxor.u32 %v4818, 2147483648
          %v4851 = vxor.u32 %v4819, 2147483648
          %v4852 = vxor.u32 %v4820, 2147483648
          %v4853 = vxor.u32 %v4821, 2147483648
          %v4854 = vxor.u32 %v4822, 2147483648
          %v4855 = vxor.u32 %v4823, 2147483648
          %v4856 = vxor.u32 %v4824, 2147483648
          %v4857 = vxor.u32 %v4825, 2147483648
          %v4858 = vxor.u32 %v4826, 2147483648
          %v4859 = vxor.u32 %v4827, 2147483648
          %v4860 = vxor.u32 %v4828, 2147483648
          %v4861 = vxor.u32 %v4829, 2147483648
          %v4862 = vxor.u32 %v4830, 2147483648
          %v4863 = vxor.u32 %v4831, 2147483648
          %v4864 = vxor.u32 %v4832, 2147483648
          %v4865 = vxor.u32 %v4833, 2147483648
          %v4866 = vxor.u32 %v4834, 2147483648
          %v4867 = vxor.u32 %v4835, 2147483648
          %v4868 = vxor.u32 %v4836, 2147483648
          %v4869 = vxor.u32 %v4837, 2147483648
          %v4870 = vxor.u32 %v4838, 2147483648
          %v4871 = vxor.u32 %v4839, 2147483648
          %v4872 = vxor.u32 %v4840, 2147483648
          %v4873 = vxor.u32 %v4841, 2147483648
          %v4874 = vxor.u32 %v4842, 2147483648
          %v4875 = vxor.u32 %v4843, 2147483648
          %v4876 = vmul.f32 %v4844, 1.442695
          %v4877 = vpow.pop %v4876
          %v4878 = vmul.f32 %v4845, 1.442695
          %v4879 = vpow.pop %v4878
          %v4880 = vmul.f32 %v4846, 1.442695
          %v4881 = vpow.pop %v4880
          %v4882 = vmul.f32 %v4847, 1.442695
          %v4883 = vpow.pop %v4882
          %v4884 = vmul.f32 %v4848, 1.442695
          %v4885 = vpow.pop %v4884
          %v4886 = vmul.f32 %v4849, 1.442695
          %v4887 = vpow.pop %v4886
          %v4888 = vmul.f32 %v4850, 1.442695
          %v4889 = vpow.pop %v4888
          %v4890 = vmul.f32 %v4851, 1.442695
          %v4891 = vpow.pop %v4890
          %v4892 = vmul.f32 %v4852, 1.442695
          %v4893 = vpow.pop %v4892
          %v4894 = vmul.f32 %v4853, 1.442695
          %v4895 = vpow.pop %v4894
          %v4896 = vmul.f32 %v4854, 1.442695
          %v4897 = vpow.pop %v4896
          %v4898 = vmul.f32 %v4855, 1.442695
          %v4899 = vpow.pop %v4898
          %v4900 = vmul.f32 %v4856, 1.442695
          %v4901 = vpow.pop %v4900
          %v4902 = vmul.f32 %v4857, 1.442695
          %v4903 = vpow.pop %v4902
          %v4904 = vmul.f32 %v4858, 1.442695
          %v4905 = vpow.pop %v4904
          %v4906 = vmul.f32 %v4859, 1.442695
          %v4907 = vpow.pop %v4906
          %v4908 = vmul.f32 %v4860, 1.442695
          %v4909 = vpow.pop %v4908
          %v4910 = vmul.f32 %v4861, 1.442695
          %v4911 = vpow.pop %v4910
          %v4912 = vmul.f32 %v4862, 1.442695
          %v4913 = vpow.pop %v4912
          %v4914 = vmul.f32 %v4863, 1.442695
          %v4915 = vpow.pop %v4914
          %v4916 = vmul.f32 %v4864, 1.442695
          %v4917 = vpow.pop %v4916
          %v4918 = vmul.f32 %v4865, 1.442695
          %v4919 = vpow.pop %v4918
          %v4920 = vmul.f32 %v4866, 1.442695
          %v4921 = vpow.pop %v4920
          %v4922 = vmul.f32 %v4867, 1.442695
          %v4923 = vpow.pop %v4922
          %v4924 = vmul.f32 %v4868, 1.442695
          %v4925 = vpow.pop %v4924
          %v4926 = vmul.f32 %v4869, 1.442695
          %v4927 = vpow.pop %v4926
          %v4928 = vmul.f32 %v4870, 1.442695
          %v4929 = vpow.pop %v4928
          %v4930 = vmul.f32 %v4871, 1.442695
          %v4931 = vpow.pop %v4930
          %v4932 = vmul.f32 %v4872, 1.442695
          %v4933 = vpow.pop %v4932
          %v4934 = vmul.f32 %v4873, 1.442695
          %v4935 = vpow.pop %v4934
          %v4936 = vmul.f32 %v4874, 1.442695
          %v4937 = vpow.pop %v4936
          %v4938 = vmul.f32 %v4875, 1.442695
          %v4939 = vpow.pop %v4938
          %v4940 = vadd.f32 %v4877, 1.0
          %v4941 = vadd.f32 %v4879, 1.0
          %v4942 = vadd.f32 %v4881, 1.0
          %v4943 = vadd.f32 %v4883, 1.0
          %v4944 = vadd.f32 %v4885, 1.0
          %v4945 = vadd.f32 %v4887, 1.0
          %v4946 = vadd.f32 %v4889, 1.0
          %v4947 = vadd.f32 %v4891, 1.0
          %v4948 = vadd.f32 %v4893, 1.0
          %v4949 = vadd.f32 %v4895, 1.0
          %v4950 = vadd.f32 %v4897, 1.0
          %v4951 = vadd.f32 %v4899, 1.0
          %v4952 = vadd.f32 %v4901, 1.0
          %v4953 = vadd.f32 %v4903, 1.0
          %v4954 = vadd.f32 %v4905, 1.0
          %v4955 = vadd.f32 %v4907, 1.0
          %v4956 = vadd.f32 %v4909, 1.0
          %v4957 = vadd.f32 %v4911, 1.0
          %v4958 = vadd.f32 %v4913, 1.0
          %v4959 = vadd.f32 %v4915, 1.0
          %v4960 = vadd.f32 %v4917, 1.0
          %v4961 = vadd.f32 %v4919, 1.0
          %v4962 = vadd.f32 %v4921, 1.0
          %v4963 = vadd.f32 %v4923, 1.0
          %v4964 = vadd.f32 %v4925, 1.0
          %v4965 = vadd.f32 %v4927, 1.0
          %v4966 = vadd.f32 %v4929, 1.0
          %v4967 = vadd.f32 %v4931, 1.0
          %v4968 = vadd.f32 %v4933, 1.0
          %v4969 = vadd.f32 %v4935, 1.0
          %v4970 = vadd.f32 %v4937, 1.0
          %v4971 = vadd.f32 %v4939, 1.0
          %v4972 = vrcp.pop %v4940
          %v4973 = vmul.f32 1.0, %v4972
          %v4974 = vrcp.pop %v4941
          %v4975 = vmul.f32 1.0, %v4974
          %v4976 = vrcp.pop %v4942
          %v4977 = vmul.f32 1.0, %v4976
          %v4978 = vrcp.pop %v4943
          %v4979 = vmul.f32 1.0, %v4978
          %v4980 = vrcp.pop %v4944
          %v4981 = vmul.f32 1.0, %v4980
          %v4982 = vrcp.pop %v4945
          %v4983 = vmul.f32 1.0, %v4982
          %v4984 = vrcp.pop %v4946
          %v4985 = vmul.f32 1.0, %v4984
          %v4986 = vrcp.pop %v4947
          %v4987 = vmul.f32 1.0, %v4986
          %v4988 = vrcp.pop %v4948
          %v4989 = vmul.f32 1.0, %v4988
          %v4990 = vrcp.pop %v4949
          %v4991 = vmul.f32 1.0, %v4990
          %v4992 = vrcp.pop %v4950
          %v4993 = vmul.f32 1.0, %v4992
          %v4994 = vrcp.pop %v4951
          %v4995 = vmul.f32 1.0, %v4994
          %v4996 = vrcp.pop %v4952
          %v4997 = vmul.f32 1.0, %v4996
          %v4998 = vrcp.pop %v4953
          %v4999 = vmul.f32 1.0, %v4998
          %v5000 = vrcp.pop %v4954
          %v5001 = vmul.f32 1.0, %v5000
          %v5002 = vrcp.pop %v4955
          %v5003 = vmul.f32 1.0, %v5002
          %v5004 = vrcp.pop %v4956
          %v5005 = vmul.f32 1.0, %v5004
          %v5006 = vrcp.pop %v4957
          %v5007 = vmul.f32 1.0, %v5006
          %v5008 = vrcp.pop %v4958
          %v5009 = vmul.f32 1.0, %v5008
          %v5010 = vrcp.pop %v4959
          %v5011 = vmul.f32 1.0, %v5010
          %v5012 = vrcp.pop %v4960
          %v5013 = vmul.f32 1.0, %v5012
          %v5014 = vrcp.pop %v4961
          %v5015 = vmul.f32 1.0, %v5014
          %v5016 = vrcp.pop %v4962
          %v5017 = vmul.f32 1.0, %v5016
          %v5018 = vrcp.pop %v4963
          %v5019 = vmul.f32 1.0, %v5018
          %v5020 = vrcp.pop %v4964
          %v5021 = vmul.f32 1.0, %v5020
          %v5022 = vrcp.pop %v4965
          %v5023 = vmul.f32 1.0, %v5022
          %v5024 = vrcp.pop %v4966
          %v5025 = vmul.f32 1.0, %v5024
          %v5026 = vrcp.pop %v4967
          %v5027 = vmul.f32 1.0, %v5026
          %v5028 = vrcp.pop %v4968
          %v5029 = vmul.f32 1.0, %v5028
          %v5030 = vrcp.pop %v4969
          %v5031 = vmul.f32 1.0, %v5030
          %v5032 = vrcp.pop %v4970
          %v5033 = vmul.f32 1.0, %v5032
          %v5034 = vrcp.pop %v4971
          %v5035 = vmul.f32 1.0, %v5034
          %v5036 = vtanh.pop %v4812
          %v5037 = vtanh.pop %v4813
          %v5038 = vtanh.pop %v4814
          %v5039 = vtanh.pop %v4815
          %v5040 = vtanh.pop %v4816
          %v5041 = vtanh.pop %v4817
          %v5042 = vtanh.pop %v4818
          %v5043 = vtanh.pop %v4819
          %v5044 = vtanh.pop %v4820
          %v5045 = vtanh.pop %v4821
          %v5046 = vtanh.pop %v4822
          %v5047 = vtanh.pop %v4823
          %v5048 = vtanh.pop %v4824
          %v5049 = vtanh.pop %v4825
          %v5050 = vtanh.pop %v4826
          %v5051 = vtanh.pop %v4827
          %v5052 = vtanh.pop %v4828
          %v5053 = vtanh.pop %v4829
          %v5054 = vtanh.pop %v4830
          %v5055 = vtanh.pop %v4831
          %v5056 = vtanh.pop %v4832
          %v5057 = vtanh.pop %v4833
          %v5058 = vtanh.pop %v4834
          %v5059 = vtanh.pop %v4835
          %v5060 = vtanh.pop %v4836
          %v5061 = vtanh.pop %v4837
          %v5062 = vtanh.pop %v4838
          %v5063 = vtanh.pop %v4839
          %v5064 = vtanh.pop %v4840
          %v5065 = vtanh.pop %v4841
          %v5066 = vtanh.pop %v4842
          %v5067 = vtanh.pop %v4843
          %v5068 = vld [vmem:[#allocation4] sm:$0xff]
          %v5069 = vld [vmem:[#allocation4 + $0x8] sm:$0xff]
          %v5070 = vld [vmem:[#allocation4 + $0x10] sm:$0xff]
          %v5071 = vld [vmem:[#allocation4 + $0x18] sm:$0xff]
          %v5072 = vld [vmem:[#allocation4 + $0x20] sm:$0xff]
          %v5073 = vld [vmem:[#allocation4 + $0x28] sm:$0xff]
          %v5074 = vld [vmem:[#allocation4 + $0x30] sm:$0xff]
          %v5075 = vld [vmem:[#allocation4 + $0x38] sm:$0xff]
          %v5076 = vld [vmem:[#allocation4 + $0x40] sm:$0xff]
          %v5077 = vld [vmem:[#allocation4 + $0x48] sm:$0xff]
          %v5078 = vld [vmem:[#allocation4 + $0x50] sm:$0xff]
          %v5079 = vld [vmem:[#allocation4 + $0x58] sm:$0xff]
          %v5080 = vld [vmem:[#allocation4 + $0x60] sm:$0xff]
          %v5081 = vld [vmem:[#allocation4 + $0x68] sm:$0xff]
          %v5082 = vld [vmem:[#allocation4 + $0x70] sm:$0xff]
          %v5083 = vld [vmem:[#allocation4 + $0x78] sm:$0xff]
          %v5084 = vld [vmem:[#allocation4 + $0x80] sm:$0xff]
          %v5085 = vld [vmem:[#allocation4 + $0x88] sm:$0xff]
          %v5086 = vld [vmem:[#allocation4 + $0x90] sm:$0xff]
          %v5087 = vld [vmem:[#allocation4 + $0x98] sm:$0xff]
          %v5088 = vld [vmem:[#allocation4 + $0xa0] sm:$0xff]
          %v5089 = vld [vmem:[#allocation4 + $0xa8] sm:$0xff]
          %v5090 = vld [vmem:[#allocation4 + $0xb0] sm:$0xff]
          %v5091 = vld [vmem:[#allocation4 + $0xb8] sm:$0xff]
          %v5092 = vld [vmem:[#allocation4 + $0xc0] sm:$0xff]
          %v5093 = vld [vmem:[#allocation4 + $0xc8] sm:$0xff]
          %v5094 = vld [vmem:[#allocation4 + $0xd0] sm:$0xff]
          %v5095 = vld [vmem:[#allocation4 + $0xd8] sm:$0xff]
          %v5096 = vld [vmem:[#allocation4 + $0xe0] sm:$0xff]
          %v5097 = vld [vmem:[#allocation4 + $0xe8] sm:$0xff]
          %v5098 = vld [vmem:[#allocation4 + $0xf0] sm:$0xff]
          %v5099 = vld [vmem:[#allocation4 + $0xf8] sm:$0xff]
          %v5100 = vmul.f32 %v4973, %v5068
          %v5101 = vmul.f32 %v4975, %v5069
          %v5102 = vmul.f32 %v4977, %v5070
          %v5103 = vmul.f32 %v4979, %v5071
          %v5104 = vmul.f32 %v4981, %v5072
          %v5105 = vmul.f32 %v4983, %v5073
          %v5106 = vmul.f32 %v4985, %v5074
          %v5107 = vmul.f32 %v4987, %v5075
          %v5108 = vmul.f32 %v4989, %v5076
          %v5109 = vmul.f32 %v4991, %v5077
          %v5110 = vmul.f32 %v4993, %v5078
          %v5111 = vmul.f32 %v4995, %v5079
          %v5112 = vmul.f32 %v4997, %v5080
          %v5113 = vmul.f32 %v4999, %v5081
          %v5114 = vmul.f32 %v5001, %v5082
          %v5115 = vmul.f32 %v5003, %v5083
          %v5116 = vmul.f32 %v5005, %v5084
          %v5117 = vmul.f32 %v5007, %v5085
          %v5118 = vmul.f32 %v5009, %v5086
          %v5119 = vmul.f32 %v5011, %v5087
          %v5120 = vmul.f32 %v5013, %v5088
          %v5121 = vmul.f32 %v5015, %v5089
          %v5122 = vmul.f32 %v5017, %v5090
          %v5123 = vmul.f32 %v5019, %v5091
          %v5124 = vmul.f32 %v5021, %v5092
          %v5125 = vmul.f32 %v5023, %v5093
          %v5126 = vmul.f32 %v5025, %v5094
          %v5127 = vmul.f32 %v5027, %v5095
          %v5128 = vmul.f32 %v5029, %v5096
          %v5129 = vmul.f32 %v5031, %v5097
          %v5130 = vmul.f32 %v5033, %v5098
          %v5131 = vmul.f32 %v5035, %v5099
          %5164 = vrot.lane.b32.xlu0 %v5036, 64
          %v5165 = vpop.permute.xlu0 %5164
          %5166 = vrot.lane.b32.xlu0 %v5037, 64
          %v5167 = vpop.permute.xlu0 %5166
          %5168 = vrot.lane.b32.xlu0 %v5038, 64
          %v5169 = vpop.permute.xlu0 %5168
          %5170 = vrot.lane.b32.xlu0 %v5039, 64
          %v5171 = vpop.permute.xlu0 %5170
          %5172 = vrot.lane.b32.xlu0 %v5040, 64
          %v5173 = vpop.permute.xlu0 %5172
          %5174 = vrot.lane.b32.xlu0 %v5041, 64
          %v5175 = vpop.permute.xlu0 %5174
          %5176 = vrot.lane.b32.xlu0 %v5042, 64
          %v5177 = vpop.permute.xlu0 %5176
          %5178 = vrot.lane.b32.xlu0 %v5043, 64
          %v5179 = vpop.permute.xlu0 %5178
          %5180 = vrot.lane.b32.xlu0 %v5044, 64
          %v5181 = vpop.permute.xlu0 %5180
          %5182 = vrot.lane.b32.xlu0 %v5045, 64
          %v5183 = vpop.permute.xlu0 %5182
          %5184 = vrot.lane.b32.xlu0 %v5046, 64
          %v5185 = vpop.permute.xlu0 %5184
          %5186 = vrot.lane.b32.xlu0 %v5047, 64
          %v5187 = vpop.permute.xlu0 %5186
          %5188 = vrot.lane.b32.xlu0 %v5048, 64
          %v5189 = vpop.permute.xlu0 %5188
          %5190 = vrot.lane.b32.xlu0 %v5049, 64
          %v5191 = vpop.permute.xlu0 %5190
          %5192 = vrot.lane.b32.xlu0 %v5050, 64
          %v5193 = vpop.permute.xlu0 %5192
          %5194 = vrot.lane.b32.xlu0 %v5051, 64
          %v5195 = vpop.permute.xlu0 %5194
          %5196 = vrot.lane.b32.xlu0 %v5052, 64
          %v5197 = vpop.permute.xlu0 %5196
          %5198 = vrot.lane.b32.xlu0 %v5053, 64
          %v5199 = vpop.permute.xlu0 %5198
          %5200 = vrot.lane.b32.xlu0 %v5054, 64
          %v5201 = vpop.permute.xlu0 %5200
          %5202 = vrot.lane.b32.xlu0 %v5055, 64
          %v5203 = vpop.permute.xlu0 %5202
          %5204 = vrot.lane.b32.xlu0 %v5056, 64
          %v5205 = vpop.permute.xlu0 %5204
          %5206 = vrot.lane.b32.xlu0 %v5057, 64
          %v5207 = vpop.permute.xlu0 %5206
          %5208 = vrot.lane.b32.xlu0 %v5058, 64
          %v5209 = vpop.permute.xlu0 %5208
          %5210 = vrot.lane.b32.xlu0 %v5059, 64
          %v5211 = vpop.permute.xlu0 %5210
          %5212 = vrot.lane.b32.xlu0 %v5060, 64
          %v5213 = vpop.permute.xlu0 %5212
          %5214 = vrot.lane.b32.xlu0 %v5061, 64
          %v5215 = vpop.permute.xlu0 %5214
          %5216 = vrot.lane.b32.xlu0 %v5062, 64
          %v5217 = vpop.permute.xlu0 %5216
          %5218 = vrot.lane.b32.xlu0 %v5063, 64
          %v5219 = vpop.permute.xlu0 %5218
          %5220 = vrot.lane.b32.xlu0 %v5064, 64
          %v5221 = vpop.permute.xlu0 %5220
          %5222 = vrot.lane.b32.xlu0 %v5065, 64
          %v5223 = vpop.permute.xlu0 %5222
          %5224 = vrot.lane.b32.xlu0 %v5066, 64
          %v5225 = vpop.permute.xlu0 %5224
          %5226 = vrot.lane.b32.xlu0 %v5067, 64
          %v5227 = vpop.permute.xlu0 %5226
          %v5260 = vmul.f32 %v4973, %v5165
          %v5261 = vmul.f32 %v4975, %v5167
          %v5262 = vmul.f32 %v4977, %v5169
          %v5263 = vmul.f32 %v4979, %v5171
          %v5264 = vmul.f32 %v4981, %v5173
          %v5265 = vmul.f32 %v4983, %v5175
          %v5266 = vmul.f32 %v4985, %v5177
          %v5267 = vmul.f32 %v4987, %v5179
          %v5268 = vmul.f32 %v4989, %v5181
          %v5269 = vmul.f32 %v4991, %v5183
          %v5270 = vmul.f32 %v4993, %v5185
          %v5271 = vmul.f32 %v4995, %v5187
          %v5272 = vmul.f32 %v4997, %v5189
          %v5273 = vmul.f32 %v4999, %v5191
          %v5274 = vmul.f32 %v5001, %v5193
          %v5275 = vmul.f32 %v5003, %v5195
          %v5276 = vmul.f32 %v5005, %v5197
          %v5277 = vmul.f32 %v5007, %v5199
          %v5278 = vmul.f32 %v5009, %v5201
          %v5279 = vmul.f32 %v5011, %v5203
          %v5280 = vmul.f32 %v5013, %v5205
          %v5281 = vmul.f32 %v5015, %v5207
          %v5282 = vmul.f32 %v5017, %v5209
          %v5283 = vmul.f32 %v5019, %v5211
          %v5284 = vmul.f32 %v5021, %v5213
          %v5285 = vmul.f32 %v5023, %v5215
          %v5286 = vmul.f32 %v5025, %v5217
          %v5287 = vmul.f32 %v5027, %v5219
          %v5288 = vmul.f32 %v5029, %v5221
          %v5289 = vmul.f32 %v5031, %v5223
          %v5290 = vmul.f32 %v5033, %v5225
          %v5291 = vmul.f32 %v5035, %v5227
          %5324 = vrot.lane.b32.xlu0 %v5260, 96
          %v5325 = vpop.permute.xlu0 %5324
          %5326 = vrot.lane.b32.xlu0 %v5261, 96
          %v5327 = vpop.permute.xlu0 %5326
          %5328 = vrot.lane.b32.xlu0 %v5262, 96
          %v5329 = vpop.permute.xlu0 %5328
          %5330 = vrot.lane.b32.xlu0 %v5263, 96
          %v5331 = vpop.permute.xlu0 %5330
          %5332 = vrot.lane.b32.xlu0 %v5264, 96
          %v5333 = vpop.permute.xlu0 %5332
          %5334 = vrot.lane.b32.xlu0 %v5265, 96
          %v5335 = vpop.permute.xlu0 %5334
          %5336 = vrot.lane.b32.xlu0 %v5266, 96
          %v5337 = vpop.permute.xlu0 %5336
          %5338 = vrot.lane.b32.xlu0 %v5267, 96
          %v5339 = vpop.permute.xlu0 %5338
          %5340 = vrot.lane.b32.xlu0 %v5268, 96
          %v5341 = vpop.permute.xlu0 %5340
          %5342 = vrot.lane.b32.xlu0 %v5269, 96
          %v5343 = vpop.permute.xlu0 %5342
          %5344 = vrot.lane.b32.xlu0 %v5270, 96
          %v5345 = vpop.permute.xlu0 %5344
          %5346 = vrot.lane.b32.xlu0 %v5271, 96
          %v5347 = vpop.permute.xlu0 %5346
          %5348 = vrot.lane.b32.xlu0 %v5272, 96
          %v5349 = vpop.permute.xlu0 %5348
          %5350 = vrot.lane.b32.xlu0 %v5273, 96
          %v5351 = vpop.permute.xlu0 %5350
          %5352 = vrot.lane.b32.xlu0 %v5274, 96
          %v5353 = vpop.permute.xlu0 %5352
          %5354 = vrot.lane.b32.xlu0 %v5275, 96
          %v5355 = vpop.permute.xlu0 %5354
          %5356 = vrot.lane.b32.xlu0 %v5276, 96
          %v5357 = vpop.permute.xlu0 %5356
          %5358 = vrot.lane.b32.xlu0 %v5277, 96
          %v5359 = vpop.permute.xlu0 %5358
          %5360 = vrot.lane.b32.xlu0 %v5278, 96
          %v5361 = vpop.permute.xlu0 %5360
          %5362 = vrot.lane.b32.xlu0 %v5279, 96
          %v5363 = vpop.permute.xlu0 %5362
          %5364 = vrot.lane.b32.xlu0 %v5280, 96
          %v5365 = vpop.permute.xlu0 %5364
          %5366 = vrot.lane.b32.xlu0 %v5281, 96
          %v5367 = vpop.permute.xlu0 %5366
          %5368 = vrot.lane.b32.xlu0 %v5282, 96
          %v5369 = vpop.permute.xlu0 %5368
          %5370 = vrot.lane.b32.xlu0 %v5283, 96
          %v5371 = vpop.permute.xlu0 %5370
          %5372 = vrot.lane.b32.xlu0 %v5284, 96
          %v5373 = vpop.permute.xlu0 %5372
          %5374 = vrot.lane.b32.xlu0 %v5285, 96
          %v5375 = vpop.permute.xlu0 %5374
          %5376 = vrot.lane.b32.xlu0 %v5286, 96
          %v5377 = vpop.permute.xlu0 %5376
          %5378 = vrot.lane.b32.xlu0 %v5287, 96
          %v5379 = vpop.permute.xlu0 %5378
          %5380 = vrot.lane.b32.xlu0 %v5288, 96
          %v5381 = vpop.permute.xlu0 %5380
          %5382 = vrot.lane.b32.xlu0 %v5289, 96
          %v5383 = vpop.permute.xlu0 %5382
          %5384 = vrot.lane.b32.xlu0 %v5290, 96
          %v5385 = vpop.permute.xlu0 %5384
          %5386 = vrot.lane.b32.xlu0 %v5291, 96
          %v5387 = vpop.permute.xlu0 %5386
          %v5420 = vadd.f32 %v5100, %v5325
          %v5421 = vadd.f32 %v5101, %v5327
          %v5422 = vadd.f32 %v5102, %v5329
          %v5423 = vadd.f32 %v5103, %v5331
          %v5424 = vadd.f32 %v5104, %v5333
          %v5425 = vadd.f32 %v5105, %v5335
          %v5426 = vadd.f32 %v5106, %v5337
          %v5427 = vadd.f32 %v5107, %v5339
          %v5428 = vadd.f32 %v5108, %v5341
          %v5429 = vadd.f32 %v5109, %v5343
          %v5430 = vadd.f32 %v5110, %v5345
          %v5431 = vadd.f32 %v5111, %v5347
          %v5432 = vadd.f32 %v5112, %v5349
          %v5433 = vadd.f32 %v5113, %v5351
          %v5434 = vadd.f32 %v5114, %v5353
          %v5435 = vadd.f32 %v5115, %v5355
          %v5436 = vadd.f32 %v5116, %v5357
          %v5437 = vadd.f32 %v5117, %v5359
          %v5438 = vadd.f32 %v5118, %v5361
          %v5439 = vadd.f32 %v5119, %v5363
          %v5440 = vadd.f32 %v5120, %v5365
          %v5441 = vadd.f32 %v5121, %v5367
          %v5442 = vadd.f32 %v5122, %v5369
          %v5443 = vadd.f32 %v5123, %v5371
          %v5444 = vadd.f32 %v5124, %v5373
          %v5445 = vadd.f32 %v5125, %v5375
          %v5446 = vadd.f32 %v5126, %v5377
          %v5447 = vadd.f32 %v5127, %v5379
          %v5448 = vadd.f32 %v5128, %v5381
          %v5449 = vadd.f32 %v5129, %v5383
          %v5450 = vadd.f32 %v5130, %v5385
          %v5451 = vadd.f32 %v5131, %v5387
          %v5452 = vtanh.pop %v5420
          %v5453 = vtanh.pop %v5421
          %v5454 = vtanh.pop %v5422
          %v5455 = vtanh.pop %v5423
          %v5456 = vtanh.pop %v5424
          %v5457 = vtanh.pop %v5425
          %v5458 = vtanh.pop %v5426
          %v5459 = vtanh.pop %v5427
          %v5460 = vtanh.pop %v5428
          %v5461 = vtanh.pop %v5429
          %v5462 = vtanh.pop %v5430
          %v5463 = vtanh.pop %v5431
          %v5464 = vtanh.pop %v5432
          %v5465 = vtanh.pop %v5433
          %v5466 = vtanh.pop %v5434
          %v5467 = vtanh.pop %v5435
          %v5468 = vtanh.pop %v5436
          %v5469 = vtanh.pop %v5437
          %v5470 = vtanh.pop %v5438
          %v5471 = vtanh.pop %v5439
          %v5472 = vtanh.pop %v5440
          %v5473 = vtanh.pop %v5441
          %v5474 = vtanh.pop %v5442
          %v5475 = vtanh.pop %v5443
          %v5476 = vtanh.pop %v5444
          %v5477 = vtanh.pop %v5445
          %v5478 = vtanh.pop %v5446
          %v5479 = vtanh.pop %v5447
          %v5480 = vtanh.pop %v5448
          %v5481 = vtanh.pop %v5449
          %v5482 = vtanh.pop %v5450
          %v5483 = vtanh.pop %v5451
          %5516 = vrot.lane.b32.xlu0 %v5452, 64
          %v5517 = vpop.permute.xlu0 %5516
          %5518 = vrot.lane.b32.xlu0 %v5453, 64
          %v5519 = vpop.permute.xlu0 %5518
          %5520 = vrot.lane.b32.xlu0 %v5454, 64
          %v5521 = vpop.permute.xlu0 %5520
          %5522 = vrot.lane.b32.xlu0 %v5455, 64
          %v5523 = vpop.permute.xlu0 %5522
          %5524 = vrot.lane.b32.xlu0 %v5456, 64
          %v5525 = vpop.permute.xlu0 %5524
          %5526 = vrot.lane.b32.xlu0 %v5457, 64
          %v5527 = vpop.permute.xlu0 %5526
          %5528 = vrot.lane.b32.xlu0 %v5458, 64
          %v5529 = vpop.permute.xlu0 %5528
          %5530 = vrot.lane.b32.xlu0 %v5459, 64
          %v5531 = vpop.permute.xlu0 %5530
          %5532 = vrot.lane.b32.xlu0 %v5460, 64
          %v5533 = vpop.permute.xlu0 %5532
          %5534 = vrot.lane.b32.xlu0 %v5461, 64
          %v5535 = vpop.permute.xlu0 %5534
          %5536 = vrot.lane.b32.xlu0 %v5462, 64
          %v5537 = vpop.permute.xlu0 %5536
          %5538 = vrot.lane.b32.xlu0 %v5463, 64
          %v5539 = vpop.permute.xlu0 %5538
          %5540 = vrot.lane.b32.xlu0 %v5464, 64
          %v5541 = vpop.permute.xlu0 %5540
          %5542 = vrot.lane.b32.xlu0 %v5465, 64
          %v5543 = vpop.permute.xlu0 %5542
          %5544 = vrot.lane.b32.xlu0 %v5466, 64
          %v5545 = vpop.permute.xlu0 %5544
          %5546 = vrot.lane.b32.xlu0 %v5467, 64
          %v5547 = vpop.permute.xlu0 %5546
          %5548 = vrot.lane.b32.xlu0 %v5468, 64
          %v5549 = vpop.permute.xlu0 %5548
          %5550 = vrot.lane.b32.xlu0 %v5469, 64
          %v5551 = vpop.permute.xlu0 %5550
          %5552 = vrot.lane.b32.xlu0 %v5470, 64
          %v5553 = vpop.permute.xlu0 %5552
          %5554 = vrot.lane.b32.xlu0 %v5471, 64
          %v5555 = vpop.permute.xlu0 %5554
          %5556 = vrot.lane.b32.xlu0 %v5472, 64
          %v5557 = vpop.permute.xlu0 %5556
          %5558 = vrot.lane.b32.xlu0 %v5473, 64
          %v5559 = vpop.permute.xlu0 %5558
          %5560 = vrot.lane.b32.xlu0 %v5474, 64
          %v5561 = vpop.permute.xlu0 %5560
          %5562 = vrot.lane.b32.xlu0 %v5475, 64
          %v5563 = vpop.permute.xlu0 %5562
          %5564 = vrot.lane.b32.xlu0 %v5476, 64
          %v5565 = vpop.permute.xlu0 %5564
          %5566 = vrot.lane.b32.xlu0 %v5477, 64
          %v5567 = vpop.permute.xlu0 %5566
          %5568 = vrot.lane.b32.xlu0 %v5478, 64
          %v5569 = vpop.permute.xlu0 %5568
          %5570 = vrot.lane.b32.xlu0 %v5479, 64
          %v5571 = vpop.permute.xlu0 %5570
          %5572 = vrot.lane.b32.xlu0 %v5480, 64
          %v5573 = vpop.permute.xlu0 %5572
          %5574 = vrot.lane.b32.xlu0 %v5481, 64
          %v5575 = vpop.permute.xlu0 %5574
          %5576 = vrot.lane.b32.xlu0 %v5482, 64
          %v5577 = vpop.permute.xlu0 %5576
          %5578 = vrot.lane.b32.xlu0 %v5483, 64
          %v5579 = vpop.permute.xlu0 %5578
          %v5612 = vmul.f32 %v4973, %v5517
          %v5613 = vmul.f32 %v4975, %v5519
          %v5614 = vmul.f32 %v4977, %v5521
          %v5615 = vmul.f32 %v4979, %v5523
          %v5616 = vmul.f32 %v4981, %v5525
          %v5617 = vmul.f32 %v4983, %v5527
          %v5618 = vmul.f32 %v4985, %v5529
          %v5619 = vmul.f32 %v4987, %v5531
          %v5620 = vmul.f32 %v4989, %v5533
          %v5621 = vmul.f32 %v4991, %v5535
          %v5622 = vmul.f32 %v4993, %v5537
          %v5623 = vmul.f32 %v4995, %v5539
          %v5624 = vmul.f32 %v4997, %v5541
          %v5625 = vmul.f32 %v4999, %v5543
          %v5626 = vmul.f32 %v5001, %v5545
          %v5627 = vmul.f32 %v5003, %v5547
          %v5628 = vmul.f32 %v5005, %v5549
          %v5629 = vmul.f32 %v5007, %v5551
          %v5630 = vmul.f32 %v5009, %v5553
          %v5631 = vmul.f32 %v5011, %v5555
          %v5632 = vmul.f32 %v5013, %v5557
          %v5633 = vmul.f32 %v5015, %v5559
          %v5634 = vmul.f32 %v5017, %v5561
          %v5635 = vmul.f32 %v5019, %v5563
          %v5636 = vmul.f32 %v5021, %v5565
          %v5637 = vmul.f32 %v5023, %v5567
          %v5638 = vmul.f32 %v5025, %v5569
          %v5639 = vmul.f32 %v5027, %v5571
          %v5640 = vmul.f32 %v5029, %v5573
          %v5641 = vmul.f32 %v5031, %v5575
          %v5642 = vmul.f32 %v5033, %v5577
          %v5643 = vmul.f32 %v5035, %v5579
          %vm5644 = vcmp.ge.f32.partialorder %v5612, 0.0
          %vm5645 = vcmp.ge.f32.partialorder %v5613, 0.0
          %vm5646 = vcmp.ge.f32.partialorder %v5614, 0.0
          %vm5647 = vcmp.ge.f32.partialorder %v5615, 0.0
          %vm5648 = vcmp.ge.f32.partialorder %v5616, 0.0
          %vm5649 = vcmp.ge.f32.partialorder %v5617, 0.0
          %vm5650 = vcmp.ge.f32.partialorder %v5618, 0.0
          %vm5651 = vcmp.ge.f32.partialorder %v5619, 0.0
          %vm5652 = vcmp.ge.f32.partialorder %v5620, 0.0
          %vm5653 = vcmp.ge.f32.partialorder %v5621, 0.0
          %vm5654 = vcmp.ge.f32.partialorder %v5622, 0.0
          %vm5655 = vcmp.ge.f32.partialorder %v5623, 0.0
          %vm5656 = vcmp.ge.f32.partialorder %v5624, 0.0
          %vm5657 = vcmp.ge.f32.partialorder %v5625, 0.0
          %vm5658 = vcmp.ge.f32.partialorder %v5626, 0.0
          %vm5659 = vcmp.ge.f32.partialorder %v5627, 0.0
          %vm5660 = vcmp.ge.f32.partialorder %v5628, 0.0
          %vm5661 = vcmp.ge.f32.partialorder %v5629, 0.0
          %vm5662 = vcmp.ge.f32.partialorder %v5630, 0.0
          %vm5663 = vcmp.ge.f32.partialorder %v5631, 0.0
          %vm5664 = vcmp.ge.f32.partialorder %v5632, 0.0
          %vm5665 = vcmp.ge.f32.partialorder %v5633, 0.0
          %vm5666 = vcmp.ge.f32.partialorder %v5634, 0.0
          %vm5667 = vcmp.ge.f32.partialorder %v5635, 0.0
          %vm5668 = vcmp.ge.f32.partialorder %v5636, 0.0
          %vm5669 = vcmp.ge.f32.partialorder %v5637, 0.0
          %vm5670 = vcmp.ge.f32.partialorder %v5638, 0.0
          %vm5671 = vcmp.ge.f32.partialorder %v5639, 0.0
          %vm5672 = vcmp.ge.f32.partialorder %v5640, 0.0
          %vm5673 = vcmp.ge.f32.partialorder %v5641, 0.0
          %vm5674 = vcmp.ge.f32.partialorder %v5642, 0.0
          %vm5675 = vcmp.ge.f32.partialorder %v5643, 0.0
          %v5676 = vmul.f32 %v5612, 0.2
          %v5677 = vmul.f32 %v5613, 0.2
          %v5678 = vmul.f32 %v5614, 0.2
          %v5679 = vmul.f32 %v5615, 0.2
          %v5680 = vmul.f32 %v5616, 0.2
          %v5681 = vmul.f32 %v5617, 0.2
          %v5682 = vmul.f32 %v5618, 0.2
          %v5683 = vmul.f32 %v5619, 0.2
          %v5684 = vmul.f32 %v5620, 0.2
          %v5685 = vmul.f32 %v5621, 0.2
          %v5686 = vmul.f32 %v5622, 0.2
          %v5687 = vmul.f32 %v5623, 0.2
          %v5688 = vmul.f32 %v5624, 0.2
          %v5689 = vmul.f32 %v5625, 0.2
          %v5690 = vmul.f32 %v5626, 0.2
          %v5691 = vmul.f32 %v5627, 0.2
          %v5692 = vmul.f32 %v5628, 0.2
          %v5693 = vmul.f32 %v5629, 0.2
          %v5694 = vmul.f32 %v5630, 0.2
          %v5695 = vmul.f32 %v5631, 0.2
          %v5696 = vmul.f32 %v5632, 0.2
          %v5697 = vmul.f32 %v5633, 0.2
          %v5698 = vmul.f32 %v5634, 0.2
          %v5699 = vmul.f32 %v5635, 0.2
          %v5700 = vmul.f32 %v5636, 0.2
          %v5701 = vmul.f32 %v5637, 0.2
          %v5702 = vmul.f32 %v5638, 0.2
          %v5703 = vmul.f32 %v5639, 0.2
          %v5704 = vmul.f32 %v5640, 0.2
          %v5705 = vmul.f32 %v5641, 0.2
          %v5706 = vmul.f32 %v5642, 0.2
          %v5707 = vmul.f32 %v5643, 0.2
          %v5708 = vsel %vm5644, %v5612, %v5676
          %v5709 = vsel %vm5645, %v5613, %v5677
          %v5710 = vsel %vm5646, %v5614, %v5678
          %v5711 = vsel %vm5647, %v5615, %v5679
          %v5712 = vsel %vm5648, %v5616, %v5680
          %v5713 = vsel %vm5649, %v5617, %v5681
          %v5714 = vsel %vm5650, %v5618, %v5682
          %v5715 = vsel %vm5651, %v5619, %v5683
          %v5716 = vsel %vm5652, %v5620, %v5684
          %v5717 = vsel %vm5653, %v5621, %v5685
          %v5718 = vsel %vm5654, %v5622, %v5686
          %v5719 = vsel %vm5655, %v5623, %v5687
          %v5720 = vsel %vm5656, %v5624, %v5688
          %v5721 = vsel %vm5657, %v5625, %v5689
          %v5722 = vsel %vm5658, %v5626, %v5690
          %v5723 = vsel %vm5659, %v5627, %v5691
          %v5724 = vsel %vm5660, %v5628, %v5692
          %v5725 = vsel %vm5661, %v5629, %v5693
          %v5726 = vsel %vm5662, %v5630, %v5694
          %v5727 = vsel %vm5663, %v5631, %v5695
          %v5728 = vsel %vm5664, %v5632, %v5696
          %v5729 = vsel %vm5665, %v5633, %v5697
          %v5730 = vsel %vm5666, %v5634, %v5698
          %v5731 = vsel %vm5667, %v5635, %v5699
          %v5732 = vsel %vm5668, %v5636, %v5700
          %v5733 = vsel %vm5669, %v5637, %v5701
          %v5734 = vsel %vm5670, %v5638, %v5702
          %v5735 = vsel %vm5671, %v5639, %v5703
          %v5736 = vsel %vm5672, %v5640, %v5704
          %v5737 = vsel %vm5673, %v5641, %v5705
          %v5738 = vsel %vm5674, %v5642, %v5706
          %v5739 = vsel %vm5675, %v5643, %v5707
          %5740 = vst.msk [vmem:[#allocation4] sm:$0xff] %vm1798, %v5420
          %5741 = vst.msk [vmem:[#allocation4 + $0x8] sm:$0xff] %vm1798, %v5421
          %5742 = vst.msk [vmem:[#allocation4 + $0x10] sm:$0xff] %vm1798, %v5422
          %5743 = vst.msk [vmem:[#allocation4 + $0x18] sm:$0xff] %vm1798, %v5423
          %5744 = vst.msk [vmem:[#allocation4 + $0x20] sm:$0xff] %vm1798, %v5424
          %5745 = vst.msk [vmem:[#allocation4 + $0x28] sm:$0xff] %vm1798, %v5425
          %5746 = vst.msk [vmem:[#allocation4 + $0x30] sm:$0xff] %vm1798, %v5426
          %5747 = vst.msk [vmem:[#allocation4 + $0x38] sm:$0xff] %vm1798, %v5427
          %5748 = vst.msk [vmem:[#allocation4 + $0x40] sm:$0xff] %vm1798, %v5428
          %5749 = vst.msk [vmem:[#allocation4 + $0x48] sm:$0xff] %vm1798, %v5429
          %5750 = vst.msk [vmem:[#allocation4 + $0x50] sm:$0xff] %vm1798, %v5430
          %5751 = vst.msk [vmem:[#allocation4 + $0x58] sm:$0xff] %vm1798, %v5431
          %5752 = vst.msk [vmem:[#allocation4 + $0x60] sm:$0xff] %vm1798, %v5432
          %5753 = vst.msk [vmem:[#allocation4 + $0x68] sm:$0xff] %vm1798, %v5433
          %5754 = vst.msk [vmem:[#allocation4 + $0x70] sm:$0xff] %vm1798, %v5434
          %5755 = vst.msk [vmem:[#allocation4 + $0x78] sm:$0xff] %vm1798, %v5435
          %5756 = vst.msk [vmem:[#allocation4 + $0x80] sm:$0xff] %vm1798, %v5436
          %5757 = vst.msk [vmem:[#allocation4 + $0x88] sm:$0xff] %vm1798, %v5437
          %5758 = vst.msk [vmem:[#allocation4 + $0x90] sm:$0xff] %vm1798, %v5438
          %5759 = vst.msk [vmem:[#allocation4 + $0x98] sm:$0xff] %vm1798, %v5439
          %5760 = vst.msk [vmem:[#allocation4 + $0xa0] sm:$0xff] %vm1798, %v5440
          %5761 = vst.msk [vmem:[#allocation4 + $0xa8] sm:$0xff] %vm1798, %v5441
          %5762 = vst.msk [vmem:[#allocation4 + $0xb0] sm:$0xff] %vm1798, %v5442
          %5763 = vst.msk [vmem:[#allocation4 + $0xb8] sm:$0xff] %vm1798, %v5443
          %5764 = vst.msk [vmem:[#allocation4 + $0xc0] sm:$0xff] %vm1798, %v5444
          %5765 = vst.msk [vmem:[#allocation4 + $0xc8] sm:$0xff] %vm1798, %v5445
          %5766 = vst.msk [vmem:[#allocation4 + $0xd0] sm:$0xff] %vm1798, %v5446
          %5767 = vst.msk [vmem:[#allocation4 + $0xd8] sm:$0xff] %vm1798, %v5447
          %5768 = vst.msk [vmem:[#allocation4 + $0xe0] sm:$0xff] %vm1798, %v5448
          %5769 = vst.msk [vmem:[#allocation4 + $0xe8] sm:$0xff] %vm1798, %v5449
          %5770 = vst.msk [vmem:[#allocation4 + $0xf0] sm:$0xff] %vm1798, %v5450
          %5771 = vst.msk [vmem:[#allocation4 + $0xf8] sm:$0xff] %vm1798, %v5451
          %5804 = vrot.lane.b32.xlu0 %v5708, 64
          %v5805 = vpop.permute.xlu0 %5804
          %5806 = vrot.lane.b32.xlu0 %v5709, 64
          %v5807 = vpop.permute.xlu0 %5806
          %5808 = vrot.lane.b32.xlu0 %v5710, 64
          %v5809 = vpop.permute.xlu0 %5808
          %5810 = vrot.lane.b32.xlu0 %v5711, 64
          %v5811 = vpop.permute.xlu0 %5810
          %5812 = vrot.lane.b32.xlu0 %v5712, 64
          %v5813 = vpop.permute.xlu0 %5812
          %5814 = vrot.lane.b32.xlu0 %v5713, 64
          %v5815 = vpop.permute.xlu0 %5814
          %5816 = vrot.lane.b32.xlu0 %v5714, 64
          %v5817 = vpop.permute.xlu0 %5816
          %5818 = vrot.lane.b32.xlu0 %v5715, 64
          %v5819 = vpop.permute.xlu0 %5818
          %5820 = vrot.lane.b32.xlu0 %v5716, 64
          %v5821 = vpop.permute.xlu0 %5820
          %5822 = vrot.lane.b32.xlu0 %v5717, 64
          %v5823 = vpop.permute.xlu0 %5822
          %5824 = vrot.lane.b32.xlu0 %v5718, 64
          %v5825 = vpop.permute.xlu0 %5824
          %5826 = vrot.lane.b32.xlu0 %v5719, 64
          %v5827 = vpop.permute.xlu0 %5826
          %5828 = vrot.lane.b32.xlu0 %v5720, 64
          %v5829 = vpop.permute.xlu0 %5828
          %5830 = vrot.lane.b32.xlu0 %v5721, 64
          %v5831 = vpop.permute.xlu0 %5830
          %5832 = vrot.lane.b32.xlu0 %v5722, 64
          %v5833 = vpop.permute.xlu0 %5832
          %5834 = vrot.lane.b32.xlu0 %v5723, 64
          %v5835 = vpop.permute.xlu0 %5834
          %5836 = vrot.lane.b32.xlu0 %v5724, 64
          %v5837 = vpop.permute.xlu0 %5836
          %5838 = vrot.lane.b32.xlu0 %v5725, 64
          %v5839 = vpop.permute.xlu0 %5838
          %5840 = vrot.lane.b32.xlu0 %v5726, 64
          %v5841 = vpop.permute.xlu0 %5840
          %5842 = vrot.lane.b32.xlu0 %v5727, 64
          %v5843 = vpop.permute.xlu0 %5842
          %5844 = vrot.lane.b32.xlu0 %v5728, 64
          %v5845 = vpop.permute.xlu0 %5844
          %5846 = vrot.lane.b32.xlu0 %v5729, 64
          %v5847 = vpop.permute.xlu0 %5846
          %5848 = vrot.lane.b32.xlu0 %v5730, 64
          %v5849 = vpop.permute.xlu0 %5848
          %5850 = vrot.lane.b32.xlu0 %v5731, 64
          %v5851 = vpop.permute.xlu0 %5850
          %5852 = vrot.lane.b32.xlu0 %v5732, 64
          %v5853 = vpop.permute.xlu0 %5852
          %5854 = vrot.lane.b32.xlu0 %v5733, 64
          %v5855 = vpop.permute.xlu0 %5854
          %5856 = vrot.lane.b32.xlu0 %v5734, 64
          %v5857 = vpop.permute.xlu0 %5856
          %5858 = vrot.lane.b32.xlu0 %v5735, 64
          %v5859 = vpop.permute.xlu0 %5858
          %5860 = vrot.lane.b32.xlu0 %v5736, 64
          %v5861 = vpop.permute.xlu0 %5860
          %5862 = vrot.lane.b32.xlu0 %v5737, 64
          %v5863 = vpop.permute.xlu0 %5862
          %5864 = vrot.lane.b32.xlu0 %v5738, 64
          %v5865 = vpop.permute.xlu0 %5864
          %5866 = vrot.lane.b32.xlu0 %v5739, 64
          %v5867 = vpop.permute.xlu0 %5866
          %s5900 = scalar_lea.vmem [#allocation3], 24
          %5901 = vst.msk [vmem:[%s5900 + $0x1] sm:$0xff] %vm1798, %v5805
          %5902 = vst.msk [vmem:[%s5900 + $0x9] sm:$0xff] %vm1798, %v5807
          %5903 = vst.msk [vmem:[%s5900 + $0x19] sm:$0xff] %vm1798, %v5809
          %5904 = vst.msk [vmem:[%s5900 + $0x21] sm:$0xff] %vm1798, %v5811
          %5905 = vst.msk [vmem:[%s5900 + $0x31] sm:$0xff] %vm1798, %v5813
          %5906 = vst.msk [vmem:[%s5900 + $0x39] sm:$0xff] %vm1798, %v5815
          %5907 = vst.msk [vmem:[%s5900 + $0x49] sm:$0xff] %vm1798, %v5817
          %5908 = vst.msk [vmem:[%s5900 + $0x51] sm:$0xff] %vm1798, %v5819
          %5909 = vst.msk [vmem:[%s5900 + $0x61] sm:$0xff] %vm1798, %v5821
          %5910 = vst.msk [vmem:[%s5900 + $0x69] sm:$0xff] %vm1798, %v5823
          %5911 = vst.msk [vmem:[%s5900 + $0x79] sm:$0xff] %vm1798, %v5825
          %5912 = vst.msk [vmem:[%s5900 + $0x81] sm:$0xff] %vm1798, %v5827
          %5913 = vst.msk [vmem:[%s5900 + $0x91] sm:$0xff] %vm1798, %v5829
          %5914 = vst.msk [vmem:[%s5900 + $0x99] sm:$0xff] %vm1798, %v5831
          %5915 = vst.msk [vmem:[%s5900 + $0xa9] sm:$0xff] %vm1798, %v5833
          %5916 = vst.msk [vmem:[%s5900 + $0xb1] sm:$0xff] %vm1798, %v5835
          %5917 = vst.msk [vmem:[%s5900 + $0xc1] sm:$0xff] %vm1798, %v5837
          %5918 = vst.msk [vmem:[%s5900 + $0xc9] sm:$0xff] %vm1798, %v5839
          %5919 = vst.msk [vmem:[%s5900 + $0xd9] sm:$0xff] %vm1798, %v5841
          %5920 = vst.msk [vmem:[%s5900 + $0xe1] sm:$0xff] %vm1798, %v5843
          %5921 = vst.msk [vmem:[%s5900 + $0xf1] sm:$0xff] %vm1798, %v5845
          %5922 = vst.msk [vmem:[%s5900 + $0xf9] sm:$0xff] %vm1798, %v5847
          %5923 = vst.msk [vmem:[%s5900 + $0x109] sm:$0xff] %vm1798, %v5849
          %5924 = vst.msk [vmem:[%s5900 + $0x111] sm:$0xff] %vm1798, %v5851
          %5925 = vst.msk [vmem:[%s5900 + $0x121] sm:$0xff] %vm1798, %v5853
          %5926 = vst.msk [vmem:[%s5900 + $0x129] sm:$0xff] %vm1798, %v5855
          %5927 = vst.msk [vmem:[%s5900 + $0x139] sm:$0xff] %vm1798, %v5857
          %5928 = vst.msk [vmem:[%s5900 + $0x141] sm:$0xff] %vm1798, %v5859
          %5929 = vst.msk [vmem:[%s5900 + $0x151] sm:$0xff] %vm1798, %v5861
          %5930 = vst.msk [vmem:[%s5900 + $0x159] sm:$0xff] %vm1798, %v5863
          %5931 = vst.msk [vmem:[%s5900 + $0x169] sm:$0xff] %vm1798, %v5865
          %5932 = vst.msk [vmem:[%s5900 + $0x171] sm:$0xff] %vm1798, %v5867
          %5933 = vst.msk [vmem:[%s272] sm:$0xff] %vm1798, %v5805
          %5934 = vst.msk [vmem:[%s272 + $0x8] sm:$0xff] %vm1798, %v5807
          %5935 = vst.msk [vmem:[%s272 + $0x10] sm:$0xff] %vm1798, %v5809
          %5936 = vst.msk [vmem:[%s272 + $0x18] sm:$0xff] %vm1798, %v5811
          %5937 = vst.msk [vmem:[%s272 + $0x20] sm:$0xff] %vm1798, %v5813
          %5938 = vst.msk [vmem:[%s272 + $0x28] sm:$0xff] %vm1798, %v5815
          %5939 = vst.msk [vmem:[%s272 + $0x30] sm:$0xff] %vm1798, %v5817
          %5940 = vst.msk [vmem:[%s272 + $0x38] sm:$0xff] %vm1798, %v5819
          %5941 = vst.msk [vmem:[%s272 + $0x40] sm:$0xff] %vm1798, %v5821
          %5942 = vst.msk [vmem:[%s272 + $0x48] sm:$0xff] %vm1798, %v5823
          %5943 = vst.msk [vmem:[%s272 + $0x50] sm:$0xff] %vm1798, %v5825
          %5944 = vst.msk [vmem:[%s272 + $0x58] sm:$0xff] %vm1798, %v5827
          %5945 = vst.msk [vmem:[%s272 + $0x60] sm:$0xff] %vm1798, %v5829
          %5946 = vst.msk [vmem:[%s272 + $0x68] sm:$0xff] %vm1798, %v5831
          %5947 = vst.msk [vmem:[%s272 + $0x70] sm:$0xff] %vm1798, %v5833
          %5948 = vst.msk [vmem:[%s272 + $0x78] sm:$0xff] %vm1798, %v5835
          %5949 = vst.msk [vmem:[%s272 + $0x80] sm:$0xff] %vm1798, %v5837
          %5950 = vst.msk [vmem:[%s272 + $0x88] sm:$0xff] %vm1798, %v5839
          %5951 = vst.msk [vmem:[%s272 + $0x90] sm:$0xff] %vm1798, %v5841
          %5952 = vst.msk [vmem:[%s272 + $0x98] sm:$0xff] %vm1798, %v5843
          %5953 = vst.msk [vmem:[%s272 + $0xa0] sm:$0xff] %vm1798, %v5845
          %5954 = vst.msk [vmem:[%s272 + $0xa8] sm:$0xff] %vm1798, %v5847
          %5955 = vst.msk [vmem:[%s272 + $0xb0] sm:$0xff] %vm1798, %v5849
          %5956 = vst.msk [vmem:[%s272 + $0xb8] sm:$0xff] %vm1798, %v5851
          %5957 = vst.msk [vmem:[%s272 + $0xc0] sm:$0xff] %vm1798, %v5853
          %5958 = vst.msk [vmem:[%s272 + $0xc8] sm:$0xff] %vm1798, %v5855
          %5959 = vst.msk [vmem:[%s272 + $0xd0] sm:$0xff] %vm1798, %v5857
          %5960 = vst.msk [vmem:[%s272 + $0xd8] sm:$0xff] %vm1798, %v5859
          %5961 = vst.msk [vmem:[%s272 + $0xe0] sm:$0xff] %vm1798, %v5861
          %5962 = vst.msk [vmem:[%s272 + $0xe8] sm:$0xff] %vm1798, %v5863
          %5963 = vst.msk [vmem:[%s272 + $0xf0] sm:$0xff] %vm1798, %v5865
          %5964 = vst.msk [vmem:[%s272 + $0xf8] sm:$0xff] %vm1798, %v5867
          %5965 = vst.msk [vmem:[%s279] sm:$0xff] %vm1798, %v5420
          %5966 = vst.msk [vmem:[%s279 + $0x8] sm:$0xff] %vm1798, %v5421
          %5967 = vst.msk [vmem:[%s279 + $0x10] sm:$0xff] %vm1798, %v5422
          %5968 = vst.msk [vmem:[%s279 + $0x18] sm:$0xff] %vm1798, %v5423
          %5969 = vst.msk [vmem:[%s279 + $0x20] sm:$0xff] %vm1798, %v5424
          %5970 = vst.msk [vmem:[%s279 + $0x28] sm:$0xff] %vm1798, %v5425
          %5971 = vst.msk [vmem:[%s279 + $0x30] sm:$0xff] %vm1798, %v5426
          %5972 = vst.msk [vmem:[%s279 + $0x38] sm:$0xff] %vm1798, %v5427
          %5973 = vst.msk [vmem:[%s279 + $0x40] sm:$0xff] %vm1798, %v5428
          %5974 = vst.msk [vmem:[%s279 + $0x48] sm:$0xff] %vm1798, %v5429
          %5975 = vst.msk [vmem:[%s279 + $0x50] sm:$0xff] %vm1798, %v5430
          %5976 = vst.msk [vmem:[%s279 + $0x58] sm:$0xff] %vm1798, %v5431
          %5977 = vst.msk [vmem:[%s279 + $0x60] sm:$0xff] %vm1798, %v5432
          %5978 = vst.msk [vmem:[%s279 + $0x68] sm:$0xff] %vm1798, %v5433
          %5979 = vst.msk [vmem:[%s279 + $0x70] sm:$0xff] %vm1798, %v5434
          %5980 = vst.msk [vmem:[%s279 + $0x78] sm:$0xff] %vm1798, %v5435
          %5981 = vst.msk [vmem:[%s279 + $0x80] sm:$0xff] %vm1798, %v5436
          %5982 = vst.msk [vmem:[%s279 + $0x88] sm:$0xff] %vm1798, %v5437
          %5983 = vst.msk [vmem:[%s279 + $0x90] sm:$0xff] %vm1798, %v5438
          %5984 = vst.msk [vmem:[%s279 + $0x98] sm:$0xff] %vm1798, %v5439
          %5985 = vst.msk [vmem:[%s279 + $0xa0] sm:$0xff] %vm1798, %v5440
          %5986 = vst.msk [vmem:[%s279 + $0xa8] sm:$0xff] %vm1798, %v5441
          %5987 = vst.msk [vmem:[%s279 + $0xb0] sm:$0xff] %vm1798, %v5442
          %5988 = vst.msk [vmem:[%s279 + $0xb8] sm:$0xff] %vm1798, %v5443
          %5989 = vst.msk [vmem:[%s279 + $0xc0] sm:$0xff] %vm1798, %v5444
          %5990 = vst.msk [vmem:[%s279 + $0xc8] sm:$0xff] %vm1798, %v5445
          %5991 = vst.msk [vmem:[%s279 + $0xd0] sm:$0xff] %vm1798, %v5446
          %5992 = vst.msk [vmem:[%s279 + $0xd8] sm:$0xff] %vm1798, %v5447
          %5993 = vst.msk [vmem:[%s279 + $0xe0] sm:$0xff] %vm1798, %v5448
          %5994 = vst.msk [vmem:[%s279 + $0xe8] sm:$0xff] %vm1798, %v5449
          %5995 = vst.msk [vmem:[%s279 + $0xf0] sm:$0xff] %vm1798, %v5450
          %5996 = vst.msk [vmem:[%s279 + $0xf8] sm:$0xff] %vm1798, %v5451
        $region52: #{tpu_custom_call.1} parent=39 // pred_fallthru
          _
        %s5997 = sand.u32 %s158, 1
        %s5998 = scalar_lea.sflag [#allocation6], %s5997
        %s5999 = sand.u32 %s158, 1
        %s6000 = smul.addr %s5999, 256
        %s6001 = scalar_lea.vmem [#allocation5], %s6000
        %s6002 = sand.u32 %s184, 1
        %s6003 = scalar_lea.sflag [#allocation8], %s6002
        %s6004 = sand.u32 %s184, 1
        %s6005 = smul.addr %s6004, 256
        %s6006 = scalar_lea.vmem [#allocation7], %s6005
        // Predicated region
        $region53: #{tpu_custom_call.1} parent=39 // pred_check
          %p6007 = pneg %p168
        $region54: #{tpu_custom_call.1} parent=39 // pred_check_branch
          %6009 = sbr.rel (%p6007) target = $region56
        $region55: #{tpu_custom_call.1} parent=39 // pred_region
          %s6011 = ssub.s32 4096, 4096
          %6012 = vsyncadd %s5998, %s6011
          %s6013 = smul.addr %s29, 32
          %s6014 = smul.addr %s28, 256
          %s6015 = sadd.s32 %s6013, %s6014
          %s6016 = smul.addr %s6015, 128
          %s6017 = scalar_lea.hbm %s5, %s6016
          %s6018 = sshll.u32 %s6001, 4
          %s6019 = int_to_ptr.vmem [resolvable:$true] %s6018
          %6024 = dma.vmem_to_hbm [thread:$0]  %s6019, 4096, %s6017, %s5998, 128, 128, 8
        $region56: #{tpu_custom_call.1} parent=39 // pred_fallthru
          _
        // Predicated region
        $region57: #{tpu_custom_call.1} parent=39 // pred_check
          %p6025 = pneg %p194
        $region58: #{tpu_custom_call.1} parent=39 // pred_check_branch
          %6027 = sbr.rel (%p6025) target = $region60
        $region59: #{tpu_custom_call.1} parent=39 // pred_region
          %s6029 = ssub.s32 4096, 4096
          %6030 = vsyncadd %s6003, %s6029
          %s6031 = smul.addr %s28, 32
          %s6032 = smul.addr %s6031, 128
          %s6033 = scalar_lea.hbm %s6, %s6032
          %s6034 = sshll.u32 %s6006, 4
          %s6035 = int_to_ptr.vmem [resolvable:$true] %s6034
          %6040 = dma.vmem_to_hbm [thread:$0]  %s6035, 4096, %s6033, %s6003, 128, 128, 8
        $region60: #{tpu_custom_call.1} parent=39 // pred_fallthru
          _
      $region40: #{tpu_custom_call.1} parent=5 // pred_fallthru
        _
      %p6041 = scmp.le.s32.totalorder 2, %s19
      // Predicated region
      $region61: #{tpu_custom_call.1} parent=5 // pred_check
        %p6042 = pneg %p6041
      $region62: #{tpu_custom_call.1} parent=5 // pred_check_branch
        %6044 = sbr.rel (%p6042) target = $region64
      $region63: #{tpu_custom_call.1} parent=5 // pred_region
        %s6045 = ssub.s32 %s19, 2
        // Predicated region
        $region65: #{tpu_custom_call.1} parent=63 // pred_check
          %p6046 = pneg %p174
        $region66: #{tpu_custom_call.1} parent=63 // pred_check_branch
          %6048 = sbr.rel (%p6046) target = $region68
        $region67: #{tpu_custom_call.1} parent=63 // pred_region
          %s6049 = sand.u32 %s159, 1
          %s6050 = scalar_lea.sflag [#allocation6], %s6049
          %s6051 = sand.u32 %s159, 1
          %s6052 = smul.addr %s6051, 256
          %s6053 = scalar_lea.vmem [#allocation5], %s6052
          %6054 = dma.done %s6050, 4096
        $region68: #{tpu_custom_call.1} parent=63 // pred_fallthru
          _
        // Predicated region
        $region69: #{tpu_custom_call.1} parent=63 // pred_check
          %p6055 = pneg %p200
        $region70: #{tpu_custom_call.1} parent=63 // pred_check_branch
          %6057 = sbr.rel (%p6055) target = $region72
        $region71: #{tpu_custom_call.1} parent=63 // pred_region
          %s6058 = sand.u32 %s185, 1
          %s6059 = scalar_lea.sflag [#allocation8], %s6058
          %s6060 = sand.u32 %s185, 1
          %s6061 = smul.addr %s6060, 256
          %s6062 = scalar_lea.vmem [#allocation7], %s6061
          %6063 = dma.done %s6059, 4096
        $region72: #{tpu_custom_call.1} parent=63 // pred_fallthru
          _
      $region64: #{tpu_custom_call.1} parent=5 // pred_fallthru
        _
    $region6: #{tpu_custom_call.1} parent=1 // loop_footer
      %s23 = sadd.s32 1, %s19
    $region7: #{tpu_custom_call.1} parent=1 // loop_footer_branch
      %18 = sbr.rel target = $region3
    $region8: #{tpu_custom_call.1} parent=1 // loop_exit
      _
    %6064 = vsyncpa [#allocation6], 1
    %s6065 = scalar_lea.sflag [#allocation6], 1
    %6066 = vsyncpa %s6065, 1
    %6067 = vsyncpa [#allocation8], 1
    %s6068 = scalar_lea.sflag [#allocation8], 1
    %6069 = vsyncpa %s6068, 1

</llo_original>
